<compile_context>
chip_gen: v6e
topology: v6e:2x2x1
jax: 0.10.0
libtpu: 0.0.40
codegen_flags: <defaults>
</compile_context>

<pallas_src>
import functools
import math

import jax
import jax.numpy as jnp
from jax.experimental import pallas as pl
from jax.experimental.pallas import tpu as pltpu


# ----------------------------------------------------------------------------
# helpers
# ----------------------------------------------------------------------------
def _round_up(x, m):
    return ((x + m - 1) // m) * m


def _conv_out(size, k, stride, pad):
    return (size + 2 * pad - k) // stride + 1


# ----------------------------------------------------------------------------
# Pallas kernel: GEMM with K-axis accumulation + fused bias / activation
# ----------------------------------------------------------------------------
def _gemm_bias_act_kernel(a_ref, b_ref, bias_ref, o_ref, acc_ref, *, activation):
    @pl.when(pl.program_id(1) == 0)
    def _():
        acc_ref[...] = jnp.zeros_like(acc_ref)

    acc_ref[...] += jnp.dot(a_ref[...], b_ref[...],
                            preferred_element_type=jnp.float32)

    @pl.when(pl.program_id(1) == pl.num_programs(1) - 1)
    def _():
        acc = acc_ref[...] + bias_ref[...]
        if activation == "relu":
            acc = jnp.maximum(acc, 0.0)
        elif activation == "sigmoid":
            acc = jax.nn.sigmoid(acc)
        o_ref[...] = acc.astype(o_ref.dtype)


def pallas_gemm(a, b, bias, activation="none", out_dtype=jnp.bfloat16):
    """out = act(a @ b + bias). a:[M,K] bf16, b:[K,N] bf16, bias:[M,1] or [1,N] f32.

    f32 MXU accumulation in a VMEM scratch, bf16 (or f32) writeback.
    """
    M, K = a.shape
    Kb, N = b.shape
    assert K == Kb, (a.shape, b.shape)
    assert a.dtype == jnp.bfloat16 and b.dtype == jnp.bfloat16
    assert bias.dtype == jnp.float32

    # Lane (N) tiling: big lane-dense tiles, >=2 tiles when N allows so the
    # work shards across both TensorCores on v7x.
    tn = N
    if N >= 256 and N % 128 == 0:
        for cand in (1024, 512, 256, 128):
            if N % cand == 0 and N > cand:
                tn = cand
                break

    # K tiling (reduction axis last in grid, VMEM f32 accumulator).
    tk = 512 if (K > 512 and K % 512 == 0) else K
    grid = (N // tn, K // tk)

    if bias.shape == (M, 1):
        bias_spec = pl.BlockSpec((M, 1), lambda j, k: (0, 0))
    else:
        assert bias.shape == (1, N), bias.shape
        bias_spec = pl.BlockSpec((1, tn), lambda j, k: (0, j))

    cost = pl.CostEstimate(
        flops=2 * M * N * K,
        transcendentals=(M * N) if activation == "sigmoid" else 0,
        bytes_accessed=(M * K + K * N) * 2
        + M * N * jnp.dtype(out_dtype).itemsize
        + int(bias.size) * 4,
    )

    # TODO(synk): add an M grid axis once Cout*8 exceeds ~256 (nf=512 decoder).
    return pl.pallas_call(
        functools.partial(_gemm_bias_act_kernel, activation=activation),
        out_shape=jax.ShapeDtypeStruct((M, N), out_dtype),
        grid_spec=pltpu.PrefetchScalarGridSpec(
            num_scalar_prefetch=0,
            grid=grid,
            in_specs=[
                pl.BlockSpec((M, tk), lambda j, k: (0, k)),
                pl.BlockSpec((tk, tn), lambda j, k: (k, j)),
                bias_spec,
            ],
            out_specs=pl.BlockSpec((M, tn), lambda j, k: (0, j)),
            scratch_shapes=[pltpu.VMEM((M, tn), jnp.float32)],
        ),
        compiler_params=pltpu.CompilerParams(
            dimension_semantics=("parallel", "arbitrary"),
            vmem_limit_bytes=64 * 1024 * 1024,
        ),
        cost_estimate=cost,
    )(a, b, bias)


# ----------------------------------------------------------------------------
# layout glue (bf16; all FLOPs worth counting are in pallas_gemm)
# ----------------------------------------------------------------------------
def _patches2d(x, k, stride, pad):
    """im2col: x [B,C,H,W] -> patches [C*k*k, B*OH*OW] (rows ordered (C,kh,kw))."""
    B, C, H, W = x.shape
    xp = jnp.pad(x, ((0, 0), (0, 0), (pad, pad), (pad, pad)))
    OH = _conv_out(H, k, stride, pad)
    OW = _conv_out(W, k, stride, pad)
    taps = []
    for i in range(k):
        for j in range(k):
            taps.append(xp[:, :, i:i + stride * OH:stride, j:j + stride * OW:stride])
    col = jnp.stack(taps, 0).reshape(k, k, B, C, OH, OW)
    col = col.transpose(3, 0, 1, 2, 4, 5).reshape(C * k * k, B * OH * OW)
    return col, OH, OW


def _shared_taps3d(v):
    """Shared 27-tap slab for ConvTranspose3d(k=4,s=2,p=1) sub-pixel GEMMs.

    v: [B, C, D, H, W] bf16 -> [round_up(27*C,128), B*D*H*W] bf16,
    rows ordered (tap(i,j,l) outer, C inner).  Built ONCE and reused by all 8
    phases (folded into the weight M axis) — replaces the 64x per-phase im2col.
    """
    B, C, D, H, W = v.shape
    vp = jnp.pad(v, ((0, 0), (0, 0), (1, 1), (1, 1), (1, 1)))
    taps = []
    for i in range(3):
        for j in range(3):
            for l in range(3):
                taps.append(vp[:, :, i:i + D, j:j + H, l:l + W])
    slab = jnp.stack(taps, 0)                                   # [27,B,C,D,H,W]
    slab = slab.transpose(0, 2, 1, 3, 4, 5).reshape(27 * C, B * D * H * W)
    K = 27 * C
    Kp = _round_up(K, 128)
    if Kp > K:
        slab = jnp.pad(slab, ((0, Kp - K), (0, 0)))
    return slab


def pallas_deconv3d_subpixel(v, w_fold, bias_m, cout, activation,
                             out_dtype=jnp.bfloat16):
    """ConvTranspose3d(k=4, stride=2, padding=1): shared-tap slab + folded-phase GEMM."""
    B, C, D, H, W = v.shape
    slab = _shared_taps3d(v)                                    # [Kp, BDHW] bf16
    out = pallas_gemm(w_fold, slab, bias_m, activation, out_dtype)   # [Mp, BDHW]
    out = out[:8 * cout].reshape(2, 2, 2, cout, B, D, H, W)
    out = out.transpose(4, 3, 5, 0, 6, 1, 7, 2)                 # [B,Co,D,pd,H,ph,W,pw]
    return out.reshape(B, cout, 2 * D, 2 * H, 2 * W)


# ----------------------------------------------------------------------------
# parameters (torch-layout synthetic init) + one-time layout preprocessing
# ----------------------------------------------------------------------------
def init_params(key, in_planes=4, encode_dims=32, c1=16, c2=32, nf=16):
    keys = jax.random.split(key, 6)

    def nrm(k, shape, fan_in):
        return jax.random.normal(k, shape, jnp.float32) * (1.0 / math.sqrt(fan_in))

    return {
        # encoder
        "conv1_w": nrm(keys[0], (c1, in_planes, 7, 7), in_planes * 49),
        "conv1_b": jnp.zeros((c1,), jnp.float32),
        "conv2_w": nrm(keys[1], (c2, c1, 3, 3), c1 * 9),
        "conv2_b": jnp.zeros((c2,), jnp.float32),
        "fc_w": nrm(keys[2], (encode_dims, c2), c2),             # [out, in]
        "fc_b": jnp.zeros((encode_dims,), jnp.float32),
        # decoder (ConvTranspose3d weights: [Cin, Cout, k, k, k])
        "d1_w": nrm(keys[3], (encode_dims, nf, 4, 4, 4), encode_dims),
        "d1_b": jnp.zeros((nf,), jnp.float32),
        "d2_w": nrm(keys[4], (nf, nf // 2, 4, 4, 4), nf * 64),
        "d2_b": jnp.zeros((nf // 2,), jnp.float32),
        "d3_w": nrm(keys[5], (nf // 2, 1, 4, 4, 4), (nf // 2) * 64),
        "d3_b": jnp.zeros((1,), jnp.float32),
    }


def _subpixel_weight_folded(wt):
    """ConvTranspose3d weight [Cin,Cout,4,4,4] (s=2,p=1) -> [Mp=8*Cout pad16, Kp=27*Cin pad128].

    Rows ordered (phase(pd,ph,pw) outer, Cout inner); columns ordered
    (tap(i,j,l) outer, Cin inner) to match _shared_taps3d.  Taps that a phase
    does not touch are zero.
    """
    cin, cout = wt.shape[0], wt.shape[1]
    rows = []
    for pd in range(2):
        for ph in range(2):
            for pw in range(2):
                cols = []
                for i in range(3):
                    for j in range(3):
                        for l in range(3):
                            if (0 <= i - pd <= 1) and (0 <= j - ph <= 1) and (0 <= l - pw <= 1):
                                w = wt[:, :, 3 + pd - 2 * i, 3 + ph - 2 * j, 3 + pw - 2 * l]
                                cols.append(w.T)                     # [Cout, Cin]
                            else:
                                cols.append(jnp.zeros((cout, cin), wt.dtype))
                rows.append(jnp.concatenate(cols, axis=1))           # [Cout, 27*Cin]
    w_fold = jnp.concatenate(rows, axis=0)                           # [8*Cout, 27*Cin]
    Mp = _round_up(8 * cout, 16)
    Kp = _round_up(27 * cin, 128)
    w_fold = jnp.pad(w_fold, ((0, Mp - 8 * cout), (0, Kp - 27 * cin)))
    return w_fold.astype(jnp.bfloat16)


def _subpixel_bias_folded(bvec):
    cout = bvec.shape[0]
    Mp = _round_up(8 * cout, 16)
    b = jnp.tile(bvec.astype(jnp.float32), 8)                        # phase-major
    return jnp.pad(b, (0, Mp - 8 * cout))[:, None]                   # [Mp, 1]


def preprocess_params(params):
    """One-time weight/bias layout, phase folding, padding and bf16 cast."""
    c1 = params["conv1_w"].shape[0]
    c2 = params["conv2_w"].shape[0]
    E = params["fc_w"].shape[0]
    nf = params["d1_w"].shape[1]
    Ep = _round_up(E, 128)            # lane-dense FC output / d1 K
    Kfc = _round_up(c2, 128)          # FC reduction dim padded to 128

    def conv_mat(w):                  # [Cout,Cin,k,k] -> [Mp, Kp] bf16
        co = w.shape[0]
        m = w.reshape(co, -1)
        mp = _round_up(co, 16)
        kp = _round_up(m.shape[1], 128)
        m = jnp.pad(m, ((0, mp - co), (0, kp - m.shape[1])))
        return m.astype(jnp.bfloat16)

    def bias_col(bvec, mp):           # per-Cout bias -> [Mp, 1] f32
        return jnp.pad(bvec.astype(jnp.float32), (0, mp - bvec.shape[0]))[:, None]

    pp = {
        "w1": conv_mat(params["conv1_w"]),
        "b1": bias_col(params["conv1_b"], _round_up(c1, 16)),
        "w2": conv_mat(params["conv2_w"]),
        "b2": bias_col(params["conv2_b"], _round_up(c2, 16)),
        # plain FC after the (XLA-fused) global-average-pool; K and N lane-padded.
        "fc_w": jnp.pad(params["fc_w"].T, ((0, Kfc - c2), (0, Ep - E))).astype(jnp.bfloat16),
        "fc_b": jnp.pad(params["fc_b"].astype(jnp.float32), (0, Ep - E))[None, :],
        # d1: ConvTranspose3d(E, nf, 4, stride=1) on a 1x1x1 input == plain GEMM.
        "d1_w": jnp.pad(params["d1_w"].reshape(E, nf * 64),
                        ((0, Ep - E), (0, 0))).astype(jnp.bfloat16),
        "d1_b": jnp.repeat(params["d1_b"], 64).astype(jnp.float32)[None, :],
        "d2_w": _subpixel_weight_folded(params["d2_w"]),
        "d2_b": _subpixel_bias_folded(params["d2_b"]),
        "d3_w": _subpixel_weight_folded(params["d3_w"]),
        "d3_b": _subpixel_bias_folded(params["d3_b"]),
    }
    dims = dict(c1=c1, c2=c2, E=E, nf=nf)
    return pp, dims


# ----------------------------------------------------------------------------
# Net.forward
# ----------------------------------------------------------------------------
def net_forward(pp, depth, normal, silhou, *, dims, silhou_thres=0.0):
    B = depth.shape[0]
    c1, c2, nf = dims["c1"], dims["c2"], dims["nf"]
    Bp = _round_up(B, 16)

    # silhouette masking + channel concat, then cast to bf16 so all im2col /
    # stack / transpose glue runs at half the HBM traffic.
    x = jnp.concatenate([depth, normal], axis=1)                   # [B, 4, H, W]
    x = jnp.where(silhou <= silhou_thres, 0.0, x).astype(jnp.bfloat16)

    # --- ImageEncoder ---
    p1, oh, ow = _patches2d(x, 7, 2, 3)
    p1 = jnp.pad(p1, ((0, pp["w1"].shape[1] - p1.shape[0]), (0, 0)))
    o1 = pallas_gemm(pp["w1"], p1, pp["b1"], "relu")               # bf16 out
    h1 = o1[:c1].reshape(c1, B, oh, ow).transpose(1, 0, 2, 3)      # NCHW bf16

    p2, oh, ow = _patches2d(h1, 3, 2, 1)
    p2 = jnp.pad(p2, ((0, pp["w2"].shape[1] - p2.shape[0]), (0, 0)))
    o2 = pallas_gemm(pp["w2"], p2, pp["b2"], "relu")               # bf16 out
    h2 = o2[:c2].reshape(c2, B, oh * ow)                           # [C2, B, L]

    # global-average-pool (tiny, XLA-fused) + FC GEMM with K = c2 (GAP-fold undone)
    h_mean = h2.astype(jnp.float32).mean(axis=-1).T                # [B, c2]
    Kfc = pp["fc_w"].shape[0]
    h_mean = jnp.pad(h_mean, ((0, Bp - B), (0, Kfc - c2))).astype(jnp.bfloat16)
    latent = pallas_gemm(h_mean, pp["fc_w"], pp["fc_b"], "none")   # [Bp, Ep] bf16

    # --- VoxelDecoder ---
    v1 = pallas_gemm(latent, pp["d1_w"], pp["d1_b"], "relu")       # [Bp, nf*64] bf16
    v1 = v1[:B].reshape(B, nf, 4, 4, 4)

    v2 = pallas_deconv3d_subpixel(v1, pp["d2_w"], pp["d2_b"], nf // 2, "relu")
    vox = pallas_deconv3d_subpixel(v2, pp["d3_w"], pp["d3_b"], 1, "sigmoid",
                                   out_dtype=jnp.float32)
    return vox


# ----------------------------------------------------------------------------
if __name__ == "__main__":
    key = jax.random.PRNGKey(0)
    kp, kd, kn, ks = jax.random.split(key, 4)

    B, H, W = 2, 16, 16
    params = init_params(kp, in_planes=4, encode_dims=32, c1=16, c2=32, nf=16)
    pp, dims = preprocess_params(params)          # one-time layout / pad / bf16

    depth = jax.random.normal(kd, (B, 1, H, W), jnp.float32)
    normal = jax.random.normal(kn, (B, 3, H, W), jnp.float32)
    silhou = jax.random.normal(ks, (B, 1, H, W), jnp.float32)

    fwd = jax.jit(functools.partial(net_forward, dims=dims, silhou_thres=0.0))
    vox = fwd(pp, depth, normal, silhou)
    jax.block_until_ready(vox)

    assert vox.shape == (B, 1, 16, 16, 16), vox.shape
    assert bool(jnp.all(jnp.isfinite(vox)))
    print("KERNEL_OK")
</pallas_src>

<mosaic_0001>
module attributes {stable_mosaic.version = 11 : i64} {
  func.func @_gemm_bias_act_kernel(%arg0: i32, %arg1: i32, %arg2: memref<16x256xbf16, #tpu.memory_space<vmem>>, %arg3: memref<256x128xbf16, #tpu.memory_space<vmem>>, %arg4: memref<16x1xf32, #tpu.memory_space<vmem>>, %arg5: memref<16x128xbf16, #tpu.memory_space<vmem>>, %arg6: memref<16x128xf32, #tpu.memory_space<vmem>>) attributes {dimension_semantics = [#tpu.dimension_semantics<parallel>, #tpu.dimension_semantics<arbitrary>], iteration_bounds = array<i64: 1, 1>, scalar_prefetch = 0 : i64, scratch_operands = 1 : i64, tpu.core_type = #tpu.core_type<tc>, window_params = [{transform_indices = @transform_0, window_bounds = array<i64: 16, 256>}, {transform_indices = @transform_1, window_bounds = array<i64: 256, 128>}, {pipeline_mode = #tpu.pipeline_mode<synchronous>, transform_indices = @transform_2, window_bounds = array<i64: 16, 1>}, {transform_indices = @transform_3, window_bounds = array<i64: 16, 128>}]} {
    %c0_i32 = arith.constant 0 : i32
    %0 = arith.cmpi eq, %arg1, %c0_i32 : i32
    %1 = arith.extui %0 : i1 to i32
    %c0_i32_0 = arith.constant 0 : i32
    %2 = arith.cmpi ne, %1, %c0_i32_0 : i32
    scf.if %2 {
      %cst_10 = arith.constant 0.000000e+00 : f32
      %12 = vector.broadcast %cst_10 : f32 to vector<16x128xf32>
      %c0_11 = arith.constant 0 : index
      %c0_12 = arith.constant 0 : index
      %13 = vector.load %arg6[%c0_11, %c0_12] : memref<16x128xf32, #tpu.memory_space<vmem>>, vector<16x128xf32>
      tpu.vector_store %arg6[%c0_11, %c0_12], %12 {strides = array<i32>} : memref<16x128xf32, #tpu.memory_space<vmem>>, vector<16x128xf32>,
    } else {
    }
    %c0 = arith.constant 0 : index
    %c0_1 = arith.constant 0 : index
    %3 = vector.load %arg6[%c0, %c0_1] : memref<16x128xf32, #tpu.memory_space<vmem>>, vector<16x128xf32>
    %c0_2 = arith.constant 0 : index
    %c0_3 = arith.constant 0 : index
    %4 = vector.load %arg2[%c0_2, %c0_3] : memref<16x256xbf16, #tpu.memory_space<vmem>>, vector<16x256xbf16>
    %c0_4 = arith.constant 0 : index
    %c0_5 = arith.constant 0 : index
    %5 = vector.load %arg3[%c0_4, %c0_5] : memref<256x128xbf16, #tpu.memory_space<vmem>>, vector<256x128xbf16>
    %cst = arith.constant dense<0.000000e+00> : vector<16x128xf32>
    %6 = tpu.matmul %4, %5, %cst {dimension_numbers = #tpu.dot_dimension_numbers<[1], [0], [0], [1], [0, 0, 1, 1], [], []>} : vector<16x256xbf16>, vector<256x128xbf16>, vector<16x128xf32> -> vector<16x128xf32>
    %7 = arith.addf %3, %6 : vector<16x128xf32>
    %c0_6 = arith.constant 0 : index
    %c0_7 = arith.constant 0 : index
    %8 = vector.load %arg6[%c0_6, %c0_7] : memref<16x128xf32, #tpu.memory_space<vmem>>, vector<16x128xf32>
    tpu.vector_store %arg6[%c0_6, %c0_7], %7 {strides = array<i32>} : memref<16x128xf32, #tpu.memory_space<vmem>>, vector<16x128xf32>,
    %c0_i32_8 = arith.constant 0 : i32
    %9 = arith.cmpi eq, %arg1, %c0_i32_8 : i32
    %10 = arith.extui %9 : i1 to i32
    %c0_i32_9 = arith.constant 0 : i32
    %11 = arith.cmpi ne, %10, %c0_i32_9 : i32
    scf.if %11 {
      %c0_10 = arith.constant 0 : index
      %c0_11 = arith.constant 0 : index
      %12 = vector.load %arg6[%c0_10, %c0_11] : memref<16x128xf32, #tpu.memory_space<vmem>>, vector<16x128xf32>
      %c0_12 = arith.constant 0 : index
      %c0_13 = arith.constant 0 : index
      %13 = vector.load %arg4[%c0_12, %c0_13] : memref<16x1xf32, #tpu.memory_space<vmem>>, vector<16x1xf32>
      %14 = vector.broadcast %13 : vector<16x1xf32> to vector<16x128xf32>
      %15 = arith.addf %12, %14 : vector<16x128xf32>
      %cst_14 = arith.constant 0.000000e+00 : f32
      %16 = vector.broadcast %cst_14 : f32 to vector<16x128xf32>
      %17 = arith.maximumf %15, %16 : vector<16x128xf32>
      %18 = arith.truncf %17 : vector<16x128xf32> to vector<16x128xbf16>
      %c0_15 = arith.constant 0 : index
      %c0_16 = arith.constant 0 : index
      %19 = vector.load %arg5[%c0_15, %c0_16] : memref<16x128xbf16, #tpu.memory_space<vmem>>, vector<16x128xbf16>
      tpu.vector_store %arg5[%c0_15, %c0_16], %18 {strides = array<i32>} : memref<16x128xbf16, #tpu.memory_space<vmem>>, vector<16x128xbf16>,
    } else {
    }
    return
  }
  func.func @transform_0(%arg0: i32, %arg1: i32) -> (i32, i32) {
    %c0_i32 = arith.constant 0 : i32
    %c0_i32_0 = arith.constant 0 : i32
    return %c0_i32, %arg1 : i32, i32
  }
  func.func @transform_1(%arg0: i32, %arg1: i32) -> (i32, i32) {
    %c0_i32 = arith.constant 0 : i32
    return %arg1, %arg0 : i32, i32
  }
  func.func @transform_2(%arg0: i32, %arg1: i32) -> (i32, i32) {
    %c0_i32 = arith.constant 0 : i32
    %c0_i32_0 = arith.constant 0 : i32
    %c0_i32_1 = arith.constant 0 : i32
    return %c0_i32, %c0_i32_0 : i32, i32
  }
  func.func @transform_3(%arg0: i32, %arg1: i32) -> (i32, i32) {
    %c0_i32 = arith.constant 0 : i32
    %c0_i32_0 = arith.constant 0 : i32
    return %c0_i32, %arg0 : i32, i32
  }
}

module attributes {stable_mosaic.version = 11 : i64} {
  func.func @_gemm_bias_act_kernel(%arg0: i32, %arg1: i32, %arg2: memref<32x256xbf16, #tpu.memory_space<vmem>>, %arg3: memref<256x32xbf16, #tpu.memory_space<vmem>>, %arg4: memref<32x1xf32, #tpu.memory_space<vmem>>, %arg5: memref<32x32xbf16, #tpu.memory_space<vmem>>, %arg6: memref<32x32xf32, #tpu.memory_space<vmem>>) attributes {dimension_semantics = [#tpu.dimension_semantics<parallel>, #tpu.dimension_semantics<arbitrary>], iteration_bounds = array<i64: 1, 1>, scalar_prefetch = 0 : i64, scratch_operands = 1 : i64, tpu.core_type = #tpu.core_type<tc>, window_params = [{transform_indices = @transform_0, window_bounds = array<i64: 32, 256>}, {transform_indices = @transform_1, window_bounds = array<i64: 256, 32>}, {pipeline_mode = #tpu.pipeline_mode<synchronous>, transform_indices = @transform_2, window_bounds = array<i64: 32, 1>}, {transform_indices = @transform_3, window_bounds = array<i64: 32, 32>}]} {
    %c0_i32 = arith.constant 0 : i32
    %0 = arith.cmpi eq, %arg1, %c0_i32 : i32
    %1 = arith.extui %0 : i1 to i32
    %c0_i32_0 = arith.constant 0 : i32
    %2 = arith.cmpi ne, %1, %c0_i32_0 : i32
    scf.if %2 {
      %cst_10 = arith.constant 0.000000e+00 : f32
      %12 = vector.broadcast %cst_10 : f32 to vector<32x32xf32>
      %c0_11 = arith.constant 0 : index
      %c0_12 = arith.constant 0 : index
      %13 = vector.load %arg6[%c0_11, %c0_12] : memref<32x32xf32, #tpu.memory_space<vmem>>, vector<32x32xf32>
      tpu.vector_store %arg6[%c0_11, %c0_12], %12 {strides = array<i32>} : memref<32x32xf32, #tpu.memory_space<vmem>>, vector<32x32xf32>,
    } else {
    }
    %c0 = arith.constant 0 : index
    %c0_1 = arith.constant 0 : index
    %3 = vector.load %arg6[%c0, %c0_1] : memref<32x32xf32, #tpu.memory_space<vmem>>, vector<32x32xf32>
    %c0_2 = arith.constant 0 : index
    %c0_3 = arith.constant 0 : index
    %4 = vector.load %arg2[%c0_2, %c0_3] : memref<32x256xbf16, #tpu.memory_space<vmem>>, vector<32x256xbf16>
    %c0_4 = arith.constant 0 : index
    %c0_5 = arith.constant 0 : index
    %5 = vector.load %arg3[%c0_4, %c0_5] : memref<256x32xbf16, #tpu.memory_space<vmem>>, vector<256x32xbf16>
    %cst = arith.constant dense<0.000000e+00> : vector<32x32xf32>
    %6 = tpu.matmul %4, %5, %cst {dimension_numbers = #tpu.dot_dimension_numbers<[1], [0], [0], [1], [0, 0, 1, 1], [], []>} : vector<32x256xbf16>, vector<256x32xbf16>, vector<32x32xf32> -> vector<32x32xf32>
    %7 = arith.addf %3, %6 : vector<32x32xf32>
    %c0_6 = arith.constant 0 : index
    %c0_7 = arith.constant 0 : index
    %8 = vector.load %arg6[%c0_6, %c0_7] : memref<32x32xf32, #tpu.memory_space<vmem>>, vector<32x32xf32>
    tpu.vector_store %arg6[%c0_6, %c0_7], %7 {strides = array<i32>} : memref<32x32xf32, #tpu.memory_space<vmem>>, vector<32x32xf32>,
    %c0_i32_8 = arith.constant 0 : i32
    %9 = arith.cmpi eq, %arg1, %c0_i32_8 : i32
    %10 = arith.extui %9 : i1 to i32
    %c0_i32_9 = arith.constant 0 : i32
    %11 = arith.cmpi ne, %10, %c0_i32_9 : i32
    scf.if %11 {
      %c0_10 = arith.constant 0 : index
      %c0_11 = arith.constant 0 : index
      %12 = vector.load %arg6[%c0_10, %c0_11] : memref<32x32xf32, #tpu.memory_space<vmem>>, vector<32x32xf32>
      %c0_12 = arith.constant 0 : index
      %c0_13 = arith.constant 0 : index
      %13 = vector.load %arg4[%c0_12, %c0_13] : memref<32x1xf32, #tpu.memory_space<vmem>>, vector<32x1xf32>
      %14 = vector.broadcast %13 : vector<32x1xf32> to vector<32x32xf32>
      %15 = arith.addf %12, %14 : vector<32x32xf32>
      %cst_14 = arith.constant 0.000000e+00 : f32
      %16 = vector.broadcast %cst_14 : f32 to vector<32x32xf32>
      %17 = arith.maximumf %15, %16 : vector<32x32xf32>
      %18 = arith.truncf %17 : vector<32x32xf32> to vector<32x32xbf16>
      %c0_15 = arith.constant 0 : index
      %c0_16 = arith.constant 0 : index
      %19 = vector.load %arg5[%c0_15, %c0_16] : memref<32x32xbf16, #tpu.memory_space<vmem>>, vector<32x32xbf16>
      tpu.vector_store %arg5[%c0_15, %c0_16], %18 {strides = array<i32>} : memref<32x32xbf16, #tpu.memory_space<vmem>>, vector<32x32xbf16>,
    } else {
    }
    return
  }
  func.func @transform_0(%arg0: i32, %arg1: i32) -> (i32, i32) {
    %c0_i32 = arith.constant 0 : i32
    %c0_i32_0 = arith.constant 0 : i32
    return %c0_i32, %arg1 : i32, i32
  }
  func.func @transform_1(%arg0: i32, %arg1: i32) -> (i32, i32) {
    %c0_i32 = arith.constant 0 : i32
    return %arg1, %arg0 : i32, i32
  }
  func.func @transform_2(%arg0: i32, %arg1: i32) -> (i32, i32) {
    %c0_i32 = arith.constant 0 : i32
    %c0_i32_0 = arith.constant 0 : i32
    %c0_i32_1 = arith.constant 0 : i32
    return %c0_i32, %c0_i32_0 : i32, i32
  }
  func.func @transform_3(%arg0: i32, %arg1: i32) -> (i32, i32) {
    %c0_i32 = arith.constant 0 : i32
    %c0_i32_0 = arith.constant 0 : i32
    return %c0_i32, %arg0 : i32, i32
  }
}

module attributes {stable_mosaic.version = 11 : i64} {
  func.func @_gemm_bias_act_kernel(%arg0: i32, %arg1: i32, %arg2: memref<16x128xbf16, #tpu.memory_space<vmem>>, %arg3: memref<128x128xbf16, #tpu.memory_space<vmem>>, %arg4: memref<1x128xf32, #tpu.memory_space<vmem>>, %arg5: memref<16x128xbf16, #tpu.memory_space<vmem>>, %arg6: memref<16x128xf32, #tpu.memory_space<vmem>>) attributes {dimension_semantics = [#tpu.dimension_semantics<parallel>, #tpu.dimension_semantics<arbitrary>], iteration_bounds = array<i64: 1, 1>, scalar_prefetch = 0 : i64, scratch_operands = 1 : i64, tpu.core_type = #tpu.core_type<tc>, window_params = [{transform_indices = @transform_0, window_bounds = array<i64: 16, 128>}, {transform_indices = @transform_1, window_bounds = array<i64: 128, 128>}, {transform_indices = @transform_2, window_bounds = array<i64: 1, 128>}, {transform_indices = @transform_3, window_bounds = array<i64: 16, 128>}]} {
    %c0_i32 = arith.constant 0 : i32
    %0 = arith.cmpi eq, %arg1, %c0_i32 : i32
    %1 = arith.extui %0 : i1 to i32
    %c0_i32_0 = arith.constant 0 : i32
    %2 = arith.cmpi ne, %1, %c0_i32_0 : i32
    scf.if %2 {
      %cst_10 = arith.constant 0.000000e+00 : f32
      %12 = vector.broadcast %cst_10 : f32 to vector<16x128xf32>
      %c0_11 = arith.constant 0 : index
      %c0_12 = arith.constant 0 : index
      %13 = vector.load %arg6[%c0_11, %c0_12] : memref<16x128xf32, #tpu.memory_space<vmem>>, vector<16x128xf32>
      tpu.vector_store %arg6[%c0_11, %c0_12], %12 {strides = array<i32>} : memref<16x128xf32, #tpu.memory_space<vmem>>, vector<16x128xf32>,
    } else {
    }
    %c0 = arith.constant 0 : index
    %c0_1 = arith.constant 0 : index
    %3 = vector.load %arg6[%c0, %c0_1] : memref<16x128xf32, #tpu.memory_space<vmem>>, vector<16x128xf32>
    %c0_2 = arith.constant 0 : index
    %c0_3 = arith.constant 0 : index
    %4 = vector.load %arg2[%c0_2, %c0_3] : memref<16x128xbf16, #tpu.memory_space<vmem>>, vector<16x128xbf16>
    %c0_4 = arith.constant 0 : index
    %c0_5 = arith.constant 0 : index
    %5 = vector.load %arg3[%c0_4, %c0_5] : memref<128x128xbf16, #tpu.memory_space<vmem>>, vector<128x128xbf16>
    %cst = arith.constant dense<0.000000e+00> : vector<16x128xf32>
    %6 = tpu.matmul %4, %5, %cst {dimension_numbers = #tpu.dot_dimension_numbers<[1], [0], [0], [1], [0, 0, 1, 1], [], []>} : vector<16x128xbf16>, vector<128x128xbf16>, vector<16x128xf32> -> vector<16x128xf32>
    %7 = arith.addf %3, %6 : vector<16x128xf32>
    %c0_6 = arith.constant 0 : index
    %c0_7 = arith.constant 0 : index
    %8 = vector.load %arg6[%c0_6, %c0_7] : memref<16x128xf32, #tpu.memory_space<vmem>>, vector<16x128xf32>
    tpu.vector_store %arg6[%c0_6, %c0_7], %7 {strides = array<i32>} : memref<16x128xf32, #tpu.memory_space<vmem>>, vector<16x128xf32>,
    %c0_i32_8 = arith.constant 0 : i32
    %9 = arith.cmpi eq, %arg1, %c0_i32_8 : i32
    %10 = arith.extui %9 : i1 to i32
    %c0_i32_9 = arith.constant 0 : i32
    %11 = arith.cmpi ne, %10, %c0_i32_9 : i32
    scf.if %11 {
      %c0_10 = arith.constant 0 : index
      %c0_11 = arith.constant 0 : index
      %12 = vector.load %arg6[%c0_10, %c0_11] : memref<16x128xf32, #tpu.memory_space<vmem>>, vector<16x128xf32>
      %c0_12 = arith.constant 0 : index
      %c0_13 = arith.constant 0 : index
      %13 = vector.load %arg4[%c0_12, %c0_13] : memref<1x128xf32, #tpu.memory_space<vmem>>, vector<1x128xf32>
      %14 = vector.broadcast %13 : vector<1x128xf32> to vector<16x128xf32>
      %15 = arith.addf %12, %14 : vector<16x128xf32>
      %16 = arith.truncf %15 : vector<16x128xf32> to vector<16x128xbf16>
      %c0_14 = arith.constant 0 : index
      %c0_15 = arith.constant 0 : index
      %17 = vector.load %arg5[%c0_14, %c0_15] : memref<16x128xbf16, #tpu.memory_space<vmem>>, vector<16x128xbf16>
      tpu.vector_store %arg5[%c0_14, %c0_15], %16 {strides = array<i32>} : memref<16x128xbf16, #tpu.memory_space<vmem>>, vector<16x128xbf16>,
    } else {
    }
    return
  }
  func.func @transform_0(%arg0: i32, %arg1: i32) -> (i32, i32) {
    %c0_i32 = arith.constant 0 : i32
    %c0_i32_0 = arith.constant 0 : i32
    return %c0_i32, %arg1 : i32, i32
  }
  func.func @transform_1(%arg0: i32, %arg1: i32) -> (i32, i32) {
    %c0_i32 = arith.constant 0 : i32
    return %arg1, %arg0 : i32, i32
  }
  func.func @transform_2(%arg0: i32, %arg1: i32) -> (i32, i32) {
    %c0_i32 = arith.constant 0 : i32
    %c0_i32_0 = arith.constant 0 : i32
    return %c0_i32, %arg0 : i32, i32
  }
  func.func @transform_3(%arg0: i32, %arg1: i32) -> (i32, i32) {
    %c0_i32 = arith.constant 0 : i32
    %c0_i32_0 = arith.constant 0 : i32
    return %c0_i32, %arg0 : i32, i32
  }
}

module attributes {stable_mosaic.version = 11 : i64} {
  func.func @_gemm_bias_act_kernel(%arg0: i32, %arg1: i32, %arg2: memref<16x128xbf16, #tpu.memory_space<vmem>>, %arg3: memref<128x512xbf16, #tpu.memory_space<vmem>>, %arg4: memref<1x512xf32, #tpu.memory_space<vmem>>, %arg5: memref<16x512xbf16, #tpu.memory_space<vmem>>, %arg6: memref<16x512xf32, #tpu.memory_space<vmem>>) attributes {dimension_semantics = [#tpu.dimension_semantics<parallel>, #tpu.dimension_semantics<arbitrary>], iteration_bounds = array<i64: 2, 1>, scalar_prefetch = 0 : i64, scratch_operands = 1 : i64, tpu.core_type = #tpu.core_type<tc>, window_params = [{transform_indices = @transform_0, window_bounds = array<i64: 16, 128>}, {transform_indices = @transform_1, window_bounds = array<i64: 128, 512>}, {transform_indices = @transform_2, window_bounds = array<i64: 1, 512>}, {transform_indices = @transform_3, window_bounds = array<i64: 16, 512>}]} {
    %c0_i32 = arith.constant 0 : i32
    %0 = arith.cmpi eq, %arg1, %c0_i32 : i32
    %1 = arith.extui %0 : i1 to i32
    %c0_i32_0 = arith.constant 0 : i32
    %2 = arith.cmpi ne, %1, %c0_i32_0 : i32
    scf.if %2 {
      %cst_10 = arith.constant 0.000000e+00 : f32
      %12 = vector.broadcast %cst_10 : f32 to vector<16x512xf32>
      %c0_11 = arith.constant 0 : index
      %c0_12 = arith.constant 0 : index
      %13 = vector.load %arg6[%c0_11, %c0_12] : memref<16x512xf32, #tpu.memory_space<vmem>>, vector<16x512xf32>
      tpu.vector_store %arg6[%c0_11, %c0_12], %12 {strides = array<i32>} : memref<16x512xf32, #tpu.memory_space<vmem>>, vector<16x512xf32>,
    } else {
    }
    %c0 = arith.constant 0 : index
    %c0_1 = arith.constant 0 : index
    %3 = vector.load %arg6[%c0, %c0_1] : memref<16x512xf32, #tpu.memory_space<vmem>>, vector<16x512xf32>
    %c0_2 = arith.constant 0 : index
    %c0_3 = arith.constant 0 : index
    %4 = vector.load %arg2[%c0_2, %c0_3] : memref<16x128xbf16, #tpu.memory_space<vmem>>, vector<16x128xbf16>
    %c0_4 = arith.constant 0 : index
    %c0_5 = arith.constant 0 : index
    %5 = vector.load %arg3[%c0_4, %c0_5] : memref<128x512xbf16, #tpu.memory_space<vmem>>, vector<128x512xbf16>
    %cst = arith.constant dense<0.000000e+00> : vector<16x512xf32>
    %6 = tpu.matmul %4, %5, %cst {dimension_numbers = #tpu.dot_dimension_numbers<[1], [0], [0], [1], [0, 0, 1, 1], [], []>} : vector<16x128xbf16>, vector<128x512xbf16>, vector<16x512xf32> -> vector<16x512xf32>
    %7 = arith.addf %3, %6 : vector<16x512xf32>
    %c0_6 = arith.constant 0 : index
    %c0_7 = arith.constant 0 : index
    %8 = vector.load %arg6[%c0_6, %c0_7] : memref<16x512xf32, #tpu.memory_space<vmem>>, vector<16x512xf32>
    tpu.vector_store %arg6[%c0_6, %c0_7], %7 {strides = array<i32>} : memref<16x512xf32, #tpu.memory_space<vmem>>, vector<16x512xf32>,
    %c0_i32_8 = arith.constant 0 : i32
    %9 = arith.cmpi eq, %arg1, %c0_i32_8 : i32
    %10 = arith.extui %9 : i1 to i32
    %c0_i32_9 = arith.constant 0 : i32
    %11 = arith.cmpi ne, %10, %c0_i32_9 : i32
    scf.if %11 {
      %c0_10 = arith.constant 0 : index
      %c0_11 = arith.constant 0 : index
      %12 = vector.load %arg6[%c0_10, %c0_11] : memref<16x512xf32, #tpu.memory_space<vmem>>, vector<16x512xf32>
      %c0_12 = arith.constant 0 : index
      %c0_13 = arith.constant 0 : index
      %13 = vector.load %arg4[%c0_12, %c0_13] : memref<1x512xf32, #tpu.memory_space<vmem>>, vector<1x512xf32>
      %14 = vector.broadcast %13 : vector<1x512xf32> to vector<16x512xf32>
      %15 = arith.addf %12, %14 : vector<16x512xf32>
      %cst_14 = arith.constant 0.000000e+00 : f32
      %16 = vector.broadcast %cst_14 : f32 to vector<16x512xf32>
      %17 = arith.maximumf %15, %16 : vector<16x512xf32>
      %18 = arith.truncf %17 : vector<16x512xf32> to vector<16x512xbf16>
      %c0_15 = arith.constant 0 : index
      %c0_16 = arith.constant 0 : index
      %19 = vector.load %arg5[%c0_15, %c0_16] : memref<16x512xbf16, #tpu.memory_space<vmem>>, vector<16x512xbf16>
      tpu.vector_store %arg5[%c0_15, %c0_16], %18 {strides = array<i32>} : memref<16x512xbf16, #tpu.memory_space<vmem>>, vector<16x512xbf16>,
    } else {
    }
    return
  }
  func.func @transform_0(%arg0: i32, %arg1: i32) -> (i32, i32) {
    %c0_i32 = arith.constant 0 : i32
    %c0_i32_0 = arith.constant 0 : i32
    return %c0_i32, %arg1 : i32, i32
  }
  func.func @transform_1(%arg0: i32, %arg1: i32) -> (i32, i32) {
    %c0_i32 = arith.constant 0 : i32
    return %arg1, %arg0 : i32, i32
  }
  func.func @transform_2(%arg0: i32, %arg1: i32) -> (i32, i32) {
    %c0_i32 = arith.constant 0 : i32
    %c0_i32_0 = arith.constant 0 : i32
    return %c0_i32, %arg0 : i32, i32
  }
  func.func @transform_3(%arg0: i32, %arg1: i32) -> (i32, i32) {
    %c0_i32 = arith.constant 0 : i32
    %c0_i32_0 = arith.constant 0 : i32
    return %c0_i32, %arg0 : i32, i32
  }
}

module attributes {stable_mosaic.version = 11 : i64} {
  func.func @_gemm_bias_act_kernel(%arg0: i32, %arg1: i32, %arg2: memref<64x512xbf16, #tpu.memory_space<vmem>>, %arg3: memref<512x128xbf16, #tpu.memory_space<vmem>>, %arg4: memref<64x1xf32, #tpu.memory_space<vmem>>, %arg5: memref<64x128xbf16, #tpu.memory_space<vmem>>, %arg6: memref<64x128xf32, #tpu.memory_space<vmem>>) attributes {dimension_semantics = [#tpu.dimension_semantics<parallel>, #tpu.dimension_semantics<arbitrary>], iteration_bounds = array<i64: 1, 1>, scalar_prefetch = 0 : i64, scratch_operands = 1 : i64, tpu.core_type = #tpu.core_type<tc>, window_params = [{transform_indices = @transform_0, window_bounds = array<i64: 64, 512>}, {transform_indices = @transform_1, window_bounds = array<i64: 512, 128>}, {pipeline_mode = #tpu.pipeline_mode<synchronous>, transform_indices = @transform_2, window_bounds = array<i64: 64, 1>}, {transform_indices = @transform_3, window_bounds = array<i64: 64, 128>}]} {
    %c0_i32 = arith.constant 0 : i32
    %0 = arith.cmpi eq, %arg1, %c0_i32 : i32
    %1 = arith.extui %0 : i1 to i32
    %c0_i32_0 = arith.constant 0 : i32
    %2 = arith.cmpi ne, %1, %c0_i32_0 : i32
    scf.if %2 {
      %cst_10 = arith.constant 0.000000e+00 : f32
      %12 = vector.broadcast %cst_10 : f32 to vector<64x128xf32>
      %c0_11 = arith.constant 0 : index
      %c0_12 = arith.constant 0 : index
      %13 = vector.load %arg6[%c0_11, %c0_12] : memref<64x128xf32, #tpu.memory_space<vmem>>, vector<64x128xf32>
      tpu.vector_store %arg6[%c0_11, %c0_12], %12 {strides = array<i32>} : memref<64x128xf32, #tpu.memory_space<vmem>>, vector<64x128xf32>,
    } else {
    }
    %c0 = arith.constant 0 : index
    %c0_1 = arith.constant 0 : index
    %3 = vector.load %arg6[%c0, %c0_1] : memref<64x128xf32, #tpu.memory_space<vmem>>, vector<64x128xf32>
    %c0_2 = arith.constant 0 : index
    %c0_3 = arith.constant 0 : index
    %4 = vector.load %arg2[%c0_2, %c0_3] : memref<64x512xbf16, #tpu.memory_space<vmem>>, vector<64x512xbf16>
    %c0_4 = arith.constant 0 : index
    %c0_5 = arith.constant 0 : index
    %5 = vector.load %arg3[%c0_4, %c0_5] : memref<512x128xbf16, #tpu.memory_space<vmem>>, vector<512x128xbf16>
    %cst = arith.constant dense<0.000000e+00> : vector<64x128xf32>
    %6 = tpu.matmul %4, %5, %cst {dimension_numbers = #tpu.dot_dimension_numbers<[1], [0], [0], [1], [0, 0, 1, 1], [], []>} : vector<64x512xbf16>, vector<512x128xbf16>, vector<64x128xf32> -> vector<64x128xf32>
    %7 = arith.addf %3, %6 : vector<64x128xf32>
    %c0_6 = arith.constant 0 : index
    %c0_7 = arith.constant 0 : index
    %8 = vector.load %arg6[%c0_6, %c0_7] : memref<64x128xf32, #tpu.memory_space<vmem>>, vector<64x128xf32>
    tpu.vector_store %arg6[%c0_6, %c0_7], %7 {strides = array<i32>} : memref<64x128xf32, #tpu.memory_space<vmem>>, vector<64x128xf32>,
    %c0_i32_8 = arith.constant 0 : i32
    %9 = arith.cmpi eq, %arg1, %c0_i32_8 : i32
    %10 = arith.extui %9 : i1 to i32
    %c0_i32_9 = arith.constant 0 : i32
    %11 = arith.cmpi ne, %10, %c0_i32_9 : i32
    scf.if %11 {
      %c0_10 = arith.constant 0 : index
      %c0_11 = arith.constant 0 : index
      %12 = vector.load %arg6[%c0_10, %c0_11] : memref<64x128xf32, #tpu.memory_space<vmem>>, vector<64x128xf32>
      %c0_12 = arith.constant 0 : index
      %c0_13 = arith.constant 0 : index
      %13 = vector.load %arg4[%c0_12, %c0_13] : memref<64x1xf32, #tpu.memory_space<vmem>>, vector<64x1xf32>
      %14 = vector.broadcast %13 : vector<64x1xf32> to vector<64x128xf32>
      %15 = arith.addf %12, %14 : vector<64x128xf32>
      %cst_14 = arith.constant 0.000000e+00 : f32
      %16 = vector.broadcast %cst_14 : f32 to vector<64x128xf32>
      %17 = arith.maximumf %15, %16 : vector<64x128xf32>
      %18 = arith.truncf %17 : vector<64x128xf32> to vector<64x128xbf16>
      %c0_15 = arith.constant 0 : index
      %c0_16 = arith.constant 0 : index
      %19 = vector.load %arg5[%c0_15, %c0_16] : memref<64x128xbf16, #tpu.memory_space<vmem>>, vector<64x128xbf16>
      tpu.vector_store %arg5[%c0_15, %c0_16], %18 {strides = array<i32>} : memref<64x128xbf16, #tpu.memory_space<vmem>>, vector<64x128xbf16>,
    } else {
    }
    return
  }
  func.func @transform_0(%arg0: i32, %arg1: i32) -> (i32, i32) {
    %c0_i32 = arith.constant 0 : i32
    %c0_i32_0 = arith.constant 0 : i32
    return %c0_i32, %arg1 : i32, i32
  }
  func.func @transform_1(%arg0: i32, %arg1: i32) -> (i32, i32) {
    %c0_i32 = arith.constant 0 : i32
    return %arg1, %arg0 : i32, i32
  }
  func.func @transform_2(%arg0: i32, %arg1: i32) -> (i32, i32) {
    %c0_i32 = arith.constant 0 : i32
    %c0_i32_0 = arith.constant 0 : i32
    %c0_i32_1 = arith.constant 0 : i32
    return %c0_i32, %c0_i32_0 : i32, i32
  }
  func.func @transform_3(%arg0: i32, %arg1: i32) -> (i32, i32) {
    %c0_i32 = arith.constant 0 : i32
    %c0_i32_0 = arith.constant 0 : i32
    return %c0_i32, %arg0 : i32, i32
  }
}

module attributes {stable_mosaic.version = 11 : i64} {
  func.func @_gemm_bias_act_kernel(%arg0: i32, %arg1: i32, %arg2: memref<16x256xbf16, #tpu.memory_space<vmem>>, %arg3: memref<256x512xbf16, #tpu.memory_space<vmem>>, %arg4: memref<16x1xf32, #tpu.memory_space<vmem>>, %arg5: memref<16x512xf32, #tpu.memory_space<vmem>>, %arg6: memref<16x512xf32, #tpu.memory_space<vmem>>) attributes {dimension_semantics = [#tpu.dimension_semantics<parallel>, #tpu.dimension_semantics<arbitrary>], iteration_bounds = array<i64: 2, 1>, scalar_prefetch = 0 : i64, scratch_operands = 1 : i64, tpu.core_type = #tpu.core_type<tc>, window_params = [{transform_indices = @transform_0, window_bounds = array<i64: 16, 256>}, {transform_indices = @transform_1, window_bounds = array<i64: 256, 512>}, {pipeline_mode = #tpu.pipeline_mode<synchronous>, transform_indices = @transform_2, window_bounds = array<i64: 16, 1>}, {transform_indices = @transform_3, window_bounds = array<i64: 16, 512>}]} {
    %c0_i32 = arith.constant 0 : i32
    %0 = arith.cmpi eq, %arg1, %c0_i32 : i32
    %1 = arith.extui %0 : i1 to i32
    %c0_i32_0 = arith.constant 0 : i32
    %2 = arith.cmpi ne, %1, %c0_i32_0 : i32
    scf.if %2 {
      %cst_10 = arith.constant 0.000000e+00 : f32
      %12 = vector.broadcast %cst_10 : f32 to vector<16x512xf32>
      %c0_11 = arith.constant 0 : index
      %c0_12 = arith.constant 0 : index
      %13 = vector.load %arg6[%c0_11, %c0_12] : memref<16x512xf32, #tpu.memory_space<vmem>>, vector<16x512xf32>
      tpu.vector_store %arg6[%c0_11, %c0_12], %12 {strides = array<i32>} : memref<16x512xf32, #tpu.memory_space<vmem>>, vector<16x512xf32>,
    } else {
    }
    %c0 = arith.constant 0 : index
    %c0_1 = arith.constant 0 : index
    %3 = vector.load %arg6[%c0, %c0_1] : memref<16x512xf32, #tpu.memory_space<vmem>>, vector<16x512xf32>
    %c0_2 = arith.constant 0 : index
    %c0_3 = arith.constant 0 : index
    %4 = vector.load %arg2[%c0_2, %c0_3] : memref<16x256xbf16, #tpu.memory_space<vmem>>, vector<16x256xbf16>
    %c0_4 = arith.constant 0 : index
    %c0_5 = arith.constant 0 : index
    %5 = vector.load %arg3[%c0_4, %c0_5] : memref<256x512xbf16, #tpu.memory_space<vmem>>, vector<256x512xbf16>
    %cst = arith.constant dense<0.000000e+00> : vector<16x512xf32>
    %6 = tpu.matmul %4, %5, %cst {dimension_numbers = #tpu.dot_dimension_numbers<[1], [0], [0], [1], [0, 0, 1, 1], [], []>} : vector<16x256xbf16>, vector<256x512xbf16>, vector<16x512xf32> -> vector<16x512xf32>
    %7 = arith.addf %3, %6 : vector<16x512xf32>
    %c0_6 = arith.constant 0 : index
    %c0_7 = arith.constant 0 : index
    %8 = vector.load %arg6[%c0_6, %c0_7] : memref<16x512xf32, #tpu.memory_space<vmem>>, vector<16x512xf32>
    tpu.vector_store %arg6[%c0_6, %c0_7], %7 {strides = array<i32>} : memref<16x512xf32, #tpu.memory_space<vmem>>, vector<16x512xf32>,
    %c0_i32_8 = arith.constant 0 : i32
    %9 = arith.cmpi eq, %arg1, %c0_i32_8 : i32
    %10 = arith.extui %9 : i1 to i32
    %c0_i32_9 = arith.constant 0 : i32
    %11 = arith.cmpi ne, %10, %c0_i32_9 : i32
    scf.if %11 {
      %c0_10 = arith.constant 0 : index
      %c0_11 = arith.constant 0 : index
      %12 = vector.load %arg6[%c0_10, %c0_11] : memref<16x512xf32, #tpu.memory_space<vmem>>, vector<16x512xf32>
      %c0_12 = arith.constant 0 : index
      %c0_13 = arith.constant 0 : index
      %13 = vector.load %arg4[%c0_12, %c0_13] : memref<16x1xf32, #tpu.memory_space<vmem>>, vector<16x1xf32>
      %14 = vector.broadcast %13 : vector<16x1xf32> to vector<16x512xf32>
      %15 = arith.addf %12, %14 : vector<16x512xf32>
      %16 = arith.negf %15 : vector<16x512xf32>
      %17 = math.exp %16 : vector<16x512xf32>
      %cst_14 = arith.constant 1.000000e+00 : f32
      %18 = vector.broadcast %cst_14 : f32 to vector<16x512xf32>
      %19 = arith.addf %18, %17 : vector<16x512xf32>
      %20 = arith.divf %18, %19 : vector<16x512xf32>
      %c0_15 = arith.constant 0 : index
      %c0_16 = arith.constant 0 : index
      %21 = vector.load %arg5[%c0_15, %c0_16] : memref<16x512xf32, #tpu.memory_space<vmem>>, vector<16x512xf32>
      tpu.vector_store %arg5[%c0_15, %c0_16], %20 {strides = array<i32>} : memref<16x512xf32, #tpu.memory_space<vmem>>, vector<16x512xf32>,
    } else {
    }
    return
  }
  func.func @transform_0(%arg0: i32, %arg1: i32) -> (i32, i32) {
    %c0_i32 = arith.constant 0 : i32
    %c0_i32_0 = arith.constant 0 : i32
    return %c0_i32, %arg1 : i32, i32
  }
  func.func @transform_1(%arg0: i32, %arg1: i32) -> (i32, i32) {
    %c0_i32 = arith.constant 0 : i32
    return %arg1, %arg0 : i32, i32
  }
  func.func @transform_2(%arg0: i32, %arg1: i32) -> (i32, i32) {
    %c0_i32 = arith.constant 0 : i32
    %c0_i32_0 = arith.constant 0 : i32
    %c0_i32_1 = arith.constant 0 : i32
    return %c0_i32, %c0_i32_0 : i32, i32
  }
  func.func @transform_3(%arg0: i32, %arg1: i32) -> (i32, i32) {
    %c0_i32 = arith.constant 0 : i32
    %c0_i32_0 = arith.constant 0 : i32
    return %c0_i32, %arg0 : i32, i32
  }
}

</mosaic_0001>

<llo_original>
// kernel: net_forward.6
$region0: #{net_forward.6}
  #allocation0 [shape = 'u32[]', space=smem, size = 0x4, offset = 0x4, fixed_abs, tag = 'smem constant byte address 0x4 - core index']
  #allocation1 [shape = 'u32[144,128]{1,0:T(1,128)}', space=vmem, size = 0x12000, scoped, tag = 'internal scratch']
  #allocation2 [shape = 'f32[16,128]{1,0:T(8,128)}', space=vmem, size = 0x2000, scoped, tag = 'scratch operand']
  %s0 = inlined_call_operand.vmem [shape: bf16[16,256], index: 0, kind: input, shape index: {}]
  %s1 = inlined_call_operand.vmem [shape: bf16[256,128], index: 1, kind: input, shape index: {}]
  %s2 = inlined_call_operand.vmem [shape: f32[16,1], index: 2, kind: input, shape index: {}]
  %s3 = inlined_call_operand.vmem [shape: bf16[16,128], index: 3, kind: output, shape index: {}]
  %s4 = sld [smem:[#allocation0]]
  $region30: #{net_forward.6} parent=0
    _
  %s6 = ssub.s32 1, %s4
  %s7 = scalar_select 0, %s6, %s4
  // Predicated region
  $region2: #{net_forward.6} parent=0 // pred_check
    _
  $region3: #{net_forward.6} parent=0 // pred_check_branch
    %9 = sbr.rel (0) target = $region5
  $region4: #{net_forward.6} parent=0 // pred_region
    _
  $region5: #{net_forward.6} parent=0 // pred_fallthru
    _
  // Predicated region
  $region6: #{net_forward.6} parent=0 // pred_check
    _
  $region7: #{net_forward.6} parent=0 // pred_check_branch
    %11 = sbr.rel (0) target = $region9
  $region8: #{net_forward.6} parent=0 // pred_region
    _
  $region9: #{net_forward.6} parent=0 // pred_fallthru
    _
  // Predicated region
  $region10: #{net_forward.6} parent=0 // pred_check
    _
  $region11: #{net_forward.6} parent=0 // pred_check_branch
    %13 = sbr.rel (0) target = $region13
  $region12: #{net_forward.6} parent=0 // pred_region
    _
  $region13: #{net_forward.6} parent=0 // pred_fallthru
    _
  %p15 = scmp.eq.s32.totalorder 0, 0
  // Predicated region
  $region14: #{net_forward.6} parent=0 // pred_check
    %p16 = pneg %p15
  $region15: #{net_forward.6} parent=0 // pred_check_branch
    %18 = sbr.rel (%p16) target = $region17
  $region16: #{net_forward.6} parent=0 // pred_region
    %19 = vst [vmem:[#allocation2] sm:$0xff] 0.0
    %20 = vst [vmem:[#allocation2 + $0x8] sm:$0xff] 0.0
  $region17: #{net_forward.6} parent=0 // pred_fallthru
    _
  %v21 = vld [vmem:[#allocation2] sm:$0xff]
  %v22 = vld [vmem:[#allocation2 + $0x8] sm:$0xff]
  %v23 = vld [vmem:[%s0] sm:$0xff]
  %v24 = vld [vmem:[%s0 + $0x8] sm:$0xff]
  %v25 = vld [vmem:[%s1] sm:$0xf]
  %v26 = vld [vmem:[%s1 + $0x4] sm:$0xf]
  %v27 = vld [vmem:[%s1 + $0x8] sm:$0xf]
  %v28 = vld [vmem:[%s1 + $0xc] sm:$0xf]
  %v29 = vld [vmem:[%s1 + $0x10] sm:$0xf]
  %v30 = vld [vmem:[%s1 + $0x14] sm:$0xf]
  %v31 = vld [vmem:[%s1 + $0x18] sm:$0xf]
  %v32 = vld [vmem:[%s1 + $0x1c] sm:$0xf]
  %v33 = vld [vmem:[%s1 + $0x20] sm:$0xf]
  %v34 = vld [vmem:[%s1 + $0x24] sm:$0xf]
  %v35 = vld [vmem:[%s1 + $0x28] sm:$0xf]
  %v36 = vld [vmem:[%s1 + $0x2c] sm:$0xf]
  %v37 = vld [vmem:[%s1 + $0x30] sm:$0xf]
  %v38 = vld [vmem:[%s1 + $0x34] sm:$0xf]
  %v39 = vld [vmem:[%s1 + $0x38] sm:$0xf]
  %v40 = vld [vmem:[%s1 + $0x3c] sm:$0xf]
  %v41 = vld [vmem:[%s1 + $0x40] sm:$0xf]
  %v42 = vld [vmem:[%s1 + $0x44] sm:$0xf]
  %v43 = vld [vmem:[%s1 + $0x48] sm:$0xf]
  %v44 = vld [vmem:[%s1 + $0x4c] sm:$0xf]
  %v45 = vld [vmem:[%s1 + $0x50] sm:$0xf]
  %v46 = vld [vmem:[%s1 + $0x54] sm:$0xf]
  %v47 = vld [vmem:[%s1 + $0x58] sm:$0xf]
  %v48 = vld [vmem:[%s1 + $0x5c] sm:$0xf]
  %v49 = vld [vmem:[%s1 + $0x60] sm:$0xf]
  %v50 = vld [vmem:[%s1 + $0x64] sm:$0xf]
  %v51 = vld [vmem:[%s1 + $0x68] sm:$0xf]
  %v52 = vld [vmem:[%s1 + $0x6c] sm:$0xf]
  %v53 = vld [vmem:[%s1 + $0x70] sm:$0xf]
  %v54 = vld [vmem:[%s1 + $0x74] sm:$0xf]
  %v55 = vld [vmem:[%s1 + $0x78] sm:$0xf]
  %v56 = vld [vmem:[%s1 + $0x7c] sm:$0xf]
  %v59 = vunpack.c.l.b16 %v23
  %v60 = vunpack.c.h.b16 %v23
  %v61 = vunpack.c.l.b16 %v24
  %v62 = vunpack.c.h.b16 %v24
  %v63 = vpack.c.b16 %v61, %v59
  %v64 = vpack.c.b16 %v62, %v60
  %v99 = vunpack.c.l.b16 %v25
  %v100 = vunpack.c.l.b16 %v26
  %v101 = vunpack.c.l.b16 %v27
  %v102 = vunpack.c.l.b16 %v28
  %v103 = vunpack.c.l.b16 %v29
  %v104 = vunpack.c.l.b16 %v30
  %v105 = vunpack.c.l.b16 %v31
  %v106 = vunpack.c.l.b16 %v32
  %v107 = vunpack.c.l.b16 %v33
  %v108 = vunpack.c.l.b16 %v34
  %v109 = vunpack.c.l.b16 %v35
  %v110 = vunpack.c.l.b16 %v36
  %v111 = vunpack.c.l.b16 %v37
  %v112 = vunpack.c.l.b16 %v38
  %v113 = vunpack.c.l.b16 %v39
  %v114 = vunpack.c.l.b16 %v40
  %v115 = vunpack.c.l.b16 %v41
  %v116 = vunpack.c.l.b16 %v42
  %v117 = vunpack.c.l.b16 %v43
  %v118 = vunpack.c.l.b16 %v44
  %v119 = vunpack.c.l.b16 %v45
  %v120 = vunpack.c.l.b16 %v46
  %v121 = vunpack.c.l.b16 %v47
  %v122 = vunpack.c.l.b16 %v48
  %v123 = vunpack.c.l.b16 %v49
  %v124 = vunpack.c.l.b16 %v50
  %v125 = vunpack.c.l.b16 %v51
  %v126 = vunpack.c.l.b16 %v52
  %v127 = vunpack.c.l.b16 %v53
  %v128 = vunpack.c.l.b16 %v54
  %v129 = vunpack.c.l.b16 %v55
  %v130 = vunpack.c.l.b16 %v56
  %v131 = vpack.c.b16 %v100, %v99
  %v132 = vpack.c.b16 %v102, %v101
  %v133 = vpack.c.b16 %v104, %v103
  %v134 = vpack.c.b16 %v106, %v105
  %v135 = vpack.c.b16 %v108, %v107
  %v136 = vpack.c.b16 %v110, %v109
  %v137 = vpack.c.b16 %v112, %v111
  %v138 = vpack.c.b16 %v114, %v113
  %v139 = vpack.c.b16 %v116, %v115
  %v140 = vpack.c.b16 %v118, %v117
  %v141 = vpack.c.b16 %v120, %v119
  %v142 = vpack.c.b16 %v122, %v121
  %v143 = vpack.c.b16 %v124, %v123
  %v144 = vpack.c.b16 %v126, %v125
  %v145 = vpack.c.b16 %v128, %v127
  %v146 = vpack.c.b16 %v130, %v129
  %163 = vmatprep.subr.bf16.mxu0 0
  %164 = vmatpush1.bf16.msra.mxu0 %v138
  %165 = vmatprep.subr.bf16.mxu0 0
  %166 = vmatpush1.bf16.msra.mxu0 %v137
  %167 = vmatprep.subr.bf16.mxu0 0
  %168 = vmatpush1.bf16.msra.mxu0 %v136
  %169 = vmatprep.subr.bf16.mxu0 0
  %170 = vmatpush1.bf16.msra.mxu0 %v135
  %171 = vmatprep.subr.bf16.mxu0 0
  %172 = vmatpush1.bf16.msra.mxu0 %v134
  %173 = vmatprep.subr.bf16.mxu0 0
  %174 = vmatpush1.bf16.msra.mxu0 %v133
  %175 = vmatprep.subr.bf16.mxu0 0
  %176 = vmatpush1.bf16.msra.mxu0 %v132
  %177 = vmatprep.subr.bf16.mxu0 0
  %178 = vmatpush1.bf16.msra.mxu0 %v131
  %179 = vmatprep.subr.bf16.mxu0 0
  %180 = vmatpush2.bf16.msra.mxu0 %v146
  %181 = vmatprep.subr.bf16.mxu0 0
  %182 = vmatpush2.bf16.msra.mxu0 %v145
  %183 = vmatprep.subr.bf16.mxu0 0
  %184 = vmatpush2.bf16.msra.mxu0 %v144
  %185 = vmatprep.subr.bf16.mxu0 0
  %186 = vmatpush2.bf16.msra.mxu0 %v143
  %187 = vmatprep.subr.bf16.mxu0 0
  %188 = vmatpush2.bf16.msra.mxu0 %v142
  %189 = vmatprep.subr.bf16.mxu0 0
  %190 = vmatpush2.bf16.msra.mxu0 %v141
  %191 = vmatprep.subr.bf16.mxu0 0
  %192 = vmatpush2.bf16.msra.mxu0 %v140
  %193 = vmatprep.subr.bf16.mxu0 0
  %194 = vmatpush2.bf16.msra.mxu0 %v139
  %195 = vmatprep.mubr.bf16.mxu0 %v64
  %196 = vmatmul.mubr.bf16.gmra.mxu0 %v63
  %v197 = vpop.f32.mrf.mxu0
  %v198 = vadd.f32 0.0, %v197
  %v199 = vpop.f32.mrf.mxu0
  %v200 = vpop.f32.mrf.mxu0
  %v201 = vadd.f32 0.0, %v200
  %v202 = vpop.f32.mrf.mxu0
  %203 = vdwg.mxu0
  %v204 = vadd.f32 %v21, %v198
  %v205 = vadd.f32 %v22, %v201
  %206 = vst [vmem:[#allocation2] sm:$0xff] %v204
  %207 = vst [vmem:[#allocation2 + $0x8] sm:$0xff] %v205
  // Predicated region
  $region18: #{net_forward.6} parent=0 // pred_check
    %p208 = pneg %p15
  $region19: #{net_forward.6} parent=0 // pred_check_branch
    %210 = sbr.rel (%p208) target = $region21
  $region20: #{net_forward.6} parent=0 // pred_region
    %v211 = vld [vmem:[#allocation2] sm:$0xff]
    %v212 = vld [vmem:[#allocation2 + $0x8] sm:$0xff]
    %v213 = vld [vmem:[%s2] sm:$0xff]
    %v214 = vld [vmem:[%s2 + $0x8] sm:$0xff]
    %216 = vset.pattern.permute.xlu0 0
    %217 = vperm.xlu0 %216, %v213
    %v218 = vpop.permute.xlu0 %217
    %221 = vset.pattern.permute.xlu0 0
    %222 = vperm.xlu0 %221, %v214
    %v223 = vpop.permute.xlu0 %222
    %v225 = vadd.f32 %v211, %v218
    %v226 = vadd.f32 %v212, %v223
    %v227 = vmax.f32 %v225, 0.0
    %v228 = vmax.f32 %v226, 0.0
    %v229 = vpack.c.bf16 %v228, %v227
    %v231 = vunpack.c.l.b16 %v229
    %v232 = vunpack.c.h.b16 %v229
    %v233 = vpack.c.b16 %v231, %v231
    %v234 = vpack.c.b16 %v232, %v232
    %237 = vst [vmem:[%s3] sm:$0xf] %v233
    %238 = vst [vmem:[%s3 + $0x4] sm:$0xf] %v234
  $region21: #{net_forward.6} parent=0 // pred_fallthru
    _
  // Predicated region
  $region22: #{net_forward.6} parent=0 // pred_check
    _
  $region23: #{net_forward.6} parent=0 // pred_check_branch
    %240 = sbr.rel (0) target = $region25
  $region24: #{net_forward.6} parent=0 // pred_region
    _
  $region25: #{net_forward.6} parent=0 // pred_fallthru
    _
  // Predicated region
  $region26: #{net_forward.6} parent=0 // pred_check
    _
  $region27: #{net_forward.6} parent=0 // pred_check_branch
    %242 = sbr.rel (0) target = $region29
  $region28: #{net_forward.6} parent=0 // pred_region
    _
  $region29: #{net_forward.6} parent=0 // pred_fallthru
    _

// kernel: net_forward.7
$region0: #{net_forward.7}
  #allocation0 [shape = 'u32[]', space=smem, size = 0x4, offset = 0x4, fixed_abs, tag = 'smem constant byte address 0x4 - core index']
  #allocation1 [shape = 'u32[144,128]{1,0:T(1,128)}', space=vmem, size = 0x12000, scoped, tag = 'internal scratch']
  #allocation2 [shape = 'f32[32,32]{1,0:T(8,128)}', space=vmem, size = 0x4000, scoped, tag = 'scratch operand']
  %s0 = inlined_call_operand.vmem [shape: bf16[32,256], index: 0, kind: input, shape index: {}]
  %s1 = inlined_call_operand.vmem [shape: bf16[256,32], index: 1, kind: input, shape index: {}]
  %s2 = inlined_call_operand.vmem [shape: f32[32,1], index: 2, kind: input, shape index: {}]
  %s3 = inlined_call_operand.vmem [shape: bf16[32,32], index: 3, kind: output, shape index: {}]
  %s4 = sld [smem:[#allocation0]]
  $region30: #{net_forward.7} parent=0
    _
  %s6 = ssub.s32 1, %s4
  %s7 = scalar_select 0, %s6, %s4
  // Predicated region
  $region2: #{net_forward.7} parent=0 // pred_check
    _
  $region3: #{net_forward.7} parent=0 // pred_check_branch
    %9 = sbr.rel (0) target = $region5
  $region4: #{net_forward.7} parent=0 // pred_region
    _
  $region5: #{net_forward.7} parent=0 // pred_fallthru
    _
  // Predicated region
  $region6: #{net_forward.7} parent=0 // pred_check
    _
  $region7: #{net_forward.7} parent=0 // pred_check_branch
    %11 = sbr.rel (0) target = $region9
  $region8: #{net_forward.7} parent=0 // pred_region
    _
  $region9: #{net_forward.7} parent=0 // pred_fallthru
    _
  // Predicated region
  $region10: #{net_forward.7} parent=0 // pred_check
    _
  $region11: #{net_forward.7} parent=0 // pred_check_branch
    %13 = sbr.rel (0) target = $region13
  $region12: #{net_forward.7} parent=0 // pred_region
    _
  $region13: #{net_forward.7} parent=0 // pred_fallthru
    _
  %p15 = scmp.eq.s32.totalorder 0, 0
  // Predicated region
  $region14: #{net_forward.7} parent=0 // pred_check
    %p16 = pneg %p15
  $region15: #{net_forward.7} parent=0 // pred_check_branch
    %18 = sbr.rel (%p16) target = $region17
  $region16: #{net_forward.7} parent=0 // pred_region
    %vm19 = vcmask 261120
    %20 = vst.msk [vmem:[#allocation2] sm:$0xff] %vm19, 0.0
    %21 = vst.msk [vmem:[#allocation2 + $0x8] sm:$0xff] %vm19, 0.0
    %22 = vst.msk [vmem:[#allocation2 + $0x10] sm:$0xff] %vm19, 0.0
    %23 = vst.msk [vmem:[#allocation2 + $0x18] sm:$0xff] %vm19, 0.0
  $region17: #{net_forward.7} parent=0 // pred_fallthru
    _
  %v24 = vld [vmem:[#allocation2] sm:$0xff]
  %v25 = vld [vmem:[#allocation2 + $0x8] sm:$0xff]
  %v26 = vld [vmem:[#allocation2 + $0x10] sm:$0xff]
  %v27 = vld [vmem:[#allocation2 + $0x18] sm:$0xff]
  %v28 = vld [vmem:[%s0] sm:$0xff]
  %v29 = vld [vmem:[%s0 + $0x8] sm:$0xff]
  %v30 = vld [vmem:[%s0 + $0x10] sm:$0xff]
  %v31 = vld [vmem:[%s0 + $0x18] sm:$0xff]
  %v32 = vld [vmem:[%s1] sm:$0xf]
  %v33 = vld [vmem:[%s1 + $0x4] sm:$0xf]
  %v34 = vld [vmem:[%s1 + $0x8] sm:$0xf]
  %v35 = vld [vmem:[%s1 + $0xc] sm:$0xf]
  %v36 = vld [vmem:[%s1 + $0x10] sm:$0xf]
  %v37 = vld [vmem:[%s1 + $0x14] sm:$0xf]
  %v38 = vld [vmem:[%s1 + $0x18] sm:$0xf]
  %v39 = vld [vmem:[%s1 + $0x1c] sm:$0xf]
  %v40 = vld [vmem:[%s1 + $0x20] sm:$0xf]
  %v41 = vld [vmem:[%s1 + $0x24] sm:$0xf]
  %v42 = vld [vmem:[%s1 + $0x28] sm:$0xf]
  %v43 = vld [vmem:[%s1 + $0x2c] sm:$0xf]
  %v44 = vld [vmem:[%s1 + $0x30] sm:$0xf]
  %v45 = vld [vmem:[%s1 + $0x34] sm:$0xf]
  %v46 = vld [vmem:[%s1 + $0x38] sm:$0xf]
  %v47 = vld [vmem:[%s1 + $0x3c] sm:$0xf]
  %v48 = vld [vmem:[%s1 + $0x40] sm:$0xf]
  %v49 = vld [vmem:[%s1 + $0x44] sm:$0xf]
  %v50 = vld [vmem:[%s1 + $0x48] sm:$0xf]
  %v51 = vld [vmem:[%s1 + $0x4c] sm:$0xf]
  %v52 = vld [vmem:[%s1 + $0x50] sm:$0xf]
  %v53 = vld [vmem:[%s1 + $0x54] sm:$0xf]
  %v54 = vld [vmem:[%s1 + $0x58] sm:$0xf]
  %v55 = vld [vmem:[%s1 + $0x5c] sm:$0xf]
  %v56 = vld [vmem:[%s1 + $0x60] sm:$0xf]
  %v57 = vld [vmem:[%s1 + $0x64] sm:$0xf]
  %v58 = vld [vmem:[%s1 + $0x68] sm:$0xf]
  %v59 = vld [vmem:[%s1 + $0x6c] sm:$0xf]
  %v60 = vld [vmem:[%s1 + $0x70] sm:$0xf]
  %v61 = vld [vmem:[%s1 + $0x74] sm:$0xf]
  %v62 = vld [vmem:[%s1 + $0x78] sm:$0xf]
  %v63 = vld [vmem:[%s1 + $0x7c] sm:$0xf]
  %v68 = vunpack.c.l.b16 %v28
  %v69 = vunpack.c.h.b16 %v28
  %v70 = vunpack.c.l.b16 %v29
  %v71 = vunpack.c.h.b16 %v29
  %v72 = vunpack.c.l.b16 %v30
  %v73 = vunpack.c.h.b16 %v30
  %v74 = vunpack.c.l.b16 %v31
  %v75 = vunpack.c.h.b16 %v31
  %v76 = vpack.c.b16 %v70, %v68
  %v77 = vpack.c.b16 %v71, %v69
  %v78 = vpack.c.b16 %v74, %v72
  %v79 = vpack.c.b16 %v75, %v73
  %v116 = vunpack.c.l.b16 %v32
  %v117 = vunpack.c.l.b16 %v33
  %v118 = vunpack.c.l.b16 %v34
  %v119 = vunpack.c.l.b16 %v35
  %v120 = vunpack.c.l.b16 %v36
  %v121 = vunpack.c.l.b16 %v37
  %v122 = vunpack.c.l.b16 %v38
  %v123 = vunpack.c.l.b16 %v39
  %v124 = vunpack.c.l.b16 %v40
  %v125 = vunpack.c.l.b16 %v41
  %v126 = vunpack.c.l.b16 %v42
  %v127 = vunpack.c.l.b16 %v43
  %v128 = vunpack.c.l.b16 %v44
  %v129 = vunpack.c.l.b16 %v45
  %v130 = vunpack.c.l.b16 %v46
  %v131 = vunpack.c.l.b16 %v47
  %v132 = vunpack.c.l.b16 %v48
  %v133 = vunpack.c.l.b16 %v49
  %v134 = vunpack.c.l.b16 %v50
  %v135 = vunpack.c.l.b16 %v51
  %v136 = vunpack.c.l.b16 %v52
  %v137 = vunpack.c.l.b16 %v53
  %v138 = vunpack.c.l.b16 %v54
  %v139 = vunpack.c.l.b16 %v55
  %v140 = vunpack.c.l.b16 %v56
  %v141 = vunpack.c.l.b16 %v57
  %v142 = vunpack.c.l.b16 %v58
  %v143 = vunpack.c.l.b16 %v59
  %v144 = vunpack.c.l.b16 %v60
  %v145 = vunpack.c.l.b16 %v61
  %v146 = vunpack.c.l.b16 %v62
  %v147 = vunpack.c.l.b16 %v63
  %v148 = vpack.c.b16 %v117, %v116
  %v149 = vpack.c.b16 %v119, %v118
  %v150 = vpack.c.b16 %v121, %v120
  %v151 = vpack.c.b16 %v123, %v122
  %v152 = vpack.c.b16 %v125, %v124
  %v153 = vpack.c.b16 %v127, %v126
  %v154 = vpack.c.b16 %v129, %v128
  %v155 = vpack.c.b16 %v131, %v130
  %v156 = vpack.c.b16 %v133, %v132
  %v157 = vpack.c.b16 %v135, %v134
  %v158 = vpack.c.b16 %v137, %v136
  %v159 = vpack.c.b16 %v139, %v138
  %v160 = vpack.c.b16 %v141, %v140
  %v161 = vpack.c.b16 %v143, %v142
  %v162 = vpack.c.b16 %v145, %v144
  %v163 = vpack.c.b16 %v147, %v146
  %180 = vmatprep.subr.bf16.mxu0 0
  %181 = vmatpush1.bf16.msra.mxu0 %v155
  %182 = vmatprep.subr.bf16.mxu0 0
  %183 = vmatpush1.bf16.msra.mxu0 %v154
  %184 = vmatprep.subr.bf16.mxu0 0
  %185 = vmatpush1.bf16.msra.mxu0 %v153
  %186 = vmatprep.subr.bf16.mxu0 0
  %187 = vmatpush1.bf16.msra.mxu0 %v152
  %188 = vmatprep.subr.bf16.mxu0 0
  %189 = vmatpush1.bf16.msra.mxu0 %v151
  %190 = vmatprep.subr.bf16.mxu0 0
  %191 = vmatpush1.bf16.msra.mxu0 %v150
  %192 = vmatprep.subr.bf16.mxu0 0
  %193 = vmatpush1.bf16.msra.mxu0 %v149
  %194 = vmatprep.subr.bf16.mxu0 0
  %195 = vmatpush1.bf16.msra.mxu0 %v148
  %196 = vmatprep.subr.bf16.mxu0 0
  %197 = vmatpush2.bf16.msra.mxu0 %v163
  %198 = vmatprep.subr.bf16.mxu0 0
  %199 = vmatpush2.bf16.msra.mxu0 %v162
  %200 = vmatprep.subr.bf16.mxu0 0
  %201 = vmatpush2.bf16.msra.mxu0 %v161
  %202 = vmatprep.subr.bf16.mxu0 0
  %203 = vmatpush2.bf16.msra.mxu0 %v160
  %204 = vmatprep.subr.bf16.mxu0 0
  %205 = vmatpush2.bf16.msra.mxu0 %v159
  %206 = vmatprep.subr.bf16.mxu0 0
  %207 = vmatpush2.bf16.msra.mxu0 %v158
  %208 = vmatprep.subr.bf16.mxu0 0
  %209 = vmatpush2.bf16.msra.mxu0 %v157
  %210 = vmatprep.subr.bf16.mxu0 0
  %211 = vmatpush2.bf16.msra.mxu0 %v156
  %212 = vmatprep.mubr.bf16.mxu0 %v77
  %213 = vmatmul.mubr.bf16.gmra.mxu0 %v76
  %v214 = vpop.f32.mrf.mxu0
  %v215 = vadd.f32 0.0, %v214
  %v216 = vpop.f32.mrf.mxu0
  %v217 = vpop.f32.mrf.mxu0
  %v218 = vadd.f32 0.0, %v217
  %v219 = vpop.f32.mrf.mxu0
  %220 = vmatprep.mubr.bf16.mxu0 %v79
  %221 = vmatmul.mubr.bf16.gmra.mxu0 %v78
  %v222 = vpop.f32.mrf.mxu0
  %v223 = vadd.f32 0.0, %v222
  %v224 = vpop.f32.mrf.mxu0
  %v225 = vpop.f32.mrf.mxu0
  %v226 = vadd.f32 0.0, %v225
  %v227 = vpop.f32.mrf.mxu0
  %228 = vdwg.mxu0
  %v229 = vadd.f32 %v24, %v215
  %v230 = vadd.f32 %v25, %v218
  %v231 = vadd.f32 %v26, %v223
  %v232 = vadd.f32 %v27, %v226
  %vm233 = vcmask 261120
  %234 = vst.msk [vmem:[#allocation2] sm:$0xff] %vm233, %v229
  %235 = vst.msk [vmem:[#allocation2 + $0x8] sm:$0xff] %vm233, %v230
  %236 = vst.msk [vmem:[#allocation2 + $0x10] sm:$0xff] %vm233, %v231
  %237 = vst.msk [vmem:[#allocation2 + $0x18] sm:$0xff] %vm233, %v232
  // Predicated region
  $region18: #{net_forward.7} parent=0 // pred_check
    %p238 = pneg %p15
  $region19: #{net_forward.7} parent=0 // pred_check_branch
    %240 = sbr.rel (%p238) target = $region21
  $region20: #{net_forward.7} parent=0 // pred_region
    %v241 = vld [vmem:[#allocation2] sm:$0xff]
    %v242 = vld [vmem:[#allocation2 + $0x8] sm:$0xff]
    %v243 = vld [vmem:[#allocation2 + $0x10] sm:$0xff]
    %v244 = vld [vmem:[#allocation2 + $0x18] sm:$0xff]
    %v245 = vld [vmem:[%s2] sm:$0xff]
    %v246 = vld [vmem:[%s2 + $0x8] sm:$0xff]
    %v247 = vld [vmem:[%s2 + $0x10] sm:$0xff]
    %v248 = vld [vmem:[%s2 + $0x18] sm:$0xff]
    %250 = vset.pattern.permute.xlu0 0
    %251 = vperm.xlu0 %250, %v245
    %v252 = vpop.permute.xlu0 %251
    %255 = vset.pattern.permute.xlu0 0
    %256 = vperm.xlu0 %255, %v246
    %v257 = vpop.permute.xlu0 %256
    %260 = vset.pattern.permute.xlu0 0
    %261 = vperm.xlu0 %260, %v247
    %v262 = vpop.permute.xlu0 %261
    %265 = vset.pattern.permute.xlu0 0
    %266 = vperm.xlu0 %265, %v248
    %v267 = vpop.permute.xlu0 %266
    %v269 = vadd.f32 %v241, %v252
    %v270 = vadd.f32 %v242, %v257
    %v271 = vadd.f32 %v243, %v262
    %v272 = vadd.f32 %v244, %v267
    %v273 = vmax.f32 %v269, 0.0
    %v274 = vmax.f32 %v270, 0.0
    %v275 = vmax.f32 %v271, 0.0
    %v276 = vmax.f32 %v272, 0.0
    %v277 = vpack.c.bf16 %v274, %v273
    %v278 = vpack.c.bf16 %v276, %v275
    %v281 = vunpack.c.l.b16 %v277
    %v282 = vunpack.c.h.b16 %v277
    %v283 = vunpack.c.l.b16 %v278
    %v284 = vunpack.c.h.b16 %v278
    %v285 = vpack.c.b16 %v281, %v281
    %v286 = vpack.c.b16 %v282, %v282
    %v287 = vpack.c.b16 %v283, %v283
    %v288 = vpack.c.b16 %v284, %v284
    %vm293 = vcmask 257024
    %294 = vst.msk [vmem:[%s3] sm:$0xf] %vm293, %v285
    %295 = vst.msk [vmem:[%s3 + $0x4] sm:$0xf] %vm293, %v286
    %296 = vst.msk [vmem:[%s3 + $0x8] sm:$0xf] %vm293, %v287
    %297 = vst.msk [vmem:[%s3 + $0xc] sm:$0xf] %vm293, %v288
  $region21: #{net_forward.7} parent=0 // pred_fallthru
    _
  // Predicated region
  $region22: #{net_forward.7} parent=0 // pred_check
    _
  $region23: #{net_forward.7} parent=0 // pred_check_branch
    %299 = sbr.rel (0) target = $region25
  $region24: #{net_forward.7} parent=0 // pred_region
    _
  $region25: #{net_forward.7} parent=0 // pred_fallthru
    _
  // Predicated region
  $region26: #{net_forward.7} parent=0 // pred_check
    _
  $region27: #{net_forward.7} parent=0 // pred_check_branch
    %301 = sbr.rel (0) target = $region29
  $region28: #{net_forward.7} parent=0 // pred_region
    _
  $region29: #{net_forward.7} parent=0 // pred_fallthru
    _

// kernel: net_forward.8
$region0: #{net_forward.8}
  #allocation0 [shape = 'u32[]', space=smem, size = 0x4, offset = 0x4, fixed_abs, tag = 'smem constant byte address 0x4 - core index']
  #allocation1 [shape = 'u32[144,128]{1,0:T(1,128)}', space=vmem, size = 0x12000, scoped, tag = 'internal scratch']
  #allocation2 [shape = 'f32[16,128]{1,0:T(8,128)}', space=vmem, size = 0x2000, scoped, tag = 'scratch operand']
  %s0 = inlined_call_operand.vmem [shape: bf16[16,128], index: 0, kind: input, shape index: {}]
  %s1 = inlined_call_operand.vmem [shape: bf16[128,128], index: 1, kind: input, shape index: {}]
  %s2 = inlined_call_operand.vmem [shape: f32[1,128], index: 2, kind: input, shape index: {}]
  %s3 = inlined_call_operand.vmem [shape: bf16[16,128], index: 3, kind: output, shape index: {}]
  %s4 = sld [smem:[#allocation0]]
  $region30: #{net_forward.8} parent=0
    _
  %s6 = ssub.s32 1, %s4
  %s7 = scalar_select 0, %s6, %s4
  // Predicated region
  $region2: #{net_forward.8} parent=0 // pred_check
    _
  $region3: #{net_forward.8} parent=0 // pred_check_branch
    %9 = sbr.rel (0) target = $region5
  $region4: #{net_forward.8} parent=0 // pred_region
    _
  $region5: #{net_forward.8} parent=0 // pred_fallthru
    _
  // Predicated region
  $region6: #{net_forward.8} parent=0 // pred_check
    _
  $region7: #{net_forward.8} parent=0 // pred_check_branch
    %11 = sbr.rel (0) target = $region9
  $region8: #{net_forward.8} parent=0 // pred_region
    _
  $region9: #{net_forward.8} parent=0 // pred_fallthru
    _
  // Predicated region
  $region10: #{net_forward.8} parent=0 // pred_check
    _
  $region11: #{net_forward.8} parent=0 // pred_check_branch
    %13 = sbr.rel (0) target = $region13
  $region12: #{net_forward.8} parent=0 // pred_region
    _
  $region13: #{net_forward.8} parent=0 // pred_fallthru
    _
  %p15 = scmp.eq.s32.totalorder 0, 0
  // Predicated region
  $region14: #{net_forward.8} parent=0 // pred_check
    %p16 = pneg %p15
  $region15: #{net_forward.8} parent=0 // pred_check_branch
    %18 = sbr.rel (%p16) target = $region17
  $region16: #{net_forward.8} parent=0 // pred_region
    %19 = vst [vmem:[#allocation2] sm:$0xff] 0.0
    %20 = vst [vmem:[#allocation2 + $0x8] sm:$0xff] 0.0
  $region17: #{net_forward.8} parent=0 // pred_fallthru
    _
  %v21 = vld [vmem:[#allocation2] sm:$0xff]
  %v22 = vld [vmem:[#allocation2 + $0x8] sm:$0xff]
  %v23 = vld [vmem:[%s0] sm:$0xf]
  %v24 = vld [vmem:[%s0 + $0x4] sm:$0xf]
  %v25 = vld [vmem:[%s1] sm:$0xf]
  %v26 = vld [vmem:[%s1 + $0x4] sm:$0xf]
  %v27 = vld [vmem:[%s1 + $0x8] sm:$0xf]
  %v28 = vld [vmem:[%s1 + $0xc] sm:$0xf]
  %v29 = vld [vmem:[%s1 + $0x10] sm:$0xf]
  %v30 = vld [vmem:[%s1 + $0x14] sm:$0xf]
  %v31 = vld [vmem:[%s1 + $0x18] sm:$0xf]
  %v32 = vld [vmem:[%s1 + $0x1c] sm:$0xf]
  %v33 = vld [vmem:[%s1 + $0x20] sm:$0xf]
  %v34 = vld [vmem:[%s1 + $0x24] sm:$0xf]
  %v35 = vld [vmem:[%s1 + $0x28] sm:$0xf]
  %v36 = vld [vmem:[%s1 + $0x2c] sm:$0xf]
  %v37 = vld [vmem:[%s1 + $0x30] sm:$0xf]
  %v38 = vld [vmem:[%s1 + $0x34] sm:$0xf]
  %v39 = vld [vmem:[%s1 + $0x38] sm:$0xf]
  %v40 = vld [vmem:[%s1 + $0x3c] sm:$0xf]
  %v43 = vunpack.c.l.b16 %v23
  %v44 = vunpack.c.l.b16 %v24
  %v45 = vpack.c.b16 %v44, %v43
  %v63 = vunpack.c.l.b16 %v25
  %v64 = vunpack.c.l.b16 %v26
  %v65 = vunpack.c.l.b16 %v27
  %v66 = vunpack.c.l.b16 %v28
  %v67 = vunpack.c.l.b16 %v29
  %v68 = vunpack.c.l.b16 %v30
  %v69 = vunpack.c.l.b16 %v31
  %v70 = vunpack.c.l.b16 %v32
  %v71 = vunpack.c.l.b16 %v33
  %v72 = vunpack.c.l.b16 %v34
  %v73 = vunpack.c.l.b16 %v35
  %v74 = vunpack.c.l.b16 %v36
  %v75 = vunpack.c.l.b16 %v37
  %v76 = vunpack.c.l.b16 %v38
  %v77 = vunpack.c.l.b16 %v39
  %v78 = vunpack.c.l.b16 %v40
  %v79 = vpack.c.b16 %v64, %v63
  %v80 = vpack.c.b16 %v66, %v65
  %v81 = vpack.c.b16 %v68, %v67
  %v82 = vpack.c.b16 %v70, %v69
  %v83 = vpack.c.b16 %v72, %v71
  %v84 = vpack.c.b16 %v74, %v73
  %v85 = vpack.c.b16 %v76, %v75
  %v86 = vpack.c.b16 %v78, %v77
  %95 = vmatprep.subr.bf16.mxu0 0
  %96 = vmatpush1.bf16.msra.mxu0 %v86
  %97 = vmatprep.subr.bf16.mxu0 0
  %98 = vmatpush1.bf16.msra.mxu0 %v85
  %99 = vmatprep.subr.bf16.mxu0 0
  %100 = vmatpush1.bf16.msra.mxu0 %v84
  %101 = vmatprep.subr.bf16.mxu0 0
  %102 = vmatpush1.bf16.msra.mxu0 %v83
  %103 = vmatprep.subr.bf16.mxu0 0
  %104 = vmatpush1.bf16.msra.mxu0 %v82
  %105 = vmatprep.subr.bf16.mxu0 0
  %106 = vmatpush1.bf16.msra.mxu0 %v81
  %107 = vmatprep.subr.bf16.mxu0 0
  %108 = vmatpush1.bf16.msra.mxu0 %v80
  %109 = vmatprep.subr.bf16.mxu0 0
  %110 = vmatpush1.bf16.msra.mxu0 %v79
  %111 = vmatprep.subr.bf16.mxu0 0
  %112 = vmatpush2.bf16.msra.mxu0 0
  %113 = vmatprep.subr.bf16.mxu0 0
  %114 = vmatpush2.bf16.msra.mxu0 0
  %115 = vmatprep.subr.bf16.mxu0 0
  %116 = vmatpush2.bf16.msra.mxu0 0
  %117 = vmatprep.subr.bf16.mxu0 0
  %118 = vmatpush2.bf16.msra.mxu0 0
  %119 = vmatprep.subr.bf16.mxu0 0
  %120 = vmatpush2.bf16.msra.mxu0 0
  %121 = vmatprep.subr.bf16.mxu0 0
  %122 = vmatpush2.bf16.msra.mxu0 0
  %123 = vmatprep.subr.bf16.mxu0 0
  %124 = vmatpush2.bf16.msra.mxu0 0
  %125 = vmatprep.subr.bf16.mxu0 0
  %126 = vmatpush2.bf16.msra.mxu0 0
  %127 = vmatprep.mubr.bf16.mxu0 0
  %128 = vmatmul.mubr.bf16.gmra.mxu0 %v45
  %v129 = vpop.f32.mrf.mxu0
  %v130 = vadd.f32 0.0, %v129
  %v131 = vpop.f32.mrf.mxu0
  %v132 = vpop.f32.mrf.mxu0
  %v133 = vadd.f32 0.0, %v132
  %v134 = vpop.f32.mrf.mxu0
  %135 = vdwg.mxu0
  %v136 = vadd.f32 %v21, %v130
  %v137 = vadd.f32 %v22, %v133
  %138 = vst [vmem:[#allocation2] sm:$0xff] %v136
  %139 = vst [vmem:[#allocation2 + $0x8] sm:$0xff] %v137
  // Predicated region
  $region18: #{net_forward.8} parent=0 // pred_check
    %p140 = pneg %p15
  $region19: #{net_forward.8} parent=0 // pred_check_branch
    %142 = sbr.rel (%p140) target = $region21
  $region20: #{net_forward.8} parent=0 // pred_region
    %v143 = vld [vmem:[#allocation2] sm:$0xff]
    %v144 = vld [vmem:[#allocation2 + $0x8] sm:$0xff]
    %v145 = vld [vmem:[%s2] sm:$0x1]
    %v147 = vlaneseq
    %v148 = vshrl.u32 %v147, 7
    %v149 = vsub.s32 0, %v148
    %v150 = vrot.slane %v145, %v149
    %v152 = vadd.f32 %v143, %v150
    %v153 = vadd.f32 %v144, %v150
    %v154 = vpack.c.bf16 %v153, %v152
    %v156 = vunpack.c.l.b16 %v154
    %v157 = vunpack.c.h.b16 %v154
    %v158 = vpack.c.b16 %v156, %v156
    %v159 = vpack.c.b16 %v157, %v157
    %162 = vst [vmem:[%s3] sm:$0xf] %v158
    %163 = vst [vmem:[%s3 + $0x4] sm:$0xf] %v159
  $region21: #{net_forward.8} parent=0 // pred_fallthru
    _
  // Predicated region
  $region22: #{net_forward.8} parent=0 // pred_check
    _
  $region23: #{net_forward.8} parent=0 // pred_check_branch
    %165 = sbr.rel (0) target = $region25
  $region24: #{net_forward.8} parent=0 // pred_region
    _
  $region25: #{net_forward.8} parent=0 // pred_fallthru
    _
  // Predicated region
  $region26: #{net_forward.8} parent=0 // pred_check
    _
  $region27: #{net_forward.8} parent=0 // pred_check_branch
    %167 = sbr.rel (0) target = $region29
  $region28: #{net_forward.8} parent=0 // pred_region
    _
  $region29: #{net_forward.8} parent=0 // pred_fallthru
    _

// kernel: net_forward.9
$region0: #{net_forward.9}
  #allocation0 [shape = 'u32[]', space=smem, size = 0x4, offset = 0x4, fixed_abs, tag = 'smem constant byte address 0x4 - core index']
  #allocation1 [shape = 'u32[144,128]{1,0:T(1,128)}', space=vmem, size = 0x12000, scoped, tag = 'internal scratch']
  #allocation2 [shape = 'f32[16,512]{1,0:T(8,128)}', space=vmem, size = 0x8000, scoped, tag = 'scratch operand']
  %s0 = inlined_call_operand.vmem [shape: bf16[16,128], index: 0, kind: input, shape index: {}]
  %s1 = inlined_call_operand.vmem [shape: bf16[128,1024], index: 1, kind: input, shape index: {}]
  %s2 = inlined_call_operand.vmem [shape: f32[1,1024], index: 2, kind: input, shape index: {}]
  %s3 = inlined_call_operand.vmem [shape: bf16[16,1024], index: 3, kind: output, shape index: {}]
  %s4 = sld [smem:[#allocation0]]
  $region95: #{net_forward.9} parent=0
    _
  %s6 = ssub.s32 1, %s4
  %s7 = scalar_select 0, %s6, %s4
  $region1: #{net_forward.9} parent=0
    #allocation3 [shape = 'u8[262144]{0}', space=vmem, size = 0x40000, scoped, tag = 'input window, operand 1']
    #allocation4 [shape = 'u8[32768]{0}', space=vmem, size = 0x8000, scoped, tag = 'output window, operand 0']
    loop: start=0, step=1, limit=4
    $region2: #{net_forward.9} parent=1 // loop_pre_header
      _
    $region3: #{net_forward.9} parent=1 // loop_header
      %s9 = sphi 0, %s13
      %p10 = scmp.ge.s32.totalorder %s9, 4
      %s16 = sphi 0, %s28
      %s17 = sphi 0, %s24
      %s18 = sphi 0, %s16
      %s19 = sphi 0, %s17
      %s20 = sphi 0, %s18
      %s21 = sphi 0, %s19
      %s31 = sphi 0, %s33
      %s34 = sphi 0, %s31
      %s35 = sphi 0, %s34
      %s51 = sphi 0, %s35
      %s59 = sphi 0, %s61
      %s62 = sphi 0, %s59
      %s63 = sphi 0, %s62
      %s79 = sphi 0, %s63
      %s85 = sphi 0, %s87
      %s88 = sphi 0, %s85
      %s89 = sphi 0, %s88
      %s105 = sphi 0, %s89
      %s111 = sphi 0, %s113
      %s114 = sphi 0, %s111
      %s115 = sphi 0, %s114
      %s131 = sphi 0, %s115
    $region4: #{net_forward.9} parent=1 // loop_header_branch
      %12 = sbr.rel (%p10) target = $region8
    $region5: #{net_forward.9} parent=1 // loop_body
      %s14 = ssub.s32 %s9, 1
      %s15 = ssub.s32 %s9, 2
      %s22 = sadd.s32 1, %s17
      %p23 = scmp.ge.s32.totalorder %s22, 1
      %s24 = scalar_select %p23, 0, %s22
      %s25 = sadd.s32 1, %s16
      %s26 = scalar_select %p23, %s25, %s16
      %p27 = scmp.ge.s32.totalorder %s26, 2
      %s28 = scalar_select %p27, 0, %s26
      %s29 = ssub.s32 %s17, %s24
      %p30 = scmp.eq.s32.totalorder %s29, 0
      %s32 = sadd.s32 %s31, 1
      %s33 = scalar_select %p30, %s31, %s32
      %p36 = pneg %p30
      %p37 = scmp.eq.s32.totalorder %s9, 1
      %p38 = por %p36, %p37
      %p39 = scmp.ne.s32.totalorder %s31, %s34
      %p40 = scmp.eq.s32.totalorder %s9, 0
      %p41 = por %p39, %p40
      %p42 = scmp.ne.s32.totalorder %s31, %s34
      %p43 = scmp.eq.s32.totalorder %s14, 1
      %p44 = por %p42, %p43
      %p45 = scmp.ne.s32.totalorder %s34, %s35
      %p46 = scmp.eq.s32.totalorder %s14, 0
      %p47 = por %p45, %p46
      %p48 = scmp.ne.s32.totalorder %s34, %s35
      %p49 = scmp.eq.s32.totalorder %s15, 1
      %p50 = por %p48, %p49
      %p52 = scmp.ne.s32.totalorder %s35, %s51
      %p53 = scmp.eq.s32.totalorder %s15, 0
      %p54 = por %p52, %p53
      %s55 = ssub.s32 %s17, %s24
      %s56 = ssub.s32 %s16, %s28
      %s57 = sor.u32 %s55, %s56
      %p58 = scmp.eq.s32.totalorder %s57, 0
      %s60 = sadd.s32 %s59, 1
      %s61 = scalar_select %p58, %s59, %s60
      %p64 = pneg %p58
      %p65 = scmp.eq.s32.totalorder %s9, 1
      %p66 = por %p64, %p65
      %p67 = scmp.ne.s32.totalorder %s59, %s62
      %p68 = scmp.eq.s32.totalorder %s9, 0
      %p69 = por %p67, %p68
      %p70 = scmp.ne.s32.totalorder %s59, %s62
      %p71 = scmp.eq.s32.totalorder %s14, 1
      %p72 = por %p70, %p71
      %p73 = scmp.ne.s32.totalorder %s62, %s63
      %p74 = scmp.eq.s32.totalorder %s14, 0
      %p75 = por %p73, %p74
      %p76 = scmp.ne.s32.totalorder %s62, %s63
      %p77 = scmp.eq.s32.totalorder %s15, 1
      %p78 = por %p76, %p77
      %p80 = scmp.ne.s32.totalorder %s63, %s79
      %p81 = scmp.eq.s32.totalorder %s15, 0
      %p82 = por %p80, %p81
      %s83 = ssub.s32 %s16, %s28
      %p84 = scmp.eq.s32.totalorder %s83, 0
      %s86 = sadd.s32 %s85, 1
      %s87 = scalar_select %p84, %s85, %s86
      %p90 = pneg %p84
      %p91 = scmp.eq.s32.totalorder %s9, 1
      %p92 = por %p90, %p91
      %p93 = scmp.ne.s32.totalorder %s85, %s88
      %p94 = scmp.eq.s32.totalorder %s9, 0
      %p95 = por %p93, %p94
      %p96 = scmp.ne.s32.totalorder %s85, %s88
      %p97 = scmp.eq.s32.totalorder %s14, 1
      %p98 = por %p96, %p97
      %p99 = scmp.ne.s32.totalorder %s88, %s89
      %p100 = scmp.eq.s32.totalorder %s14, 0
      %p101 = por %p99, %p100
      %p102 = scmp.ne.s32.totalorder %s88, %s89
      %p103 = scmp.eq.s32.totalorder %s15, 1
      %p104 = por %p102, %p103
      %p106 = scmp.ne.s32.totalorder %s89, %s105
      %p107 = scmp.eq.s32.totalorder %s15, 0
      %p108 = por %p106, %p107
      %s109 = ssub.s32 %s16, %s28
      %p110 = scmp.eq.s32.totalorder %s109, 0
      %s112 = sadd.s32 %s111, 1
      %s113 = scalar_select %p110, %s111, %s112
      %p116 = pneg %p110
      %p117 = scmp.eq.s32.totalorder %s9, 1
      %p118 = por %p116, %p117
      %p119 = scmp.ne.s32.totalorder %s111, %s114
      %p120 = scmp.eq.s32.totalorder %s9, 0
      %p121 = por %p119, %p120
      %p122 = scmp.ne.s32.totalorder %s111, %s114
      %p123 = scmp.eq.s32.totalorder %s14, 1
      %p124 = por %p122, %p123
      %p125 = scmp.ne.s32.totalorder %s114, %s115
      %p126 = scmp.eq.s32.totalorder %s14, 0
      %p127 = por %p125, %p126
      %p128 = scmp.ne.s32.totalorder %s114, %s115
      %p129 = scmp.eq.s32.totalorder %s15, 1
      %p130 = por %p128, %p129
      %p132 = scmp.ne.s32.totalorder %s115, %s131
      %p133 = scmp.eq.s32.totalorder %s15, 0
      %p134 = por %p132, %p133
      %p135 = scmp.le.s32.totalorder 1, %s9
      %p136 = scmp.lt.s32.totalorder %s9, 3
      %p137 = pnand %p135, %p136
      %p138 = pneg %p137
      // Predicated region
      $region9: #{net_forward.9} parent=5 // pred_check
        _
      $region10: #{net_forward.9} parent=5 // pred_check_branch
        %140 = sbr.rel (%p137) target = $region12
      $region11: #{net_forward.9} parent=5 // pred_region
        %s141 = ssub.s32 %s9, 1
        // Predicated region
        $region13: #{net_forward.9} parent=11 // pred_check
          %p142 = pneg %p47
        $region14: #{net_forward.9} parent=11 // pred_check_branch
          %144 = sbr.rel (%p142) target = $region16
        $region15: #{net_forward.9} parent=11 // pred_region
          %p145 = scmp.lt.s32.totalorder %s19, 0
          %s146 = scalar_select %p145, %s19, 0
          %s147 = smul.addr %s146, 4
          %s148 = scalar_lea.vmem %s0, %s147
        $region16: #{net_forward.9} parent=11 // pred_fallthru
          _
      $region12: #{net_forward.9} parent=5 // pred_fallthru
        _
      %p149 = scmp.lt.s32.totalorder %s9, 2
      // Predicated region
      $region17: #{net_forward.9} parent=5 // pred_check
        %p150 = pneg %p149
      $region18: #{net_forward.9} parent=5 // pred_check_branch
        %152 = sbr.rel (%p150) target = $region20
      $region19: #{net_forward.9} parent=5 // pred_region
        // Predicated region
        $region21: #{net_forward.9} parent=19 // pred_check
          %p153 = pneg %p69
        $region22: #{net_forward.9} parent=19 // pred_check_branch
          %155 = sbr.rel (%p153) target = $region24
        $region23: #{net_forward.9} parent=19 // pred_region
          %s156 = sand.u32 %s59, 1
          %s157 = sand.u32 %s59, 1
          %s158 = smul.addr %s157, 256
          %s159 = scalar_lea.vmem [#allocation3], %s158
          %s160 = smul.u32 16, %s17
          %s161 = smul.u32 4, %s16
          %s162 = smul.addr %s160, 8
          %s163 = sadd.s32 %s161, %s162
          %s164 = smul.addr %s163, 4
          %s165 = scalar_lea.vmem %s1, %s164
          // Predicated region
          $region25: #{net_forward.9} parent=23 // pred_check
            _
          $region26: #{net_forward.9} parent=23 // pred_check_branch
            %167 = sbr.rel (0) target = $region28
          $region27: #{net_forward.9} parent=23 // pred_region
            // Predicated region
            $region29: #{net_forward.9} parent=27 // pred_check
              _
            $region30: #{net_forward.9} parent=27 // pred_check_branch
              %169 = sbr.rel (0) target = $region32
            $region31: #{net_forward.9} parent=27 // pred_region
              loop: start=0, step=1, limit=1
              $region33: #{net_forward.9} parent=31 // loop_pre_header
                _
              $region34: #{net_forward.9} parent=31 // loop_header
                %s171 = sphi 0, %s175
                %p172 = scmp.ge.s32.totalorder %s171, 1
                %s176 = sphi %s165, %s165
                %s177 = sphi %s159, %s159
              $region35: #{net_forward.9} parent=31 // loop_header_branch
                %174 = sbr.rel (%p172) target = $region39
              $region36: #{net_forward.9} parent=31 // loop_body
                %v178 = vld [vmem:[%s176] sm:$0xff]
                %179 = vst [vmem:[%s177] sm:$0xff] %v178
                %v180 = vld [vmem:[%s176 + $0x8] sm:$0xff]
                %181 = vst [vmem:[%s177 + $0x8] sm:$0xff] %v180
                %v182 = vld [vmem:[%s176 + $0x20] sm:$0xff]
                %183 = vst [vmem:[%s177 + $0x10] sm:$0xff] %v182
                %v184 = vld [vmem:[%s176 + $0x28] sm:$0xff]
                %185 = vst [vmem:[%s177 + $0x18] sm:$0xff] %v184
                %v186 = vld [vmem:[%s176 + $0x40] sm:$0xff]
                %187 = vst [vmem:[%s177 + $0x20] sm:$0xff] %v186
                %v188 = vld [vmem:[%s176 + $0x48] sm:$0xff]
                %189 = vst [vmem:[%s177 + $0x28] sm:$0xff] %v188
                %v190 = vld [vmem:[%s176 + $0x60] sm:$0xff]
                %191 = vst [vmem:[%s177 + $0x30] sm:$0xff] %v190
                %v192 = vld [vmem:[%s176 + $0x68] sm:$0xff]
                %193 = vst [vmem:[%s177 + $0x38] sm:$0xff] %v192
                %v194 = vld [vmem:[%s176 + $0x80] sm:$0xff]
                %195 = vst [vmem:[%s177 + $0x40] sm:$0xff] %v194
                %v196 = vld [vmem:[%s176 + $0x88] sm:$0xff]
                %197 = vst [vmem:[%s177 + $0x48] sm:$0xff] %v196
                %v198 = vld [vmem:[%s176 + $0xa0] sm:$0xff]
                %199 = vst [vmem:[%s177 + $0x50] sm:$0xff] %v198
                %v200 = vld [vmem:[%s176 + $0xa8] sm:$0xff]
                %201 = vst [vmem:[%s177 + $0x58] sm:$0xff] %v200
                %v202 = vld [vmem:[%s176 + $0xc0] sm:$0xff]
                %203 = vst [vmem:[%s177 + $0x60] sm:$0xff] %v202
                %v204 = vld [vmem:[%s176 + $0xc8] sm:$0xff]
                %205 = vst [vmem:[%s177 + $0x68] sm:$0xff] %v204
                %v206 = vld [vmem:[%s176 + $0xe0] sm:$0xff]
                %207 = vst [vmem:[%s177 + $0x70] sm:$0xff] %v206
                %v208 = vld [vmem:[%s176 + $0xe8] sm:$0xff]
                %209 = vst [vmem:[%s177 + $0x78] sm:$0xff] %v208
                %v210 = vld [vmem:[%s176 + $0x100] sm:$0xff]
                %211 = vst [vmem:[%s177 + $0x80] sm:$0xff] %v210
                %v212 = vld [vmem:[%s176 + $0x108] sm:$0xff]
                %213 = vst [vmem:[%s177 + $0x88] sm:$0xff] %v212
                %v214 = vld [vmem:[%s176 + $0x120] sm:$0xff]
                %215 = vst [vmem:[%s177 + $0x90] sm:$0xff] %v214
                %v216 = vld [vmem:[%s176 + $0x128] sm:$0xff]
                %217 = vst [vmem:[%s177 + $0x98] sm:$0xff] %v216
                %v218 = vld [vmem:[%s176 + $0x140] sm:$0xff]
                %219 = vst [vmem:[%s177 + $0xa0] sm:$0xff] %v218
                %v220 = vld [vmem:[%s176 + $0x148] sm:$0xff]
                %221 = vst [vmem:[%s177 + $0xa8] sm:$0xff] %v220
                %v222 = vld [vmem:[%s176 + $0x160] sm:$0xff]
                %223 = vst [vmem:[%s177 + $0xb0] sm:$0xff] %v222
                %v224 = vld [vmem:[%s176 + $0x168] sm:$0xff]
                %225 = vst [vmem:[%s177 + $0xb8] sm:$0xff] %v224
                %v226 = vld [vmem:[%s176 + $0x180] sm:$0xff]
                %227 = vst [vmem:[%s177 + $0xc0] sm:$0xff] %v226
                %v228 = vld [vmem:[%s176 + $0x188] sm:$0xff]
                %229 = vst [vmem:[%s177 + $0xc8] sm:$0xff] %v228
                %v230 = vld [vmem:[%s176 + $0x1a0] sm:$0xff]
                %231 = vst [vmem:[%s177 + $0xd0] sm:$0xff] %v230
                %v232 = vld [vmem:[%s176 + $0x1a8] sm:$0xff]
                %233 = vst [vmem:[%s177 + $0xd8] sm:$0xff] %v232
                %v234 = vld [vmem:[%s176 + $0x1c0] sm:$0xff]
                %235 = vst [vmem:[%s177 + $0xe0] sm:$0xff] %v234
                %v236 = vld [vmem:[%s176 + $0x1c8] sm:$0xff]
                %237 = vst [vmem:[%s177 + $0xe8] sm:$0xff] %v236
                %v238 = vld [vmem:[%s176 + $0x1e0] sm:$0xff]
                %239 = vst [vmem:[%s177 + $0xf0] sm:$0xff] %v238
                %v240 = vld [vmem:[%s176 + $0x1e8] sm:$0xff]
                %241 = vst [vmem:[%s177 + $0xf8] sm:$0xff] %v240
              $region37: #{net_forward.9} parent=31 // loop_footer
                %s175 = sadd.s32 1, %s171
              $region38: #{net_forward.9} parent=31 // loop_footer_branch
                %170 = sbr.rel target = $region34
              $region39: #{net_forward.9} parent=31 // loop_exit
                _
            $region32: #{net_forward.9} parent=27 // pred_fallthru
              _
            // Predicated region
            $region40: #{net_forward.9} parent=27 // pred_check
              _
            $region41: #{net_forward.9} parent=27 // pred_check_branch
              %243 = sbr.rel target = $region43
            $region42: #{net_forward.9} parent=27 // pred_region
              _
            $region43: #{net_forward.9} parent=27 // pred_fallthru
              _
          $region28: #{net_forward.9} parent=23 // pred_fallthru
            _
          %244 = vnop
        $region24: #{net_forward.9} parent=19 // pred_fallthru
          _
        // Predicated region
        $region44: #{net_forward.9} parent=19 // pred_check
          %p245 = pneg %p95
        $region45: #{net_forward.9} parent=19 // pred_check_branch
          %247 = sbr.rel (%p245) target = $region47
        $region46: #{net_forward.9} parent=19 // pred_region
          %s248 = smul.u32 4, %s16
          %p249 = scmp.lt.s32.totalorder %s248, 7
          %s250 = scalar_select %p249, %s248, 7
          %s251 = scalar_lea.vmem %s2, %s250
          %s252 = smul.u32 4, %s16
        $region47: #{net_forward.9} parent=19 // pred_fallthru
          _
      $region20: #{net_forward.9} parent=5 // pred_fallthru
        _
      %p253 = scmp.le.s32.totalorder 1, %s9
      %p254 = scmp.lt.s32.totalorder %s9, 3
      %p255 = pnand %p253, %p254
      %p256 = pneg %p255
      // Predicated region
      $region48: #{net_forward.9} parent=5 // pred_check
        _
      $region49: #{net_forward.9} parent=5 // pred_check_branch
        %258 = sbr.rel (%p255) target = $region51
      $region50: #{net_forward.9} parent=5 // pred_region
        %s259 = ssub.s32 %s9, 1
        %s260 = sand.u32 %s62, 1
        %s261 = sand.u32 %s62, 1
        %s262 = smul.addr %s261, 256
        %s263 = scalar_lea.vmem [#allocation3], %s262
        // Predicated region
        $region52: #{net_forward.9} parent=50 // pred_check
          %p264 = pneg %p75
        $region53: #{net_forward.9} parent=50 // pred_check_branch
          %266 = sbr.rel (%p264) target = $region55
        $region54: #{net_forward.9} parent=50 // pred_region
          _
        $region55: #{net_forward.9} parent=50 // pred_fallthru
          _
        %p267 = scmp.lt.s32.totalorder %s19, 0
        %s268 = scalar_select %p267, %s19, 0
        %s269 = smul.addr %s268, 4
        %s270 = scalar_lea.vmem %s0, %s269
        %p271 = pneg %p47
        %p272 = pneg %p44
        %s273 = sand.u32 %s62, 1
        %s274 = sand.u32 %s62, 1
        %s275 = smul.addr %s274, 256
        %s276 = scalar_lea.vmem [#allocation3], %s275
        %p277 = pneg %p75
        %p278 = pneg %p72
        %s279 = smul.u32 4, %s18
        %p280 = scmp.lt.s32.totalorder %s279, 7
        %s281 = scalar_select %p280, %s279, 7
        %s282 = scalar_lea.vmem %s2, %s281
        %p283 = pneg %p101
        %p284 = pneg %p98
        %p285 = pneg %p127
        %p286 = pneg %p124
        %s287 = sand.u32 %s114, 1
        %s288 = sand.u32 %s114, 1
        %s289 = smul.addr %s288, 32
        %s290 = scalar_lea.vmem [#allocation4], %s289
        %p291 = scmp.lt.s32.totalorder %s19, 0
        %s292 = scalar_select %p291, %s19, 0
        %s293 = smul.addr %s292, 4
        %s294 = scalar_lea.vmem %s0, %s293
        %s295 = smul.u32 16, %s19
        %s296 = smul.u32 4, %s18
        %s297 = smul.u32 4, %s18
        %p298 = scmp.lt.s32.totalorder %s297, 7
        %s299 = scalar_select %p298, %s297, 7
        %s300 = scalar_lea.vmem %s2, %s299
        %s301 = smul.u32 4, %s18
        %s302 = smul.u32 4, %s18
        %p304 = scmp.eq.s32.totalorder %s19, 0
        // Predicated region
        $region56: #{net_forward.9} parent=50 // pred_check
          %p305 = pneg %p304
        $region57: #{net_forward.9} parent=50 // pred_check_branch
          %307 = sbr.rel (%p305) target = $region59
        $region58: #{net_forward.9} parent=50 // pred_region
          %308 = vst [vmem:[#allocation2] sm:$0xff] 0.0
          %309 = vst [vmem:[#allocation2 + $0x8] sm:$0xff] 0.0
          %310 = vst [vmem:[#allocation2 + $0x10] sm:$0xff] 0.0
          %311 = vst [vmem:[#allocation2 + $0x18] sm:$0xff] 0.0
          %312 = vst [vmem:[#allocation2 + $0x20] sm:$0xff] 0.0
          %313 = vst [vmem:[#allocation2 + $0x28] sm:$0xff] 0.0
          %314 = vst [vmem:[#allocation2 + $0x30] sm:$0xff] 0.0
          %315 = vst [vmem:[#allocation2 + $0x38] sm:$0xff] 0.0
        $region59: #{net_forward.9} parent=50 // pred_fallthru
          _
        %v316 = vld [vmem:[#allocation2] sm:$0xff]
        %v317 = vld [vmem:[#allocation2 + $0x8] sm:$0xff]
        %v318 = vld [vmem:[#allocation2 + $0x10] sm:$0xff]
        %v319 = vld [vmem:[#allocation2 + $0x18] sm:$0xff]
        %v320 = vld [vmem:[#allocation2 + $0x20] sm:$0xff]
        %v321 = vld [vmem:[#allocation2 + $0x28] sm:$0xff]
        %v322 = vld [vmem:[#allocation2 + $0x30] sm:$0xff]
        %v323 = vld [vmem:[#allocation2 + $0x38] sm:$0xff]
        %v324 = vld [vmem:[%s294] sm:$0xf]
        %v325 = vld [vmem:[%s294 + $0x4] sm:$0xf]
        %v326 = vld [vmem:[%s263] sm:$0xff]
        %v327 = vld [vmem:[%s263 + $0x8] sm:$0xff]
        %v328 = vld [vmem:[%s263 + $0x10] sm:$0xff]
        %v329 = vld [vmem:[%s263 + $0x18] sm:$0xff]
        %v330 = vld [vmem:[%s263 + $0x20] sm:$0xff]
        %v331 = vld [vmem:[%s263 + $0x28] sm:$0xff]
        %v332 = vld [vmem:[%s263 + $0x30] sm:$0xff]
        %v333 = vld [vmem:[%s263 + $0x38] sm:$0xff]
        %v334 = vld [vmem:[%s263 + $0x40] sm:$0xff]
        %v335 = vld [vmem:[%s263 + $0x48] sm:$0xff]
        %v336 = vld [vmem:[%s263 + $0x50] sm:$0xff]
        %v337 = vld [vmem:[%s263 + $0x58] sm:$0xff]
        %v338 = vld [vmem:[%s263 + $0x60] sm:$0xff]
        %v339 = vld [vmem:[%s263 + $0x68] sm:$0xff]
        %v340 = vld [vmem:[%s263 + $0x70] sm:$0xff]
        %v341 = vld [vmem:[%s263 + $0x78] sm:$0xff]
        %v342 = vld [vmem:[%s263 + $0x80] sm:$0xff]
        %v343 = vld [vmem:[%s263 + $0x88] sm:$0xff]
        %v344 = vld [vmem:[%s263 + $0x90] sm:$0xff]
        %v345 = vld [vmem:[%s263 + $0x98] sm:$0xff]
        %v346 = vld [vmem:[%s263 + $0xa0] sm:$0xff]
        %v347 = vld [vmem:[%s263 + $0xa8] sm:$0xff]
        %v348 = vld [vmem:[%s263 + $0xb0] sm:$0xff]
        %v349 = vld [vmem:[%s263 + $0xb8] sm:$0xff]
        %v350 = vld [vmem:[%s263 + $0xc0] sm:$0xff]
        %v351 = vld [vmem:[%s263 + $0xc8] sm:$0xff]
        %v352 = vld [vmem:[%s263 + $0xd0] sm:$0xff]
        %v353 = vld [vmem:[%s263 + $0xd8] sm:$0xff]
        %v354 = vld [vmem:[%s263 + $0xe0] sm:$0xff]
        %v355 = vld [vmem:[%s263 + $0xe8] sm:$0xff]
        %v356 = vld [vmem:[%s263 + $0xf0] sm:$0xff]
        %v357 = vld [vmem:[%s263 + $0xf8] sm:$0xff]
        %v360 = vunpack.c.l.b16 %v324
        %v361 = vunpack.c.l.b16 %v325
        %v362 = vpack.c.b16 %v361, %v360
        %v396 = vunpack.c.l.b16 %v326
        %v397 = vunpack.c.h.b16 %v326
        %v398 = vunpack.c.l.b16 %v327
        %v399 = vunpack.c.h.b16 %v327
        %v400 = vunpack.c.l.b16 %v328
        %v401 = vunpack.c.h.b16 %v328
        %v402 = vunpack.c.l.b16 %v329
        %v403 = vunpack.c.h.b16 %v329
        %v404 = vunpack.c.l.b16 %v330
        %v405 = vunpack.c.h.b16 %v330
        %v406 = vunpack.c.l.b16 %v331
        %v407 = vunpack.c.h.b16 %v331
        %v408 = vunpack.c.l.b16 %v332
        %v409 = vunpack.c.h.b16 %v332
        %v410 = vunpack.c.l.b16 %v333
        %v411 = vunpack.c.h.b16 %v333
        %v412 = vunpack.c.l.b16 %v334
        %v413 = vunpack.c.h.b16 %v334
        %v414 = vunpack.c.l.b16 %v335
        %v415 = vunpack.c.h.b16 %v335
        %v416 = vunpack.c.l.b16 %v336
        %v417 = vunpack.c.h.b16 %v336
        %v418 = vunpack.c.l.b16 %v337
        %v419 = vunpack.c.h.b16 %v337
        %v420 = vunpack.c.l.b16 %v338
        %v421 = vunpack.c.h.b16 %v338
        %v422 = vunpack.c.l.b16 %v339
        %v423 = vunpack.c.h.b16 %v339
        %v424 = vunpack.c.l.b16 %v340
        %v425 = vunpack.c.h.b16 %v340
        %v426 = vunpack.c.l.b16 %v341
        %v427 = vunpack.c.h.b16 %v341
        %v428 = vunpack.c.l.b16 %v342
        %v429 = vunpack.c.h.b16 %v342
        %v430 = vunpack.c.l.b16 %v343
        %v431 = vunpack.c.h.b16 %v343
        %v432 = vunpack.c.l.b16 %v344
        %v433 = vunpack.c.h.b16 %v344
        %v434 = vunpack.c.l.b16 %v345
        %v435 = vunpack.c.h.b16 %v345
        %v436 = vunpack.c.l.b16 %v346
        %v437 = vunpack.c.h.b16 %v346
        %v438 = vunpack.c.l.b16 %v347
        %v439 = vunpack.c.h.b16 %v347
        %v440 = vunpack.c.l.b16 %v348
        %v441 = vunpack.c.h.b16 %v348
        %v442 = vunpack.c.l.b16 %v349
        %v443 = vunpack.c.h.b16 %v349
        %v444 = vunpack.c.l.b16 %v350
        %v445 = vunpack.c.h.b16 %v350
        %v446 = vunpack.c.l.b16 %v351
        %v447 = vunpack.c.h.b16 %v351
        %v448 = vunpack.c.l.b16 %v352
        %v449 = vunpack.c.h.b16 %v352
        %v450 = vunpack.c.l.b16 %v353
        %v451 = vunpack.c.h.b16 %v353
        %v452 = vunpack.c.l.b16 %v354
        %v453 = vunpack.c.h.b16 %v354
        %v454 = vunpack.c.l.b16 %v355
        %v455 = vunpack.c.h.b16 %v355
        %v456 = vunpack.c.l.b16 %v356
        %v457 = vunpack.c.h.b16 %v356
        %v458 = vunpack.c.l.b16 %v357
        %v459 = vunpack.c.h.b16 %v357
        %v460 = vpack.c.b16 %v400, %v396
        %v461 = vpack.c.b16 %v401, %v397
        %v462 = vpack.c.b16 %v402, %v398
        %v463 = vpack.c.b16 %v403, %v399
        %v464 = vpack.c.b16 %v408, %v404
        %v465 = vpack.c.b16 %v409, %v405
        %v466 = vpack.c.b16 %v410, %v406
        %v467 = vpack.c.b16 %v411, %v407
        %v468 = vpack.c.b16 %v416, %v412
        %v469 = vpack.c.b16 %v417, %v413
        %v470 = vpack.c.b16 %v418, %v414
        %v471 = vpack.c.b16 %v419, %v415
        %v472 = vpack.c.b16 %v424, %v420
        %v473 = vpack.c.b16 %v425, %v421
        %v474 = vpack.c.b16 %v426, %v422
        %v475 = vpack.c.b16 %v427, %v423
        %v476 = vpack.c.b16 %v432, %v428
        %v477 = vpack.c.b16 %v433, %v429
        %v478 = vpack.c.b16 %v434, %v430
        %v479 = vpack.c.b16 %v435, %v431
        %v480 = vpack.c.b16 %v440, %v436
        %v481 = vpack.c.b16 %v441, %v437
        %v482 = vpack.c.b16 %v442, %v438
        %v483 = vpack.c.b16 %v443, %v439
        %v484 = vpack.c.b16 %v448, %v444
        %v485 = vpack.c.b16 %v449, %v445
        %v486 = vpack.c.b16 %v450, %v446
        %v487 = vpack.c.b16 %v451, %v447
        %v488 = vpack.c.b16 %v456, %v452
        %v489 = vpack.c.b16 %v457, %v453
        %v490 = vpack.c.b16 %v458, %v454
        %v491 = vpack.c.b16 %v459, %v455
        %524 = vmatprep.subr.bf16.mxu0 %v489
        %525 = vmatpush1.bf16.msra.mxu0 %v488
        %526 = vmatprep.subr.bf16.mxu0 %v485
        %527 = vmatpush1.bf16.msra.mxu0 %v484
        %528 = vmatprep.subr.bf16.mxu0 %v481
        %529 = vmatpush1.bf16.msra.mxu0 %v480
        %530 = vmatprep.subr.bf16.mxu0 %v477
        %531 = vmatpush1.bf16.msra.mxu0 %v476
        %532 = vmatprep.subr.bf16.mxu0 %v473
        %533 = vmatpush1.bf16.msra.mxu0 %v472
        %534 = vmatprep.subr.bf16.mxu0 %v469
        %535 = vmatpush1.bf16.msra.mxu0 %v468
        %536 = vmatprep.subr.bf16.mxu0 %v465
        %537 = vmatpush1.bf16.msra.mxu0 %v464
        %538 = vmatprep.subr.bf16.mxu0 %v461
        %539 = vmatpush1.bf16.msra.mxu0 %v460
        %540 = vmatprep.subr.bf16.mxu0 0
        %541 = vmatpush2.bf16.msra.mxu0 0
        %542 = vmatprep.subr.bf16.mxu0 0
        %543 = vmatpush2.bf16.msra.mxu0 0
        %544 = vmatprep.subr.bf16.mxu0 0
        %545 = vmatpush2.bf16.msra.mxu0 0
        %546 = vmatprep.subr.bf16.mxu0 0
        %547 = vmatpush2.bf16.msra.mxu0 0
        %548 = vmatprep.subr.bf16.mxu0 0
        %549 = vmatpush2.bf16.msra.mxu0 0
        %550 = vmatprep.subr.bf16.mxu0 0
        %551 = vmatpush2.bf16.msra.mxu0 0
        %552 = vmatprep.subr.bf16.mxu0 0
        %553 = vmatpush2.bf16.msra.mxu0 0
        %554 = vmatprep.subr.bf16.mxu0 0
        %555 = vmatpush2.bf16.msra.mxu0 0
        %556 = vmatprep.mubr.bf16.mxu0 0
        %557 = vmatmul.mubr.bf16.gmra.mxu0 %v362
        %v558 = vpop.f32.mrf.mxu0
        %v559 = vadd.f32 0.0, %v558
        %v560 = vpop.f32.mrf.mxu0
        %v561 = vadd.f32 0.0, %v560
        %v562 = vpop.f32.mrf.mxu0
        %v563 = vadd.f32 0.0, %v562
        %v564 = vpop.f32.mrf.mxu0
        %v565 = vadd.f32 0.0, %v564
        %566 = vdwg.mxu0
        %567 = vmatprep.subr.bf16.mxu0 %v491
        %568 = vmatpush1.bf16.msra.mxu0 %v490
        %569 = vmatprep.subr.bf16.mxu0 %v487
        %570 = vmatpush1.bf16.msra.mxu0 %v486
        %571 = vmatprep.subr.bf16.mxu0 %v483
        %572 = vmatpush1.bf16.msra.mxu0 %v482
        %573 = vmatprep.subr.bf16.mxu0 %v479
        %574 = vmatpush1.bf16.msra.mxu0 %v478
        %575 = vmatprep.subr.bf16.mxu0 %v475
        %576 = vmatpush1.bf16.msra.mxu0 %v474
        %577 = vmatprep.subr.bf16.mxu0 %v471
        %578 = vmatpush1.bf16.msra.mxu0 %v470
        %579 = vmatprep.subr.bf16.mxu0 %v467
        %580 = vmatpush1.bf16.msra.mxu0 %v466
        %581 = vmatprep.subr.bf16.mxu0 %v463
        %582 = vmatpush1.bf16.msra.mxu0 %v462
        %583 = vmatprep.subr.bf16.mxu0 0
        %584 = vmatpush2.bf16.msra.mxu0 0
        %585 = vmatprep.subr.bf16.mxu0 0
        %586 = vmatpush2.bf16.msra.mxu0 0
        %587 = vmatprep.subr.bf16.mxu0 0
        %588 = vmatpush2.bf16.msra.mxu0 0
        %589 = vmatprep.subr.bf16.mxu0 0
        %590 = vmatpush2.bf16.msra.mxu0 0
        %591 = vmatprep.subr.bf16.mxu0 0
        %592 = vmatpush2.bf16.msra.mxu0 0
        %593 = vmatprep.subr.bf16.mxu0 0
        %594 = vmatpush2.bf16.msra.mxu0 0
        %595 = vmatprep.subr.bf16.mxu0 0
        %596 = vmatpush2.bf16.msra.mxu0 0
        %597 = vmatprep.subr.bf16.mxu0 0
        %598 = vmatpush2.bf16.msra.mxu0 0
        %599 = vmatprep.mubr.bf16.mxu0 0
        %600 = vmatmul.mubr.bf16.gmra.mxu0 %v362
        %v601 = vpop.f32.mrf.mxu0
        %v602 = vadd.f32 0.0, %v601
        %v603 = vpop.f32.mrf.mxu0
        %v604 = vadd.f32 0.0, %v603
        %v605 = vpop.f32.mrf.mxu0
        %v606 = vadd.f32 0.0, %v605
        %v607 = vpop.f32.mrf.mxu0
        %v608 = vadd.f32 0.0, %v607
        %609 = vdwg.mxu0
        %v610 = vadd.f32 %v316, %v559
        %v611 = vadd.f32 %v317, %v561
        %v612 = vadd.f32 %v318, %v602
        %v613 = vadd.f32 %v319, %v604
        %v614 = vadd.f32 %v320, %v563
        %v615 = vadd.f32 %v321, %v565
        %v616 = vadd.f32 %v322, %v606
        %v617 = vadd.f32 %v323, %v608
        %618 = vst [vmem:[#allocation2] sm:$0xff] %v610
        %619 = vst [vmem:[#allocation2 + $0x8] sm:$0xff] %v611
        %620 = vst [vmem:[#allocation2 + $0x10] sm:$0xff] %v612
        %621 = vst [vmem:[#allocation2 + $0x18] sm:$0xff] %v613
        %622 = vst [vmem:[#allocation2 + $0x20] sm:$0xff] %v614
        %623 = vst [vmem:[#allocation2 + $0x28] sm:$0xff] %v615
        %624 = vst [vmem:[#allocation2 + $0x30] sm:$0xff] %v616
        %625 = vst [vmem:[#allocation2 + $0x38] sm:$0xff] %v617
        // Predicated region
        $region60: #{net_forward.9} parent=50 // pred_check
          %p626 = pneg %p304
        $region61: #{net_forward.9} parent=50 // pred_check_branch
          %628 = sbr.rel (%p626) target = $region63
        $region62: #{net_forward.9} parent=50 // pred_region
          %v629 = vld [vmem:[#allocation2] sm:$0xff]
          %v630 = vld [vmem:[#allocation2 + $0x8] sm:$0xff]
          %v631 = vld [vmem:[#allocation2 + $0x10] sm:$0xff]
          %v632 = vld [vmem:[#allocation2 + $0x18] sm:$0xff]
          %v633 = vld [vmem:[#allocation2 + $0x20] sm:$0xff]
          %v634 = vld [vmem:[#allocation2 + $0x28] sm:$0xff]
          %v635 = vld [vmem:[#allocation2 + $0x30] sm:$0xff]
          %v636 = vld [vmem:[#allocation2 + $0x38] sm:$0xff]
          %v637 = vld [vmem:[%s300] sm:$0xf]
          %v639 = vlaneseq
          %v640 = vshrl.u32 %v639, 7
          %v641 = vsub.s32 0, %v640
          %v642 = vrot.slane %v637, %v641
          %v643 = vlaneseq
          %v644 = vshrl.u32 %v643, 7
          %v645 = vsub.s32 1, %v644
          %v646 = vrot.slane %v637, %v645
          %v647 = vlaneseq
          %v648 = vshrl.u32 %v647, 7
          %v649 = vsub.s32 2, %v648
          %v650 = vrot.slane %v637, %v649
          %v651 = vlaneseq
          %v652 = vshrl.u32 %v651, 7
          %v653 = vsub.s32 3, %v652
          %v654 = vrot.slane %v637, %v653
          %v659 = vadd.f32 %v629, %v642
          %v660 = vadd.f32 %v630, %v646
          %v661 = vadd.f32 %v631, %v650
          %v662 = vadd.f32 %v632, %v654
          %v663 = vadd.f32 %v633, %v642
          %v664 = vadd.f32 %v634, %v646
          %v665 = vadd.f32 %v635, %v650
          %v666 = vadd.f32 %v636, %v654
          %v667 = vmax.f32 %v659, 0.0
          %v668 = vmax.f32 %v660, 0.0
          %v669 = vmax.f32 %v661, 0.0
          %v670 = vmax.f32 %v662, 0.0
          %v671 = vmax.f32 %v663, 0.0
          %v672 = vmax.f32 %v664, 0.0
          %v673 = vmax.f32 %v665, 0.0
          %v674 = vmax.f32 %v666, 0.0
          %v675 = vpack.c.bf16 %v671, %v667
          %v676 = vpack.c.bf16 %v672, %v668
          %v677 = vpack.c.bf16 %v673, %v669
          %v678 = vpack.c.bf16 %v674, %v670
          %v683 = vunpack.c.l.b16 %v675
          %v684 = vunpack.c.l.b16 %v676
          %v685 = vunpack.c.l.b16 %v677
          %v686 = vunpack.c.l.b16 %v678
          %v687 = vunpack.c.h.b16 %v675
          %v688 = vunpack.c.h.b16 %v676
          %v689 = vunpack.c.h.b16 %v677
          %v690 = vunpack.c.h.b16 %v678
          %v691 = vpack.c.b16 %v684, %v683
          %v692 = vpack.c.b16 %v686, %v685
          %v693 = vpack.c.b16 %v688, %v687
          %v694 = vpack.c.b16 %v690, %v689
          %699 = vst [vmem:[%s290] sm:$0xff] %v691
          %700 = vst [vmem:[%s290 + $0x8] sm:$0xff] %v692
          %701 = vst [vmem:[%s290 + $0x10] sm:$0xff] %v693
          %702 = vst [vmem:[%s290 + $0x18] sm:$0xff] %v694
        $region63: #{net_forward.9} parent=50 // pred_fallthru
          _
        %s703 = sand.u32 %s114, 1
        %s704 = sand.u32 %s114, 1
        %s705 = smul.addr %s704, 32
        %s706 = scalar_lea.vmem [#allocation4], %s705
        // Predicated region
        $region64: #{net_forward.9} parent=50 // pred_check
          %p707 = pneg %p124
        $region65: #{net_forward.9} parent=50 // pred_check_branch
          %709 = sbr.rel (%p707) target = $region67
        $region66: #{net_forward.9} parent=50 // pred_region
          %s710 = smul.u32 4, %s18
          %s711 = smul.addr %s710, 4
          %s712 = scalar_lea.vmem %s3, %s711
          // Predicated region
          $region68: #{net_forward.9} parent=66 // pred_check
            _
          $region69: #{net_forward.9} parent=66 // pred_check_branch
            %714 = sbr.rel (0) target = $region71
          $region70: #{net_forward.9} parent=66 // pred_region
            // Predicated region
            $region72: #{net_forward.9} parent=70 // pred_check
              _
            $region73: #{net_forward.9} parent=70 // pred_check_branch
              %716 = sbr.rel (0) target = $region75
            $region74: #{net_forward.9} parent=70 // pred_region
              loop: start=0, step=1, limit=1
              $region76: #{net_forward.9} parent=74 // loop_pre_header
                _
              $region77: #{net_forward.9} parent=74 // loop_header
                %s718 = sphi 0, %s722
                %p719 = scmp.ge.s32.totalorder %s718, 1
                %s723 = sphi %s706, %s706
                %s724 = sphi %s712, %s712
              $region78: #{net_forward.9} parent=74 // loop_header_branch
                %721 = sbr.rel (%p719) target = $region82
              $region79: #{net_forward.9} parent=74 // loop_body
                %v725 = vld [vmem:[%s723] sm:$0xff]
                %726 = vst [vmem:[%s724] sm:$0xff] %v725
                %v727 = vld [vmem:[%s723 + $0x8] sm:$0xff]
                %728 = vst [vmem:[%s724 + $0x8] sm:$0xff] %v727
                %v729 = vld [vmem:[%s723 + $0x10] sm:$0xff]
                %730 = vst [vmem:[%s724 + $0x20] sm:$0xff] %v729
                %v731 = vld [vmem:[%s723 + $0x18] sm:$0xff]
                %732 = vst [vmem:[%s724 + $0x28] sm:$0xff] %v731
              $region80: #{net_forward.9} parent=74 // loop_footer
                %s722 = sadd.s32 1, %s718
              $region81: #{net_forward.9} parent=74 // loop_footer_branch
                %717 = sbr.rel target = $region77
              $region82: #{net_forward.9} parent=74 // loop_exit
                _
            $region75: #{net_forward.9} parent=70 // pred_fallthru
              _
            // Predicated region
            $region83: #{net_forward.9} parent=70 // pred_check
              _
            $region84: #{net_forward.9} parent=70 // pred_check_branch
              %734 = sbr.rel target = $region86
            $region85: #{net_forward.9} parent=70 // pred_region
              _
            $region86: #{net_forward.9} parent=70 // pred_fallthru
              _
          $region71: #{net_forward.9} parent=66 // pred_fallthru
            _
          %735 = vnop
        $region67: #{net_forward.9} parent=50 // pred_fallthru
          _
      $region51: #{net_forward.9} parent=5 // pred_fallthru
        _
      %p736 = scmp.le.s32.totalorder 2, %s9
      // Predicated region
      $region87: #{net_forward.9} parent=5 // pred_check
        %p737 = pneg %p736
      $region88: #{net_forward.9} parent=5 // pred_check_branch
        %739 = sbr.rel (%p737) target = $region90
      $region89: #{net_forward.9} parent=5 // pred_region
        %s740 = ssub.s32 %s9, 2
        // Predicated region
        $region91: #{net_forward.9} parent=89 // pred_check
          %p741 = pneg %p130
        $region92: #{net_forward.9} parent=89 // pred_check_branch
          %743 = sbr.rel (%p741) target = $region94
        $region93: #{net_forward.9} parent=89 // pred_region
          %s744 = sand.u32 %s115, 1
          %s745 = sand.u32 %s115, 1
          %s746 = smul.addr %s745, 32
          %s747 = scalar_lea.vmem [#allocation4], %s746
        $region94: #{net_forward.9} parent=89 // pred_fallthru
          _
      $region90: #{net_forward.9} parent=5 // pred_fallthru
        _
    $region6: #{net_forward.9} parent=1 // loop_footer
      %s13 = sadd.s32 1, %s9
    $region7: #{net_forward.9} parent=1 // loop_footer_branch
      %8 = sbr.rel target = $region3
    $region8: #{net_forward.9} parent=1 // loop_exit
      _

// kernel: net_forward.10
$region0: #{net_forward.10}
  #allocation0 [shape = 'u32[]', space=smem, size = 0x4, offset = 0x4, fixed_abs, tag = 'smem constant byte address 0x4 - core index']
  #allocation1 [shape = 'u32[144,128]{1,0:T(1,128)}', space=vmem, size = 0x12000, scoped, tag = 'internal scratch']
  #allocation2 [shape = 'f32[64,128]{1,0:T(8,128)}', space=vmem, size = 0x8000, scoped, tag = 'scratch operand']
  %s0 = inlined_call_operand.vmem [shape: bf16[64,512], index: 0, kind: input, shape index: {}]
  %s1 = inlined_call_operand.vmem [shape: bf16[512,128], index: 1, kind: input, shape index: {}]
  %s2 = inlined_call_operand.vmem [shape: f32[64,1], index: 2, kind: input, shape index: {}]
  %s3 = inlined_call_operand.vmem [shape: bf16[64,128], index: 3, kind: output, shape index: {}]
  %s4 = sld [smem:[#allocation0]]
  $region30: #{net_forward.10} parent=0
    _
  %s6 = ssub.s32 1, %s4
  %s7 = scalar_select 0, %s6, %s4
  // Predicated region
  $region2: #{net_forward.10} parent=0 // pred_check
    _
  $region3: #{net_forward.10} parent=0 // pred_check_branch
    %9 = sbr.rel (0) target = $region5
  $region4: #{net_forward.10} parent=0 // pred_region
    _
  $region5: #{net_forward.10} parent=0 // pred_fallthru
    _
  // Predicated region
  $region6: #{net_forward.10} parent=0 // pred_check
    _
  $region7: #{net_forward.10} parent=0 // pred_check_branch
    %11 = sbr.rel (0) target = $region9
  $region8: #{net_forward.10} parent=0 // pred_region
    _
  $region9: #{net_forward.10} parent=0 // pred_fallthru
    _
  // Predicated region
  $region10: #{net_forward.10} parent=0 // pred_check
    _
  $region11: #{net_forward.10} parent=0 // pred_check_branch
    %13 = sbr.rel (0) target = $region13
  $region12: #{net_forward.10} parent=0 // pred_region
    _
  $region13: #{net_forward.10} parent=0 // pred_fallthru
    _
  %p15 = scmp.eq.s32.totalorder 0, 0
  // Predicated region
  $region14: #{net_forward.10} parent=0 // pred_check
    %p16 = pneg %p15
  $region15: #{net_forward.10} parent=0 // pred_check_branch
    %18 = sbr.rel (%p16) target = $region17
  $region16: #{net_forward.10} parent=0 // pred_region
    %19 = vst [vmem:[#allocation2] sm:$0xff] 0.0
    %20 = vst [vmem:[#allocation2 + $0x8] sm:$0xff] 0.0
    %21 = vst [vmem:[#allocation2 + $0x10] sm:$0xff] 0.0
    %22 = vst [vmem:[#allocation2 + $0x18] sm:$0xff] 0.0
    %23 = vst [vmem:[#allocation2 + $0x20] sm:$0xff] 0.0
    %24 = vst [vmem:[#allocation2 + $0x28] sm:$0xff] 0.0
    %25 = vst [vmem:[#allocation2 + $0x30] sm:$0xff] 0.0
    %26 = vst [vmem:[#allocation2 + $0x38] sm:$0xff] 0.0
  $region17: #{net_forward.10} parent=0 // pred_fallthru
    _
  %v27 = vld [vmem:[#allocation2] sm:$0xff]
  %v28 = vld [vmem:[#allocation2 + $0x8] sm:$0xff]
  %v29 = vld [vmem:[#allocation2 + $0x10] sm:$0xff]
  %v30 = vld [vmem:[#allocation2 + $0x18] sm:$0xff]
  %v31 = vld [vmem:[#allocation2 + $0x20] sm:$0xff]
  %v32 = vld [vmem:[#allocation2 + $0x28] sm:$0xff]
  %v33 = vld [vmem:[#allocation2 + $0x30] sm:$0xff]
  %v34 = vld [vmem:[#allocation2 + $0x38] sm:$0xff]
  %v35 = vld [vmem:[%s0] sm:$0xff]
  %v36 = vld [vmem:[%s0 + $0x8] sm:$0xff]
  %v37 = vld [vmem:[%s0 + $0x10] sm:$0xff]
  %v38 = vld [vmem:[%s0 + $0x18] sm:$0xff]
  %v39 = vld [vmem:[%s0 + $0x20] sm:$0xff]
  %v40 = vld [vmem:[%s0 + $0x28] sm:$0xff]
  %v41 = vld [vmem:[%s0 + $0x30] sm:$0xff]
  %v42 = vld [vmem:[%s0 + $0x38] sm:$0xff]
  %v43 = vld [vmem:[%s0 + $0x40] sm:$0xff]
  %v44 = vld [vmem:[%s0 + $0x48] sm:$0xff]
  %v45 = vld [vmem:[%s0 + $0x50] sm:$0xff]
  %v46 = vld [vmem:[%s0 + $0x58] sm:$0xff]
  %v47 = vld [vmem:[%s0 + $0x60] sm:$0xff]
  %v48 = vld [vmem:[%s0 + $0x68] sm:$0xff]
  %v49 = vld [vmem:[%s0 + $0x70] sm:$0xff]
  %v50 = vld [vmem:[%s0 + $0x78] sm:$0xff]
  %v51 = vld [vmem:[%s1] sm:$0xf]
  %v52 = vld [vmem:[%s1 + $0x4] sm:$0xf]
  %v53 = vld [vmem:[%s1 + $0x8] sm:$0xf]
  %v54 = vld [vmem:[%s1 + $0xc] sm:$0xf]
  %v55 = vld [vmem:[%s1 + $0x10] sm:$0xf]
  %v56 = vld [vmem:[%s1 + $0x14] sm:$0xf]
  %v57 = vld [vmem:[%s1 + $0x18] sm:$0xf]
  %v58 = vld [vmem:[%s1 + $0x1c] sm:$0xf]
  %v59 = vld [vmem:[%s1 + $0x20] sm:$0xf]
  %v60 = vld [vmem:[%s1 + $0x24] sm:$0xf]
  %v61 = vld [vmem:[%s1 + $0x28] sm:$0xf]
  %v62 = vld [vmem:[%s1 + $0x2c] sm:$0xf]
  %v63 = vld [vmem:[%s1 + $0x30] sm:$0xf]
  %v64 = vld [vmem:[%s1 + $0x34] sm:$0xf]
  %v65 = vld [vmem:[%s1 + $0x38] sm:$0xf]
  %v66 = vld [vmem:[%s1 + $0x3c] sm:$0xf]
  %v67 = vld [vmem:[%s1 + $0x40] sm:$0xf]
  %v68 = vld [vmem:[%s1 + $0x44] sm:$0xf]
  %v69 = vld [vmem:[%s1 + $0x48] sm:$0xf]
  %v70 = vld [vmem:[%s1 + $0x4c] sm:$0xf]
  %v71 = vld [vmem:[%s1 + $0x50] sm:$0xf]
  %v72 = vld [vmem:[%s1 + $0x54] sm:$0xf]
  %v73 = vld [vmem:[%s1 + $0x58] sm:$0xf]
  %v74 = vld [vmem:[%s1 + $0x5c] sm:$0xf]
  %v75 = vld [vmem:[%s1 + $0x60] sm:$0xf]
  %v76 = vld [vmem:[%s1 + $0x64] sm:$0xf]
  %v77 = vld [vmem:[%s1 + $0x68] sm:$0xf]
  %v78 = vld [vmem:[%s1 + $0x6c] sm:$0xf]
  %v79 = vld [vmem:[%s1 + $0x70] sm:$0xf]
  %v80 = vld [vmem:[%s1 + $0x74] sm:$0xf]
  %v81 = vld [vmem:[%s1 + $0x78] sm:$0xf]
  %v82 = vld [vmem:[%s1 + $0x7c] sm:$0xf]
  %v83 = vld [vmem:[%s1 + $0x80] sm:$0xf]
  %v84 = vld [vmem:[%s1 + $0x84] sm:$0xf]
  %v85 = vld [vmem:[%s1 + $0x88] sm:$0xf]
  %v86 = vld [vmem:[%s1 + $0x8c] sm:$0xf]
  %v87 = vld [vmem:[%s1 + $0x90] sm:$0xf]
  %v88 = vld [vmem:[%s1 + $0x94] sm:$0xf]
  %v89 = vld [vmem:[%s1 + $0x98] sm:$0xf]
  %v90 = vld [vmem:[%s1 + $0x9c] sm:$0xf]
  %v91 = vld [vmem:[%s1 + $0xa0] sm:$0xf]
  %v92 = vld [vmem:[%s1 + $0xa4] sm:$0xf]
  %v93 = vld [vmem:[%s1 + $0xa8] sm:$0xf]
  %v94 = vld [vmem:[%s1 + $0xac] sm:$0xf]
  %v95 = vld [vmem:[%s1 + $0xb0] sm:$0xf]
  %v96 = vld [vmem:[%s1 + $0xb4] sm:$0xf]
  %v97 = vld [vmem:[%s1 + $0xb8] sm:$0xf]
  %v98 = vld [vmem:[%s1 + $0xbc] sm:$0xf]
  %v99 = vld [vmem:[%s1 + $0xc0] sm:$0xf]
  %v100 = vld [vmem:[%s1 + $0xc4] sm:$0xf]
  %v101 = vld [vmem:[%s1 + $0xc8] sm:$0xf]
  %v102 = vld [vmem:[%s1 + $0xcc] sm:$0xf]
  %v103 = vld [vmem:[%s1 + $0xd0] sm:$0xf]
  %v104 = vld [vmem:[%s1 + $0xd4] sm:$0xf]
  %v105 = vld [vmem:[%s1 + $0xd8] sm:$0xf]
  %v106 = vld [vmem:[%s1 + $0xdc] sm:$0xf]
  %v107 = vld [vmem:[%s1 + $0xe0] sm:$0xf]
  %v108 = vld [vmem:[%s1 + $0xe4] sm:$0xf]
  %v109 = vld [vmem:[%s1 + $0xe8] sm:$0xf]
  %v110 = vld [vmem:[%s1 + $0xec] sm:$0xf]
  %v111 = vld [vmem:[%s1 + $0xf0] sm:$0xf]
  %v112 = vld [vmem:[%s1 + $0xf4] sm:$0xf]
  %v113 = vld [vmem:[%s1 + $0xf8] sm:$0xf]
  %v114 = vld [vmem:[%s1 + $0xfc] sm:$0xf]
  %v131 = vunpack.c.l.b16 %v35
  %v132 = vunpack.c.h.b16 %v35
  %v133 = vunpack.c.l.b16 %v36
  %v134 = vunpack.c.h.b16 %v36
  %v135 = vunpack.c.l.b16 %v37
  %v136 = vunpack.c.h.b16 %v37
  %v137 = vunpack.c.l.b16 %v38
  %v138 = vunpack.c.h.b16 %v38
  %v139 = vunpack.c.l.b16 %v39
  %v140 = vunpack.c.h.b16 %v39
  %v141 = vunpack.c.l.b16 %v40
  %v142 = vunpack.c.h.b16 %v40
  %v143 = vunpack.c.l.b16 %v41
  %v144 = vunpack.c.h.b16 %v41
  %v145 = vunpack.c.l.b16 %v42
  %v146 = vunpack.c.h.b16 %v42
  %v147 = vunpack.c.l.b16 %v43
  %v148 = vunpack.c.h.b16 %v43
  %v149 = vunpack.c.l.b16 %v44
  %v150 = vunpack.c.h.b16 %v44
  %v151 = vunpack.c.l.b16 %v45
  %v152 = vunpack.c.h.b16 %v45
  %v153 = vunpack.c.l.b16 %v46
  %v154 = vunpack.c.h.b16 %v46
  %v155 = vunpack.c.l.b16 %v47
  %v156 = vunpack.c.h.b16 %v47
  %v157 = vunpack.c.l.b16 %v48
  %v158 = vunpack.c.h.b16 %v48
  %v159 = vunpack.c.l.b16 %v49
  %v160 = vunpack.c.h.b16 %v49
  %v161 = vunpack.c.l.b16 %v50
  %v162 = vunpack.c.h.b16 %v50
  %v163 = vpack.c.b16 %v135, %v131
  %v164 = vpack.c.b16 %v136, %v132
  %v165 = vpack.c.b16 %v137, %v133
  %v166 = vpack.c.b16 %v138, %v134
  %v167 = vpack.c.b16 %v143, %v139
  %v168 = vpack.c.b16 %v144, %v140
  %v169 = vpack.c.b16 %v145, %v141
  %v170 = vpack.c.b16 %v146, %v142
  %v171 = vpack.c.b16 %v151, %v147
  %v172 = vpack.c.b16 %v152, %v148
  %v173 = vpack.c.b16 %v153, %v149
  %v174 = vpack.c.b16 %v154, %v150
  %v175 = vpack.c.b16 %v159, %v155
  %v176 = vpack.c.b16 %v160, %v156
  %v177 = vpack.c.b16 %v161, %v157
  %v178 = vpack.c.b16 %v162, %v158
  %v259 = vunpack.c.l.b16 %v51
  %v260 = vunpack.c.l.b16 %v52
  %v261 = vunpack.c.l.b16 %v53
  %v262 = vunpack.c.l.b16 %v54
  %v263 = vunpack.c.l.b16 %v55
  %v264 = vunpack.c.l.b16 %v56
  %v265 = vunpack.c.l.b16 %v57
  %v266 = vunpack.c.l.b16 %v58
  %v267 = vunpack.c.l.b16 %v59
  %v268 = vunpack.c.l.b16 %v60
  %v269 = vunpack.c.l.b16 %v61
  %v270 = vunpack.c.l.b16 %v62
  %v271 = vunpack.c.l.b16 %v63
  %v272 = vunpack.c.l.b16 %v64
  %v273 = vunpack.c.l.b16 %v65
  %v274 = vunpack.c.l.b16 %v66
  %v275 = vunpack.c.l.b16 %v67
  %v276 = vunpack.c.l.b16 %v68
  %v277 = vunpack.c.l.b16 %v69
  %v278 = vunpack.c.l.b16 %v70
  %v279 = vunpack.c.l.b16 %v71
  %v280 = vunpack.c.l.b16 %v72
  %v281 = vunpack.c.l.b16 %v73
  %v282 = vunpack.c.l.b16 %v74
  %v283 = vunpack.c.l.b16 %v75
  %v284 = vunpack.c.l.b16 %v76
  %v285 = vunpack.c.l.b16 %v77
  %v286 = vunpack.c.l.b16 %v78
  %v287 = vunpack.c.l.b16 %v79
  %v288 = vunpack.c.l.b16 %v80
  %v289 = vunpack.c.l.b16 %v81
  %v290 = vunpack.c.l.b16 %v82
  %v291 = vunpack.c.l.b16 %v83
  %v292 = vunpack.c.l.b16 %v84
  %v293 = vunpack.c.l.b16 %v85
  %v294 = vunpack.c.l.b16 %v86
  %v295 = vunpack.c.l.b16 %v87
  %v296 = vunpack.c.l.b16 %v88
  %v297 = vunpack.c.l.b16 %v89
  %v298 = vunpack.c.l.b16 %v90
  %v299 = vunpack.c.l.b16 %v91
  %v300 = vunpack.c.l.b16 %v92
  %v301 = vunpack.c.l.b16 %v93
  %v302 = vunpack.c.l.b16 %v94
  %v303 = vunpack.c.l.b16 %v95
  %v304 = vunpack.c.l.b16 %v96
  %v305 = vunpack.c.l.b16 %v97
  %v306 = vunpack.c.l.b16 %v98
  %v307 = vunpack.c.l.b16 %v99
  %v308 = vunpack.c.l.b16 %v100
  %v309 = vunpack.c.l.b16 %v101
  %v310 = vunpack.c.l.b16 %v102
  %v311 = vunpack.c.l.b16 %v103
  %v312 = vunpack.c.l.b16 %v104
  %v313 = vunpack.c.l.b16 %v105
  %v314 = vunpack.c.l.b16 %v106
  %v315 = vunpack.c.l.b16 %v107
  %v316 = vunpack.c.l.b16 %v108
  %v317 = vunpack.c.l.b16 %v109
  %v318 = vunpack.c.l.b16 %v110
  %v319 = vunpack.c.l.b16 %v111
  %v320 = vunpack.c.l.b16 %v112
  %v321 = vunpack.c.l.b16 %v113
  %v322 = vunpack.c.l.b16 %v114
  %v323 = vpack.c.b16 %v260, %v259
  %v324 = vpack.c.b16 %v262, %v261
  %v325 = vpack.c.b16 %v264, %v263
  %v326 = vpack.c.b16 %v266, %v265
  %v327 = vpack.c.b16 %v268, %v267
  %v328 = vpack.c.b16 %v270, %v269
  %v329 = vpack.c.b16 %v272, %v271
  %v330 = vpack.c.b16 %v274, %v273
  %v331 = vpack.c.b16 %v276, %v275
  %v332 = vpack.c.b16 %v278, %v277
  %v333 = vpack.c.b16 %v280, %v279
  %v334 = vpack.c.b16 %v282, %v281
  %v335 = vpack.c.b16 %v284, %v283
  %v336 = vpack.c.b16 %v286, %v285
  %v337 = vpack.c.b16 %v288, %v287
  %v338 = vpack.c.b16 %v290, %v289
  %v339 = vpack.c.b16 %v292, %v291
  %v340 = vpack.c.b16 %v294, %v293
  %v341 = vpack.c.b16 %v296, %v295
  %v342 = vpack.c.b16 %v298, %v297
  %v343 = vpack.c.b16 %v300, %v299
  %v344 = vpack.c.b16 %v302, %v301
  %v345 = vpack.c.b16 %v304, %v303
  %v346 = vpack.c.b16 %v306, %v305
  %v347 = vpack.c.b16 %v308, %v307
  %v348 = vpack.c.b16 %v310, %v309
  %v349 = vpack.c.b16 %v312, %v311
  %v350 = vpack.c.b16 %v314, %v313
  %v351 = vpack.c.b16 %v316, %v315
  %v352 = vpack.c.b16 %v318, %v317
  %v353 = vpack.c.b16 %v320, %v319
  %v354 = vpack.c.b16 %v322, %v321
  %387 = vmatprep.subr.bf16.mxu0 0
  %388 = vmatpush1.bf16.msra.mxu0 %v330
  %389 = vmatprep.subr.bf16.mxu0 0
  %390 = vmatpush1.bf16.msra.mxu0 %v329
  %391 = vmatprep.subr.bf16.mxu0 0
  %392 = vmatpush1.bf16.msra.mxu0 %v328
  %393 = vmatprep.subr.bf16.mxu0 0
  %394 = vmatpush1.bf16.msra.mxu0 %v327
  %395 = vmatprep.subr.bf16.mxu0 0
  %396 = vmatpush1.bf16.msra.mxu0 %v326
  %397 = vmatprep.subr.bf16.mxu0 0
  %398 = vmatpush1.bf16.msra.mxu0 %v325
  %399 = vmatprep.subr.bf16.mxu0 0
  %400 = vmatpush1.bf16.msra.mxu0 %v324
  %401 = vmatprep.subr.bf16.mxu0 0
  %402 = vmatpush1.bf16.msra.mxu0 %v323
  %403 = vmatprep.subr.bf16.mxu0 0
  %404 = vmatpush2.bf16.msra.mxu0 %v338
  %405 = vmatprep.subr.bf16.mxu0 0
  %406 = vmatpush2.bf16.msra.mxu0 %v337
  %407 = vmatprep.subr.bf16.mxu0 0
  %408 = vmatpush2.bf16.msra.mxu0 %v336
  %409 = vmatprep.subr.bf16.mxu0 0
  %410 = vmatpush2.bf16.msra.mxu0 %v335
  %411 = vmatprep.subr.bf16.mxu0 0
  %412 = vmatpush2.bf16.msra.mxu0 %v334
  %413 = vmatprep.subr.bf16.mxu0 0
  %414 = vmatpush2.bf16.msra.mxu0 %v333
  %415 = vmatprep.subr.bf16.mxu0 0
  %416 = vmatpush2.bf16.msra.mxu0 %v332
  %417 = vmatprep.subr.bf16.mxu0 0
  %418 = vmatpush2.bf16.msra.mxu0 %v331
  %419 = vmatprep.mubr.bf16.mxu0 %v164
  %420 = vmatmul.mubr.bf16.gmra.mxu0 %v163
  %v421 = vpop.f32.mrf.mxu0
  %v422 = vadd.f32 0.0, %v421
  %v423 = vpop.f32.mrf.mxu0
  %v424 = vpop.f32.mrf.mxu0
  %v425 = vadd.f32 0.0, %v424
  %v426 = vpop.f32.mrf.mxu0
  %427 = vmatprep.mubr.bf16.mxu0 %v168
  %428 = vmatmul.mubr.bf16.gmra.mxu0 %v167
  %v429 = vpop.f32.mrf.mxu0
  %v430 = vadd.f32 0.0, %v429
  %v431 = vpop.f32.mrf.mxu0
  %v432 = vpop.f32.mrf.mxu0
  %v433 = vadd.f32 0.0, %v432
  %v434 = vpop.f32.mrf.mxu0
  %435 = vmatprep.mubr.bf16.mxu0 %v172
  %436 = vmatmul.mubr.bf16.gmra.mxu0 %v171
  %v437 = vpop.f32.mrf.mxu0
  %v438 = vadd.f32 0.0, %v437
  %v439 = vpop.f32.mrf.mxu0
  %v440 = vpop.f32.mrf.mxu0
  %v441 = vadd.f32 0.0, %v440
  %v442 = vpop.f32.mrf.mxu0
  %443 = vmatprep.mubr.bf16.mxu0 %v176
  %444 = vmatmul.mubr.bf16.gmra.mxu0 %v175
  %v445 = vpop.f32.mrf.mxu0
  %v446 = vadd.f32 0.0, %v445
  %v447 = vpop.f32.mrf.mxu0
  %v448 = vpop.f32.mrf.mxu0
  %v449 = vadd.f32 0.0, %v448
  %v450 = vpop.f32.mrf.mxu0
  %451 = vdwg.mxu0
  %452 = vmatprep.subr.bf16.mxu0 0
  %453 = vmatpush1.bf16.msra.mxu0 %v346
  %454 = vmatprep.subr.bf16.mxu0 0
  %455 = vmatpush1.bf16.msra.mxu0 %v345
  %456 = vmatprep.subr.bf16.mxu0 0
  %457 = vmatpush1.bf16.msra.mxu0 %v344
  %458 = vmatprep.subr.bf16.mxu0 0
  %459 = vmatpush1.bf16.msra.mxu0 %v343
  %460 = vmatprep.subr.bf16.mxu0 0
  %461 = vmatpush1.bf16.msra.mxu0 %v342
  %462 = vmatprep.subr.bf16.mxu0 0
  %463 = vmatpush1.bf16.msra.mxu0 %v341
  %464 = vmatprep.subr.bf16.mxu0 0
  %465 = vmatpush1.bf16.msra.mxu0 %v340
  %466 = vmatprep.subr.bf16.mxu0 0
  %467 = vmatpush1.bf16.msra.mxu0 %v339
  %468 = vmatprep.subr.bf16.mxu0 0
  %469 = vmatpush2.bf16.msra.mxu0 %v354
  %470 = vmatprep.subr.bf16.mxu0 0
  %471 = vmatpush2.bf16.msra.mxu0 %v353
  %472 = vmatprep.subr.bf16.mxu0 0
  %473 = vmatpush2.bf16.msra.mxu0 %v352
  %474 = vmatprep.subr.bf16.mxu0 0
  %475 = vmatpush2.bf16.msra.mxu0 %v351
  %476 = vmatprep.subr.bf16.mxu0 0
  %477 = vmatpush2.bf16.msra.mxu0 %v350
  %478 = vmatprep.subr.bf16.mxu0 0
  %479 = vmatpush2.bf16.msra.mxu0 %v349
  %480 = vmatprep.subr.bf16.mxu0 0
  %481 = vmatpush2.bf16.msra.mxu0 %v348
  %482 = vmatprep.subr.bf16.mxu0 0
  %483 = vmatpush2.bf16.msra.mxu0 %v347
  %484 = vmatprep.mubr.bf16.mxu0 %v166
  %485 = vmatmul.mubr.bf16.gmra.mxu0 %v165
  %v486 = vpop.f32.mrf.mxu0
  %v487 = vadd.f32 %v422, %v486
  %v488 = vpop.f32.mrf.mxu0
  %v489 = vpop.f32.mrf.mxu0
  %v490 = vadd.f32 %v425, %v489
  %v491 = vpop.f32.mrf.mxu0
  %492 = vmatprep.mubr.bf16.mxu0 %v170
  %493 = vmatmul.mubr.bf16.gmra.mxu0 %v169
  %v494 = vpop.f32.mrf.mxu0
  %v495 = vadd.f32 %v430, %v494
  %v496 = vpop.f32.mrf.mxu0
  %v497 = vpop.f32.mrf.mxu0
  %v498 = vadd.f32 %v433, %v497
  %v499 = vpop.f32.mrf.mxu0
  %500 = vmatprep.mubr.bf16.mxu0 %v174
  %501 = vmatmul.mubr.bf16.gmra.mxu0 %v173
  %v502 = vpop.f32.mrf.mxu0
  %v503 = vadd.f32 %v438, %v502
  %v504 = vpop.f32.mrf.mxu0
  %v505 = vpop.f32.mrf.mxu0
  %v506 = vadd.f32 %v441, %v505
  %v507 = vpop.f32.mrf.mxu0
  %508 = vmatprep.mubr.bf16.mxu0 %v178
  %509 = vmatmul.mubr.bf16.gmra.mxu0 %v177
  %v510 = vpop.f32.mrf.mxu0
  %v511 = vadd.f32 %v446, %v510
  %v512 = vpop.f32.mrf.mxu0
  %v513 = vpop.f32.mrf.mxu0
  %v514 = vadd.f32 %v449, %v513
  %v515 = vpop.f32.mrf.mxu0
  %516 = vdwg.mxu0
  %v517 = vadd.f32 %v27, %v487
  %v518 = vadd.f32 %v28, %v490
  %v519 = vadd.f32 %v29, %v495
  %v520 = vadd.f32 %v30, %v498
  %v521 = vadd.f32 %v31, %v503
  %v522 = vadd.f32 %v32, %v506
  %v523 = vadd.f32 %v33, %v511
  %v524 = vadd.f32 %v34, %v514
  %525 = vst [vmem:[#allocation2] sm:$0xff] %v517
  %526 = vst [vmem:[#allocation2 + $0x8] sm:$0xff] %v518
  %527 = vst [vmem:[#allocation2 + $0x10] sm:$0xff] %v519
  %528 = vst [vmem:[#allocation2 + $0x18] sm:$0xff] %v520
  %529 = vst [vmem:[#allocation2 + $0x20] sm:$0xff] %v521
  %530 = vst [vmem:[#allocation2 + $0x28] sm:$0xff] %v522
  %531 = vst [vmem:[#allocation2 + $0x30] sm:$0xff] %v523
  %532 = vst [vmem:[#allocation2 + $0x38] sm:$0xff] %v524
  // Predicated region
  $region18: #{net_forward.10} parent=0 // pred_check
    %p533 = pneg %p15
  $region19: #{net_forward.10} parent=0 // pred_check_branch
    %535 = sbr.rel (%p533) target = $region21
  $region20: #{net_forward.10} parent=0 // pred_region
    %v536 = vld [vmem:[#allocation2] sm:$0xff]
    %v537 = vld [vmem:[#allocation2 + $0x8] sm:$0xff]
    %v538 = vld [vmem:[#allocation2 + $0x10] sm:$0xff]
    %v539 = vld [vmem:[#allocation2 + $0x18] sm:$0xff]
    %v540 = vld [vmem:[#allocation2 + $0x20] sm:$0xff]
    %v541 = vld [vmem:[#allocation2 + $0x28] sm:$0xff]
    %v542 = vld [vmem:[#allocation2 + $0x30] sm:$0xff]
    %v543 = vld [vmem:[#allocation2 + $0x38] sm:$0xff]
    %v544 = vld [vmem:[%s2] sm:$0xff]
    %v545 = vld [vmem:[%s2 + $0x8] sm:$0xff]
    %v546 = vld [vmem:[%s2 + $0x10] sm:$0xff]
    %v547 = vld [vmem:[%s2 + $0x18] sm:$0xff]
    %v548 = vld [vmem:[%s2 + $0x20] sm:$0xff]
    %v549 = vld [vmem:[%s2 + $0x28] sm:$0xff]
    %v550 = vld [vmem:[%s2 + $0x30] sm:$0xff]
    %v551 = vld [vmem:[%s2 + $0x38] sm:$0xff]
    %553 = vset.pattern.permute.xlu0 0
    %554 = vperm.xlu0 %553, %v544
    %v555 = vpop.permute.xlu0 %554
    %558 = vset.pattern.permute.xlu0 0
    %559 = vperm.xlu0 %558, %v545
    %v560 = vpop.permute.xlu0 %559
    %563 = vset.pattern.permute.xlu0 0
    %564 = vperm.xlu0 %563, %v546
    %v565 = vpop.permute.xlu0 %564
    %568 = vset.pattern.permute.xlu0 0
    %569 = vperm.xlu0 %568, %v547
    %v570 = vpop.permute.xlu0 %569
    %573 = vset.pattern.permute.xlu0 0
    %574 = vperm.xlu0 %573, %v548
    %v575 = vpop.permute.xlu0 %574
    %578 = vset.pattern.permute.xlu0 0
    %579 = vperm.xlu0 %578, %v549
    %v580 = vpop.permute.xlu0 %579
    %583 = vset.pattern.permute.xlu0 0
    %584 = vperm.xlu0 %583, %v550
    %v585 = vpop.permute.xlu0 %584
    %588 = vset.pattern.permute.xlu0 0
    %589 = vperm.xlu0 %588, %v551
    %v590 = vpop.permute.xlu0 %589
    %v592 = vadd.f32 %v536, %v555
    %v593 = vadd.f32 %v537, %v560
    %v594 = vadd.f32 %v538, %v565
    %v595 = vadd.f32 %v539, %v570
    %v596 = vadd.f32 %v540, %v575
    %v597 = vadd.f32 %v541, %v580
    %v598 = vadd.f32 %v542, %v585
    %v599 = vadd.f32 %v543, %v590
    %v600 = vmax.f32 %v592, 0.0
    %v601 = vmax.f32 %v593, 0.0
    %v602 = vmax.f32 %v594, 0.0
    %v603 = vmax.f32 %v595, 0.0
    %v604 = vmax.f32 %v596, 0.0
    %v605 = vmax.f32 %v597, 0.0
    %v606 = vmax.f32 %v598, 0.0
    %v607 = vmax.f32 %v599, 0.0
    %v608 = vpack.c.bf16 %v601, %v600
    %v609 = vpack.c.bf16 %v603, %v602
    %v610 = vpack.c.bf16 %v605, %v604
    %v611 = vpack.c.bf16 %v607, %v606
    %v616 = vunpack.c.l.b16 %v608
    %v617 = vunpack.c.h.b16 %v608
    %v618 = vunpack.c.l.b16 %v609
    %v619 = vunpack.c.h.b16 %v609
    %v620 = vunpack.c.l.b16 %v610
    %v621 = vunpack.c.h.b16 %v610
    %v622 = vunpack.c.l.b16 %v611
    %v623 = vunpack.c.h.b16 %v611
    %v624 = vpack.c.b16 %v616, %v616
    %v625 = vpack.c.b16 %v617, %v617
    %v626 = vpack.c.b16 %v618, %v618
    %v627 = vpack.c.b16 %v619, %v619
    %v628 = vpack.c.b16 %v620, %v620
    %v629 = vpack.c.b16 %v621, %v621
    %v630 = vpack.c.b16 %v622, %v622
    %v631 = vpack.c.b16 %v623, %v623
    %640 = vst [vmem:[%s3] sm:$0xf] %v624
    %641 = vst [vmem:[%s3 + $0x4] sm:$0xf] %v625
    %642 = vst [vmem:[%s3 + $0x8] sm:$0xf] %v626
    %643 = vst [vmem:[%s3 + $0xc] sm:$0xf] %v627
    %644 = vst [vmem:[%s3 + $0x10] sm:$0xf] %v628
    %645 = vst [vmem:[%s3 + $0x14] sm:$0xf] %v629
    %646 = vst [vmem:[%s3 + $0x18] sm:$0xf] %v630
    %647 = vst [vmem:[%s3 + $0x1c] sm:$0xf] %v631
  $region21: #{net_forward.10} parent=0 // pred_fallthru
    _
  // Predicated region
  $region22: #{net_forward.10} parent=0 // pred_check
    _
  $region23: #{net_forward.10} parent=0 // pred_check_branch
    %649 = sbr.rel (0) target = $region25
  $region24: #{net_forward.10} parent=0 // pred_region
    _
  $region25: #{net_forward.10} parent=0 // pred_fallthru
    _
  // Predicated region
  $region26: #{net_forward.10} parent=0 // pred_check
    _
  $region27: #{net_forward.10} parent=0 // pred_check_branch
    %651 = sbr.rel (0) target = $region29
  $region28: #{net_forward.10} parent=0 // pred_region
    _
  $region29: #{net_forward.10} parent=0 // pred_fallthru
    _

// kernel: net_forward.11
$region0: #{net_forward.11}
  #allocation0 [shape = 'u32[]', space=smem, size = 0x4, offset = 0x4, fixed_abs, tag = 'smem constant byte address 0x4 - core index']
  #allocation1 [shape = 'u32[144,128]{1,0:T(1,128)}', space=vmem, size = 0x12000, scoped, tag = 'internal scratch']
  #allocation2 [shape = 'f32[16,512]{1,0:T(8,128)}', space=vmem, size = 0x8000, scoped, tag = 'scratch operand']
  %s0 = inlined_call_operand.vmem [shape: bf16[16,256], index: 0, kind: input, shape index: {}]
  %s1 = inlined_call_operand.vmem [shape: bf16[256,1024], index: 1, kind: input, shape index: {}]
  %s2 = inlined_call_operand.vmem [shape: f32[16,1], index: 2, kind: input, shape index: {}]
  %s3 = inlined_call_operand.vmem [shape: f32[16,1024], index: 3, kind: output, shape index: {}]
  %s4 = sld [smem:[#allocation0]]
  $region95: #{net_forward.11} parent=0
    _
  %s6 = ssub.s32 1, %s4
  %s7 = scalar_select 0, %s6, %s4
  $region1: #{net_forward.11} parent=0
    #allocation3 [shape = 'u8[524288]{0}', space=vmem, size = 0x80000, scoped, tag = 'input window, operand 1']
    #allocation4 [shape = 'u8[65536]{0}', space=vmem, size = 0x10000, scoped, tag = 'output window, operand 0']
    loop: start=0, step=1, limit=4
    $region2: #{net_forward.11} parent=1 // loop_pre_header
      _
    $region3: #{net_forward.11} parent=1 // loop_header
      %s9 = sphi 0, %s13
      %p10 = scmp.ge.s32.totalorder %s9, 4
      %s16 = sphi 0, %s28
      %s17 = sphi 0, %s24
      %s18 = sphi 0, %s16
      %s19 = sphi 0, %s17
      %s20 = sphi 0, %s18
      %s21 = sphi 0, %s19
      %s31 = sphi 0, %s33
      %s34 = sphi 0, %s31
      %s35 = sphi 0, %s34
      %s51 = sphi 0, %s35
      %s59 = sphi 0, %s61
      %s62 = sphi 0, %s59
      %s63 = sphi 0, %s62
      %s79 = sphi 0, %s63
      %s83 = sphi 0, %s83
      %s85 = sphi 0, %s83
      %s86 = sphi 0, %s85
      %s100 = sphi 0, %s86
      %s106 = sphi 0, %s108
      %s109 = sphi 0, %s106
      %s110 = sphi 0, %s109
      %s126 = sphi 0, %s110
    $region4: #{net_forward.11} parent=1 // loop_header_branch
      %12 = sbr.rel (%p10) target = $region8
    $region5: #{net_forward.11} parent=1 // loop_body
      %s14 = ssub.s32 %s9, 1
      %s15 = ssub.s32 %s9, 2
      %s22 = sadd.s32 1, %s17
      %p23 = scmp.ge.s32.totalorder %s22, 1
      %s24 = scalar_select %p23, 0, %s22
      %s25 = sadd.s32 1, %s16
      %s26 = scalar_select %p23, %s25, %s16
      %p27 = scmp.ge.s32.totalorder %s26, 2
      %s28 = scalar_select %p27, 0, %s26
      %s29 = ssub.s32 %s17, %s24
      %p30 = scmp.eq.s32.totalorder %s29, 0
      %s32 = sadd.s32 %s31, 1
      %s33 = scalar_select %p30, %s31, %s32
      %p36 = pneg %p30
      %p37 = scmp.eq.s32.totalorder %s9, 1
      %p38 = por %p36, %p37
      %p39 = scmp.ne.s32.totalorder %s31, %s34
      %p40 = scmp.eq.s32.totalorder %s9, 0
      %p41 = por %p39, %p40
      %p42 = scmp.ne.s32.totalorder %s31, %s34
      %p43 = scmp.eq.s32.totalorder %s14, 1
      %p44 = por %p42, %p43
      %p45 = scmp.ne.s32.totalorder %s34, %s35
      %p46 = scmp.eq.s32.totalorder %s14, 0
      %p47 = por %p45, %p46
      %p48 = scmp.ne.s32.totalorder %s34, %s35
      %p49 = scmp.eq.s32.totalorder %s15, 1
      %p50 = por %p48, %p49
      %p52 = scmp.ne.s32.totalorder %s35, %s51
      %p53 = scmp.eq.s32.totalorder %s15, 0
      %p54 = por %p52, %p53
      %s55 = ssub.s32 %s17, %s24
      %s56 = ssub.s32 %s16, %s28
      %s57 = sor.u32 %s55, %s56
      %p58 = scmp.eq.s32.totalorder %s57, 0
      %s60 = sadd.s32 %s59, 1
      %s61 = scalar_select %p58, %s59, %s60
      %p64 = pneg %p58
      %p65 = scmp.eq.s32.totalorder %s9, 1
      %p66 = por %p64, %p65
      %p67 = scmp.ne.s32.totalorder %s59, %s62
      %p68 = scmp.eq.s32.totalorder %s9, 0
      %p69 = por %p67, %p68
      %p70 = scmp.ne.s32.totalorder %s59, %s62
      %p71 = scmp.eq.s32.totalorder %s14, 1
      %p72 = por %p70, %p71
      %p73 = scmp.ne.s32.totalorder %s62, %s63
      %p74 = scmp.eq.s32.totalorder %s14, 0
      %p75 = por %p73, %p74
      %p76 = scmp.ne.s32.totalorder %s62, %s63
      %p77 = scmp.eq.s32.totalorder %s15, 1
      %p78 = por %p76, %p77
      %p80 = scmp.ne.s32.totalorder %s63, %s79
      %p81 = scmp.eq.s32.totalorder %s15, 0
      %p82 = por %p80, %p81
      %s84 = sadd.s32 %s83, 1
      %p87 = scmp.eq.s32.totalorder %s9, 1
      %p88 = scmp.ne.s32.totalorder %s83, %s85
      %p89 = scmp.eq.s32.totalorder %s9, 0
      %p90 = por %p88, %p89
      %p91 = scmp.ne.s32.totalorder %s83, %s85
      %p92 = scmp.eq.s32.totalorder %s14, 1
      %p93 = por %p91, %p92
      %p94 = scmp.ne.s32.totalorder %s85, %s86
      %p95 = scmp.eq.s32.totalorder %s14, 0
      %p96 = por %p94, %p95
      %p97 = scmp.ne.s32.totalorder %s85, %s86
      %p98 = scmp.eq.s32.totalorder %s15, 1
      %p99 = por %p97, %p98
      %p101 = scmp.ne.s32.totalorder %s86, %s100
      %p102 = scmp.eq.s32.totalorder %s15, 0
      %p103 = por %p101, %p102
      %s104 = ssub.s32 %s16, %s28
      %p105 = scmp.eq.s32.totalorder %s104, 0
      %s107 = sadd.s32 %s106, 1
      %s108 = scalar_select %p105, %s106, %s107
      %p111 = pneg %p105
      %p112 = scmp.eq.s32.totalorder %s9, 1
      %p113 = por %p111, %p112
      %p114 = scmp.ne.s32.totalorder %s106, %s109
      %p115 = scmp.eq.s32.totalorder %s9, 0
      %p116 = por %p114, %p115
      %p117 = scmp.ne.s32.totalorder %s106, %s109
      %p118 = scmp.eq.s32.totalorder %s14, 1
      %p119 = por %p117, %p118
      %p120 = scmp.ne.s32.totalorder %s109, %s110
      %p121 = scmp.eq.s32.totalorder %s14, 0
      %p122 = por %p120, %p121
      %p123 = scmp.ne.s32.totalorder %s109, %s110
      %p124 = scmp.eq.s32.totalorder %s15, 1
      %p125 = por %p123, %p124
      %p127 = scmp.ne.s32.totalorder %s110, %s126
      %p128 = scmp.eq.s32.totalorder %s15, 0
      %p129 = por %p127, %p128
      %p130 = scmp.le.s32.totalorder 1, %s9
      %p131 = scmp.lt.s32.totalorder %s9, 3
      %p132 = pnand %p130, %p131
      %p133 = pneg %p132
      // Predicated region
      $region9: #{net_forward.11} parent=5 // pred_check
        _
      $region10: #{net_forward.11} parent=5 // pred_check_branch
        %135 = sbr.rel (%p132) target = $region12
      $region11: #{net_forward.11} parent=5 // pred_region
        %s136 = ssub.s32 %s9, 1
        // Predicated region
        $region13: #{net_forward.11} parent=11 // pred_check
          %p137 = pneg %p47
        $region14: #{net_forward.11} parent=11 // pred_check_branch
          %139 = sbr.rel (%p137) target = $region16
        $region15: #{net_forward.11} parent=11 // pred_region
          %s140 = smul.u32 2, %s19
          %p141 = scmp.lt.s32.totalorder %s140, 1
          %s142 = scalar_select %p141, %s140, 1
          %s143 = smul.addr %s142, 4
          %s144 = scalar_lea.vmem %s0, %s143
          %s145 = smul.u32 2, %s19
        $region16: #{net_forward.11} parent=11 // pred_fallthru
          _
        // Predicated region
        $region17: #{net_forward.11} parent=11 // pred_check
          %p146 = pneg %p96
        $region18: #{net_forward.11} parent=11 // pred_check_branch
          %148 = sbr.rel (%p146) target = $region20
        $region19: #{net_forward.11} parent=11 // pred_region
          _
        $region20: #{net_forward.11} parent=11 // pred_fallthru
          _
      $region12: #{net_forward.11} parent=5 // pred_fallthru
        _
      %p149 = scmp.lt.s32.totalorder %s9, 2
      // Predicated region
      $region21: #{net_forward.11} parent=5 // pred_check
        %p150 = pneg %p149
      $region22: #{net_forward.11} parent=5 // pred_check_branch
        %152 = sbr.rel (%p150) target = $region24
      $region23: #{net_forward.11} parent=5 // pred_region
        // Predicated region
        $region25: #{net_forward.11} parent=23 // pred_check
          %p153 = pneg %p69
        $region26: #{net_forward.11} parent=23 // pred_check_branch
          %155 = sbr.rel (%p153) target = $region28
        $region27: #{net_forward.11} parent=23 // pred_region
          %s156 = sand.u32 %s59, 1
          %s157 = sand.u32 %s59, 1
          %s158 = smul.addr %s157, 512
          %s159 = scalar_lea.vmem [#allocation3], %s158
          %s160 = smul.u32 32, %s17
          %s161 = smul.u32 4, %s16
          %s162 = smul.addr %s160, 8
          %s163 = sadd.s32 %s161, %s162
          %s164 = smul.addr %s163, 4
          %s165 = scalar_lea.vmem %s1, %s164
          // Predicated region
          $region29: #{net_forward.11} parent=27 // pred_check
            _
          $region30: #{net_forward.11} parent=27 // pred_check_branch
            %167 = sbr.rel (0) target = $region32
          $region31: #{net_forward.11} parent=27 // pred_region
            // Predicated region
            $region33: #{net_forward.11} parent=31 // pred_check
              _
            $region34: #{net_forward.11} parent=31 // pred_check_branch
              %169 = sbr.rel (0) target = $region36
            $region35: #{net_forward.11} parent=31 // pred_region
              loop: start=0, step=1, limit=1
              $region37: #{net_forward.11} parent=35 // loop_pre_header
                _
              $region38: #{net_forward.11} parent=35 // loop_header
                %s171 = sphi 0, %s175
                %p172 = scmp.ge.s32.totalorder %s171, 1
                %s176 = sphi %s165, %s165
                %s177 = sphi %s159, %s159
              $region39: #{net_forward.11} parent=35 // loop_header_branch
                %174 = sbr.rel (%p172) target = $region43
              $region40: #{net_forward.11} parent=35 // loop_body
                %v178 = vld [vmem:[%s176] sm:$0xff]
                %179 = vst [vmem:[%s177] sm:$0xff] %v178
                %v180 = vld [vmem:[%s176 + $0x8] sm:$0xff]
                %181 = vst [vmem:[%s177 + $0x8] sm:$0xff] %v180
                %v182 = vld [vmem:[%s176 + $0x20] sm:$0xff]
                %183 = vst [vmem:[%s177 + $0x10] sm:$0xff] %v182
                %v184 = vld [vmem:[%s176 + $0x28] sm:$0xff]
                %185 = vst [vmem:[%s177 + $0x18] sm:$0xff] %v184
                %v186 = vld [vmem:[%s176 + $0x40] sm:$0xff]
                %187 = vst [vmem:[%s177 + $0x20] sm:$0xff] %v186
                %v188 = vld [vmem:[%s176 + $0x48] sm:$0xff]
                %189 = vst [vmem:[%s177 + $0x28] sm:$0xff] %v188
                %v190 = vld [vmem:[%s176 + $0x60] sm:$0xff]
                %191 = vst [vmem:[%s177 + $0x30] sm:$0xff] %v190
                %v192 = vld [vmem:[%s176 + $0x68] sm:$0xff]
                %193 = vst [vmem:[%s177 + $0x38] sm:$0xff] %v192
                %v194 = vld [vmem:[%s176 + $0x80] sm:$0xff]
                %195 = vst [vmem:[%s177 + $0x40] sm:$0xff] %v194
                %v196 = vld [vmem:[%s176 + $0x88] sm:$0xff]
                %197 = vst [vmem:[%s177 + $0x48] sm:$0xff] %v196
                %v198 = vld [vmem:[%s176 + $0xa0] sm:$0xff]
                %199 = vst [vmem:[%s177 + $0x50] sm:$0xff] %v198
                %v200 = vld [vmem:[%s176 + $0xa8] sm:$0xff]
                %201 = vst [vmem:[%s177 + $0x58] sm:$0xff] %v200
                %v202 = vld [vmem:[%s176 + $0xc0] sm:$0xff]
                %203 = vst [vmem:[%s177 + $0x60] sm:$0xff] %v202
                %v204 = vld [vmem:[%s176 + $0xc8] sm:$0xff]
                %205 = vst [vmem:[%s177 + $0x68] sm:$0xff] %v204
                %v206 = vld [vmem:[%s176 + $0xe0] sm:$0xff]
                %207 = vst [vmem:[%s177 + $0x70] sm:$0xff] %v206
                %v208 = vld [vmem:[%s176 + $0xe8] sm:$0xff]
                %209 = vst [vmem:[%s177 + $0x78] sm:$0xff] %v208
                %v210 = vld [vmem:[%s176 + $0x100] sm:$0xff]
                %211 = vst [vmem:[%s177 + $0x80] sm:$0xff] %v210
                %v212 = vld [vmem:[%s176 + $0x108] sm:$0xff]
                %213 = vst [vmem:[%s177 + $0x88] sm:$0xff] %v212
                %v214 = vld [vmem:[%s176 + $0x120] sm:$0xff]
                %215 = vst [vmem:[%s177 + $0x90] sm:$0xff] %v214
                %v216 = vld [vmem:[%s176 + $0x128] sm:$0xff]
                %217 = vst [vmem:[%s177 + $0x98] sm:$0xff] %v216
                %v218 = vld [vmem:[%s176 + $0x140] sm:$0xff]
                %219 = vst [vmem:[%s177 + $0xa0] sm:$0xff] %v218
                %v220 = vld [vmem:[%s176 + $0x148] sm:$0xff]
                %221 = vst [vmem:[%s177 + $0xa8] sm:$0xff] %v220
                %v222 = vld [vmem:[%s176 + $0x160] sm:$0xff]
                %223 = vst [vmem:[%s177 + $0xb0] sm:$0xff] %v222
                %v224 = vld [vmem:[%s176 + $0x168] sm:$0xff]
                %225 = vst [vmem:[%s177 + $0xb8] sm:$0xff] %v224
                %v226 = vld [vmem:[%s176 + $0x180] sm:$0xff]
                %227 = vst [vmem:[%s177 + $0xc0] sm:$0xff] %v226
                %v228 = vld [vmem:[%s176 + $0x188] sm:$0xff]
                %229 = vst [vmem:[%s177 + $0xc8] sm:$0xff] %v228
                %v230 = vld [vmem:[%s176 + $0x1a0] sm:$0xff]
                %231 = vst [vmem:[%s177 + $0xd0] sm:$0xff] %v230
                %v232 = vld [vmem:[%s176 + $0x1a8] sm:$0xff]
                %233 = vst [vmem:[%s177 + $0xd8] sm:$0xff] %v232
                %v234 = vld [vmem:[%s176 + $0x1c0] sm:$0xff]
                %235 = vst [vmem:[%s177 + $0xe0] sm:$0xff] %v234
                %v236 = vld [vmem:[%s176 + $0x1c8] sm:$0xff]
                %237 = vst [vmem:[%s177 + $0xe8] sm:$0xff] %v236
                %v238 = vld [vmem:[%s176 + $0x1e0] sm:$0xff]
                %239 = vst [vmem:[%s177 + $0xf0] sm:$0xff] %v238
                %v240 = vld [vmem:[%s176 + $0x1e8] sm:$0xff]
                %241 = vst [vmem:[%s177 + $0xf8] sm:$0xff] %v240
                %v242 = vld [vmem:[%s176 + $0x200] sm:$0xff]
                %243 = vst [vmem:[%s177 + $0x100] sm:$0xff] %v242
                %v244 = vld [vmem:[%s176 + $0x208] sm:$0xff]
                %245 = vst [vmem:[%s177 + $0x108] sm:$0xff] %v244
                %v246 = vld [vmem:[%s176 + $0x220] sm:$0xff]
                %247 = vst [vmem:[%s177 + $0x110] sm:$0xff] %v246
                %v248 = vld [vmem:[%s176 + $0x228] sm:$0xff]
                %249 = vst [vmem:[%s177 + $0x118] sm:$0xff] %v248
                %v250 = vld [vmem:[%s176 + $0x240] sm:$0xff]
                %251 = vst [vmem:[%s177 + $0x120] sm:$0xff] %v250
                %v252 = vld [vmem:[%s176 + $0x248] sm:$0xff]
                %253 = vst [vmem:[%s177 + $0x128] sm:$0xff] %v252
                %v254 = vld [vmem:[%s176 + $0x260] sm:$0xff]
                %255 = vst [vmem:[%s177 + $0x130] sm:$0xff] %v254
                %v256 = vld [vmem:[%s176 + $0x268] sm:$0xff]
                %257 = vst [vmem:[%s177 + $0x138] sm:$0xff] %v256
                %v258 = vld [vmem:[%s176 + $0x280] sm:$0xff]
                %259 = vst [vmem:[%s177 + $0x140] sm:$0xff] %v258
                %v260 = vld [vmem:[%s176 + $0x288] sm:$0xff]
                %261 = vst [vmem:[%s177 + $0x148] sm:$0xff] %v260
                %v262 = vld [vmem:[%s176 + $0x2a0] sm:$0xff]
                %263 = vst [vmem:[%s177 + $0x150] sm:$0xff] %v262
                %v264 = vld [vmem:[%s176 + $0x2a8] sm:$0xff]
                %265 = vst [vmem:[%s177 + $0x158] sm:$0xff] %v264
                %v266 = vld [vmem:[%s176 + $0x2c0] sm:$0xff]
                %267 = vst [vmem:[%s177 + $0x160] sm:$0xff] %v266
                %v268 = vld [vmem:[%s176 + $0x2c8] sm:$0xff]
                %269 = vst [vmem:[%s177 + $0x168] sm:$0xff] %v268
                %v270 = vld [vmem:[%s176 + $0x2e0] sm:$0xff]
                %271 = vst [vmem:[%s177 + $0x170] sm:$0xff] %v270
                %v272 = vld [vmem:[%s176 + $0x2e8] sm:$0xff]
                %273 = vst [vmem:[%s177 + $0x178] sm:$0xff] %v272
                %v274 = vld [vmem:[%s176 + $0x300] sm:$0xff]
                %275 = vst [vmem:[%s177 + $0x180] sm:$0xff] %v274
                %v276 = vld [vmem:[%s176 + $0x308] sm:$0xff]
                %277 = vst [vmem:[%s177 + $0x188] sm:$0xff] %v276
                %v278 = vld [vmem:[%s176 + $0x320] sm:$0xff]
                %279 = vst [vmem:[%s177 + $0x190] sm:$0xff] %v278
                %v280 = vld [vmem:[%s176 + $0x328] sm:$0xff]
                %281 = vst [vmem:[%s177 + $0x198] sm:$0xff] %v280
                %v282 = vld [vmem:[%s176 + $0x340] sm:$0xff]
                %283 = vst [vmem:[%s177 + $0x1a0] sm:$0xff] %v282
                %v284 = vld [vmem:[%s176 + $0x348] sm:$0xff]
                %285 = vst [vmem:[%s177 + $0x1a8] sm:$0xff] %v284
                %v286 = vld [vmem:[%s176 + $0x360] sm:$0xff]
                %287 = vst [vmem:[%s177 + $0x1b0] sm:$0xff] %v286
                %v288 = vld [vmem:[%s176 + $0x368] sm:$0xff]
                %289 = vst [vmem:[%s177 + $0x1b8] sm:$0xff] %v288
                %v290 = vld [vmem:[%s176 + $0x380] sm:$0xff]
                %291 = vst [vmem:[%s177 + $0x1c0] sm:$0xff] %v290
                %v292 = vld [vmem:[%s176 + $0x388] sm:$0xff]
                %293 = vst [vmem:[%s177 + $0x1c8] sm:$0xff] %v292
                %v294 = vld [vmem:[%s176 + $0x3a0] sm:$0xff]
                %295 = vst [vmem:[%s177 + $0x1d0] sm:$0xff] %v294
                %v296 = vld [vmem:[%s176 + $0x3a8] sm:$0xff]
                %297 = vst [vmem:[%s177 + $0x1d8] sm:$0xff] %v296
                %v298 = vld [vmem:[%s176 + $0x3c0] sm:$0xff]
                %299 = vst [vmem:[%s177 + $0x1e0] sm:$0xff] %v298
                %v300 = vld [vmem:[%s176 + $0x3c8] sm:$0xff]
                %301 = vst [vmem:[%s177 + $0x1e8] sm:$0xff] %v300
                %v302 = vld [vmem:[%s176 + $0x3e0] sm:$0xff]
                %303 = vst [vmem:[%s177 + $0x1f0] sm:$0xff] %v302
                %v304 = vld [vmem:[%s176 + $0x3e8] sm:$0xff]
                %305 = vst [vmem:[%s177 + $0x1f8] sm:$0xff] %v304
              $region41: #{net_forward.11} parent=35 // loop_footer
                %s175 = sadd.s32 1, %s171
              $region42: #{net_forward.11} parent=35 // loop_footer_branch
                %170 = sbr.rel target = $region38
              $region43: #{net_forward.11} parent=35 // loop_exit
                _
            $region36: #{net_forward.11} parent=31 // pred_fallthru
              _
            // Predicated region
            $region44: #{net_forward.11} parent=31 // pred_check
              _
            $region45: #{net_forward.11} parent=31 // pred_check_branch
              %307 = sbr.rel target = $region47
            $region46: #{net_forward.11} parent=31 // pred_region
              _
            $region47: #{net_forward.11} parent=31 // pred_fallthru
              _
          $region32: #{net_forward.11} parent=27 // pred_fallthru
            _
          %308 = vnop
        $region28: #{net_forward.11} parent=23 // pred_fallthru
          _
      $region24: #{net_forward.11} parent=5 // pred_fallthru
        _
      %p309 = scmp.le.s32.totalorder 1, %s9
      %p310 = scmp.lt.s32.totalorder %s9, 3
      %p311 = pnand %p309, %p310
      %p312 = pneg %p311
      // Predicated region
      $region48: #{net_forward.11} parent=5 // pred_check
        _
      $region49: #{net_forward.11} parent=5 // pred_check_branch
        %314 = sbr.rel (%p311) target = $region51
      $region50: #{net_forward.11} parent=5 // pred_region
        %s315 = ssub.s32 %s9, 1
        %s316 = sand.u32 %s62, 1
        %s317 = sand.u32 %s62, 1
        %s318 = smul.addr %s317, 512
        %s319 = scalar_lea.vmem [#allocation3], %s318
        // Predicated region
        $region52: #{net_forward.11} parent=50 // pred_check
          %p320 = pneg %p75
        $region53: #{net_forward.11} parent=50 // pred_check_branch
          %322 = sbr.rel (%p320) target = $region55
        $region54: #{net_forward.11} parent=50 // pred_region
          _
        $region55: #{net_forward.11} parent=50 // pred_fallthru
          _
        %s323 = smul.u32 2, %s19
        %p324 = scmp.lt.s32.totalorder %s323, 1
        %s325 = scalar_select %p324, %s323, 1
        %s326 = smul.addr %s325, 4
        %s327 = scalar_lea.vmem %s0, %s326
        %p328 = pneg %p47
        %p329 = pneg %p44
        %s330 = sand.u32 %s62, 1
        %s331 = sand.u32 %s62, 1
        %s332 = smul.addr %s331, 512
        %s333 = scalar_lea.vmem [#allocation3], %s332
        %p334 = pneg %p75
        %p335 = pneg %p72
        %p336 = pneg %p96
        %p337 = pneg %p93
        %p338 = pneg %p122
        %p339 = pneg %p119
        %s340 = sand.u32 %s109, 1
        %s341 = sand.u32 %s109, 1
        %s342 = smul.addr %s341, 64
        %s343 = scalar_lea.vmem [#allocation4], %s342
        %s344 = smul.u32 2, %s19
        %p345 = scmp.lt.s32.totalorder %s344, 1
        %s346 = scalar_select %p345, %s344, 1
        %s347 = smul.addr %s346, 4
        %s348 = scalar_lea.vmem %s0, %s347
        %s349 = smul.u32 2, %s19
        %s350 = smul.u32 32, %s19
        %s351 = smul.u32 4, %s18
        %s352 = smul.u32 4, %s18
        %p353 = scmp.eq.s32.totalorder %s19, 0
        // Predicated region
        $region56: #{net_forward.11} parent=50 // pred_check
          %p354 = pneg %p353
        $region57: #{net_forward.11} parent=50 // pred_check_branch
          %356 = sbr.rel (%p354) target = $region59
        $region58: #{net_forward.11} parent=50 // pred_region
          %357 = vst [vmem:[#allocation2] sm:$0xff] 0.0
          %358 = vst [vmem:[#allocation2 + $0x8] sm:$0xff] 0.0
          %359 = vst [vmem:[#allocation2 + $0x10] sm:$0xff] 0.0
          %360 = vst [vmem:[#allocation2 + $0x18] sm:$0xff] 0.0
          %361 = vst [vmem:[#allocation2 + $0x20] sm:$0xff] 0.0
          %362 = vst [vmem:[#allocation2 + $0x28] sm:$0xff] 0.0
          %363 = vst [vmem:[#allocation2 + $0x30] sm:$0xff] 0.0
          %364 = vst [vmem:[#allocation2 + $0x38] sm:$0xff] 0.0
        $region59: #{net_forward.11} parent=50 // pred_fallthru
          _
        %v365 = vld [vmem:[#allocation2] sm:$0xff]
        %v366 = vld [vmem:[#allocation2 + $0x8] sm:$0xff]
        %v367 = vld [vmem:[#allocation2 + $0x10] sm:$0xff]
        %v368 = vld [vmem:[#allocation2 + $0x18] sm:$0xff]
        %v369 = vld [vmem:[#allocation2 + $0x20] sm:$0xff]
        %v370 = vld [vmem:[#allocation2 + $0x28] sm:$0xff]
        %v371 = vld [vmem:[#allocation2 + $0x30] sm:$0xff]
        %v372 = vld [vmem:[#allocation2 + $0x38] sm:$0xff]
        %v373 = vld [vmem:[%s348] sm:$0xff]
        %v374 = vld [vmem:[%s348 + $0x8] sm:$0xff]
        %v375 = vld [vmem:[%s319] sm:$0xff]
        %v376 = vld [vmem:[%s319 + $0x8] sm:$0xff]
        %v377 = vld [vmem:[%s319 + $0x10] sm:$0xff]
        %v378 = vld [vmem:[%s319 + $0x18] sm:$0xff]
        %v379 = vld [vmem:[%s319 + $0x20] sm:$0xff]
        %v380 = vld [vmem:[%s319 + $0x28] sm:$0xff]
        %v381 = vld [vmem:[%s319 + $0x30] sm:$0xff]
        %v382 = vld [vmem:[%s319 + $0x38] sm:$0xff]
        %v383 = vld [vmem:[%s319 + $0x40] sm:$0xff]
        %v384 = vld [vmem:[%s319 + $0x48] sm:$0xff]
        %v385 = vld [vmem:[%s319 + $0x50] sm:$0xff]
        %v386 = vld [vmem:[%s319 + $0x58] sm:$0xff]
        %v387 = vld [vmem:[%s319 + $0x60] sm:$0xff]
        %v388 = vld [vmem:[%s319 + $0x68] sm:$0xff]
        %v389 = vld [vmem:[%s319 + $0x70] sm:$0xff]
        %v390 = vld [vmem:[%s319 + $0x78] sm:$0xff]
        %v391 = vld [vmem:[%s319 + $0x80] sm:$0xff]
        %v392 = vld [vmem:[%s319 + $0x88] sm:$0xff]
        %v393 = vld [vmem:[%s319 + $0x90] sm:$0xff]
        %v394 = vld [vmem:[%s319 + $0x98] sm:$0xff]
        %v395 = vld [vmem:[%s319 + $0xa0] sm:$0xff]
        %v396 = vld [vmem:[%s319 + $0xa8] sm:$0xff]
        %v397 = vld [vmem:[%s319 + $0xb0] sm:$0xff]
        %v398 = vld [vmem:[%s319 + $0xb8] sm:$0xff]
        %v399 = vld [vmem:[%s319 + $0xc0] sm:$0xff]
        %v400 = vld [vmem:[%s319 + $0xc8] sm:$0xff]
        %v401 = vld [vmem:[%s319 + $0xd0] sm:$0xff]
        %v402 = vld [vmem:[%s319 + $0xd8] sm:$0xff]
        %v403 = vld [vmem:[%s319 + $0xe0] sm:$0xff]
        %v404 = vld [vmem:[%s319 + $0xe8] sm:$0xff]
        %v405 = vld [vmem:[%s319 + $0xf0] sm:$0xff]
        %v406 = vld [vmem:[%s319 + $0xf8] sm:$0xff]
        %v407 = vld [vmem:[%s319 + $0x100] sm:$0xff]
        %v408 = vld [vmem:[%s319 + $0x108] sm:$0xff]
        %v409 = vld [vmem:[%s319 + $0x110] sm:$0xff]
        %v410 = vld [vmem:[%s319 + $0x118] sm:$0xff]
        %v411 = vld [vmem:[%s319 + $0x120] sm:$0xff]
        %v412 = vld [vmem:[%s319 + $0x128] sm:$0xff]
        %v413 = vld [vmem:[%s319 + $0x130] sm:$0xff]
        %v414 = vld [vmem:[%s319 + $0x138] sm:$0xff]
        %v415 = vld [vmem:[%s319 + $0x140] sm:$0xff]
        %v416 = vld [vmem:[%s319 + $0x148] sm:$0xff]
        %v417 = vld [vmem:[%s319 + $0x150] sm:$0xff]
        %v418 = vld [vmem:[%s319 + $0x158] sm:$0xff]
        %v419 = vld [vmem:[%s319 + $0x160] sm:$0xff]
        %v420 = vld [vmem:[%s319 + $0x168] sm:$0xff]
        %v421 = vld [vmem:[%s319 + $0x170] sm:$0xff]
        %v422 = vld [vmem:[%s319 + $0x178] sm:$0xff]
        %v423 = vld [vmem:[%s319 + $0x180] sm:$0xff]
        %v424 = vld [vmem:[%s319 + $0x188] sm:$0xff]
        %v425 = vld [vmem:[%s319 + $0x190] sm:$0xff]
        %v426 = vld [vmem:[%s319 + $0x198] sm:$0xff]
        %v427 = vld [vmem:[%s319 + $0x1a0] sm:$0xff]
        %v428 = vld [vmem:[%s319 + $0x1a8] sm:$0xff]
        %v429 = vld [vmem:[%s319 + $0x1b0] sm:$0xff]
        %v430 = vld [vmem:[%s319 + $0x1b8] sm:$0xff]
        %v431 = vld [vmem:[%s319 + $0x1c0] sm:$0xff]
        %v432 = vld [vmem:[%s319 + $0x1c8] sm:$0xff]
        %v433 = vld [vmem:[%s319 + $0x1d0] sm:$0xff]
        %v434 = vld [vmem:[%s319 + $0x1d8] sm:$0xff]
        %v435 = vld [vmem:[%s319 + $0x1e0] sm:$0xff]
        %v436 = vld [vmem:[%s319 + $0x1e8] sm:$0xff]
        %v437 = vld [vmem:[%s319 + $0x1f0] sm:$0xff]
        %v438 = vld [vmem:[%s319 + $0x1f8] sm:$0xff]
        %v441 = vunpack.c.l.b16 %v373
        %v442 = vunpack.c.h.b16 %v373
        %v443 = vunpack.c.l.b16 %v374
        %v444 = vunpack.c.h.b16 %v374
        %v445 = vpack.c.b16 %v443, %v441
        %v446 = vpack.c.b16 %v444, %v442
        %v513 = vunpack.c.l.b16 %v375
        %v514 = vunpack.c.h.b16 %v375
        %v515 = vunpack.c.l.b16 %v376
        %v516 = vunpack.c.h.b16 %v376
        %v517 = vunpack.c.l.b16 %v377
        %v518 = vunpack.c.h.b16 %v377
        %v519 = vunpack.c.l.b16 %v378
        %v520 = vunpack.c.h.b16 %v378
        %v521 = vunpack.c.l.b16 %v379
        %v522 = vunpack.c.h.b16 %v379
        %v523 = vunpack.c.l.b16 %v380
        %v524 = vunpack.c.h.b16 %v380
        %v525 = vunpack.c.l.b16 %v381
        %v526 = vunpack.c.h.b16 %v381
        %v527 = vunpack.c.l.b16 %v382
        %v528 = vunpack.c.h.b16 %v382
        %v529 = vunpack.c.l.b16 %v383
        %v530 = vunpack.c.h.b16 %v383
        %v531 = vunpack.c.l.b16 %v384
        %v532 = vunpack.c.h.b16 %v384
        %v533 = vunpack.c.l.b16 %v385
        %v534 = vunpack.c.h.b16 %v385
        %v535 = vunpack.c.l.b16 %v386
        %v536 = vunpack.c.h.b16 %v386
        %v537 = vunpack.c.l.b16 %v387
        %v538 = vunpack.c.h.b16 %v387
        %v539 = vunpack.c.l.b16 %v388
        %v540 = vunpack.c.h.b16 %v388
        %v541 = vunpack.c.l.b16 %v389
        %v542 = vunpack.c.h.b16 %v389
        %v543 = vunpack.c.l.b16 %v390
        %v544 = vunpack.c.h.b16 %v390
        %v545 = vunpack.c.l.b16 %v391
        %v546 = vunpack.c.h.b16 %v391
        %v547 = vunpack.c.l.b16 %v392
        %v548 = vunpack.c.h.b16 %v392
        %v549 = vunpack.c.l.b16 %v393
        %v550 = vunpack.c.h.b16 %v393
        %v551 = vunpack.c.l.b16 %v394
        %v552 = vunpack.c.h.b16 %v394
        %v553 = vunpack.c.l.b16 %v395
        %v554 = vunpack.c.h.b16 %v395
        %v555 = vunpack.c.l.b16 %v396
        %v556 = vunpack.c.h.b16 %v396
        %v557 = vunpack.c.l.b16 %v397
        %v558 = vunpack.c.h.b16 %v397
        %v559 = vunpack.c.l.b16 %v398
        %v560 = vunpack.c.h.b16 %v398
        %v561 = vunpack.c.l.b16 %v399
        %v562 = vunpack.c.h.b16 %v399
        %v563 = vunpack.c.l.b16 %v400
        %v564 = vunpack.c.h.b16 %v400
        %v565 = vunpack.c.l.b16 %v401
        %v566 = vunpack.c.h.b16 %v401
        %v567 = vunpack.c.l.b16 %v402
        %v568 = vunpack.c.h.b16 %v402
        %v569 = vunpack.c.l.b16 %v403
        %v570 = vunpack.c.h.b16 %v403
        %v571 = vunpack.c.l.b16 %v404
        %v572 = vunpack.c.h.b16 %v404
        %v573 = vunpack.c.l.b16 %v405
        %v574 = vunpack.c.h.b16 %v405
        %v575 = vunpack.c.l.b16 %v406
        %v576 = vunpack.c.h.b16 %v406
        %v577 = vunpack.c.l.b16 %v407
        %v578 = vunpack.c.h.b16 %v407
        %v579 = vunpack.c.l.b16 %v408
        %v580 = vunpack.c.h.b16 %v408
        %v581 = vunpack.c.l.b16 %v409
        %v582 = vunpack.c.h.b16 %v409
        %v583 = vunpack.c.l.b16 %v410
        %v584 = vunpack.c.h.b16 %v410
        %v585 = vunpack.c.l.b16 %v411
        %v586 = vunpack.c.h.b16 %v411
        %v587 = vunpack.c.l.b16 %v412
        %v588 = vunpack.c.h.b16 %v412
        %v589 = vunpack.c.l.b16 %v413
        %v590 = vunpack.c.h.b16 %v413
        %v591 = vunpack.c.l.b16 %v414
        %v592 = vunpack.c.h.b16 %v414
        %v593 = vunpack.c.l.b16 %v415
        %v594 = vunpack.c.h.b16 %v415
        %v595 = vunpack.c.l.b16 %v416
        %v596 = vunpack.c.h.b16 %v416
        %v597 = vunpack.c.l.b16 %v417
        %v598 = vunpack.c.h.b16 %v417
        %v599 = vunpack.c.l.b16 %v418
        %v600 = vunpack.c.h.b16 %v418
        %v601 = vunpack.c.l.b16 %v419
        %v602 = vunpack.c.h.b16 %v419
        %v603 = vunpack.c.l.b16 %v420
        %v604 = vunpack.c.h.b16 %v420
        %v605 = vunpack.c.l.b16 %v421
        %v606 = vunpack.c.h.b16 %v421
        %v607 = vunpack.c.l.b16 %v422
        %v608 = vunpack.c.h.b16 %v422
        %v609 = vunpack.c.l.b16 %v423
        %v610 = vunpack.c.h.b16 %v423
        %v611 = vunpack.c.l.b16 %v424
        %v612 = vunpack.c.h.b16 %v424
        %v613 = vunpack.c.l.b16 %v425
        %v614 = vunpack.c.h.b16 %v425
        %v615 = vunpack.c.l.b16 %v426
        %v616 = vunpack.c.h.b16 %v426
        %v617 = vunpack.c.l.b16 %v427
        %v618 = vunpack.c.h.b16 %v427
        %v619 = vunpack.c.l.b16 %v428
        %v620 = vunpack.c.h.b16 %v428
        %v621 = vunpack.c.l.b16 %v429
        %v622 = vunpack.c.h.b16 %v429
        %v623 = vunpack.c.l.b16 %v430
        %v624 = vunpack.c.h.b16 %v430
        %v625 = vunpack.c.l.b16 %v431
        %v626 = vunpack.c.h.b16 %v431
        %v627 = vunpack.c.l.b16 %v432
        %v628 = vunpack.c.h.b16 %v432
        %v629 = vunpack.c.l.b16 %v433
        %v630 = vunpack.c.h.b16 %v433
        %v631 = vunpack.c.l.b16 %v434
        %v632 = vunpack.c.h.b16 %v434
        %v633 = vunpack.c.l.b16 %v435
        %v634 = vunpack.c.h.b16 %v435
        %v635 = vunpack.c.l.b16 %v436
        %v636 = vunpack.c.h.b16 %v436
        %v637 = vunpack.c.l.b16 %v437
        %v638 = vunpack.c.h.b16 %v437
        %v639 = vunpack.c.l.b16 %v438
        %v640 = vunpack.c.h.b16 %v438
        %v641 = vpack.c.b16 %v517, %v513
        %v642 = vpack.c.b16 %v518, %v514
        %v643 = vpack.c.b16 %v519, %v515
        %v644 = vpack.c.b16 %v520, %v516
        %v645 = vpack.c.b16 %v525, %v521
        %v646 = vpack.c.b16 %v526, %v522
        %v647 = vpack.c.b16 %v527, %v523
        %v648 = vpack.c.b16 %v528, %v524
        %v649 = vpack.c.b16 %v533, %v529
        %v650 = vpack.c.b16 %v534, %v530
        %v651 = vpack.c.b16 %v535, %v531
        %v652 = vpack.c.b16 %v536, %v532
        %v653 = vpack.c.b16 %v541, %v537
        %v654 = vpack.c.b16 %v542, %v538
        %v655 = vpack.c.b16 %v543, %v539
        %v656 = vpack.c.b16 %v544, %v540
        %v657 = vpack.c.b16 %v549, %v545
        %v658 = vpack.c.b16 %v550, %v546
        %v659 = vpack.c.b16 %v551, %v547
        %v660 = vpack.c.b16 %v552, %v548
        %v661 = vpack.c.b16 %v557, %v553
        %v662 = vpack.c.b16 %v558, %v554
        %v663 = vpack.c.b16 %v559, %v555
        %v664 = vpack.c.b16 %v560, %v556
        %v665 = vpack.c.b16 %v565, %v561
        %v666 = vpack.c.b16 %v566, %v562
        %v667 = vpack.c.b16 %v567, %v563
        %v668 = vpack.c.b16 %v568, %v564
        %v669 = vpack.c.b16 %v573, %v569
        %v670 = vpack.c.b16 %v574, %v570
        %v671 = vpack.c.b16 %v575, %v571
        %v672 = vpack.c.b16 %v576, %v572
        %v673 = vpack.c.b16 %v581, %v577
        %v674 = vpack.c.b16 %v582, %v578
        %v675 = vpack.c.b16 %v583, %v579
        %v676 = vpack.c.b16 %v584, %v580
        %v677 = vpack.c.b16 %v589, %v585
        %v678 = vpack.c.b16 %v590, %v586
        %v679 = vpack.c.b16 %v591, %v587
        %v680 = vpack.c.b16 %v592, %v588
        %v681 = vpack.c.b16 %v597, %v593
        %v682 = vpack.c.b16 %v598, %v594
        %v683 = vpack.c.b16 %v599, %v595
        %v684 = vpack.c.b16 %v600, %v596
        %v685 = vpack.c.b16 %v605, %v601
        %v686 = vpack.c.b16 %v606, %v602
        %v687 = vpack.c.b16 %v607, %v603
        %v688 = vpack.c.b16 %v608, %v604
        %v689 = vpack.c.b16 %v613, %v609
        %v690 = vpack.c.b16 %v614, %v610
        %v691 = vpack.c.b16 %v615, %v611
        %v692 = vpack.c.b16 %v616, %v612
        %v693 = vpack.c.b16 %v621, %v617
        %v694 = vpack.c.b16 %v622, %v618
        %v695 = vpack.c.b16 %v623, %v619
        %v696 = vpack.c.b16 %v624, %v620
        %v697 = vpack.c.b16 %v629, %v625
        %v698 = vpack.c.b16 %v630, %v626
        %v699 = vpack.c.b16 %v631, %v627
        %v700 = vpack.c.b16 %v632, %v628
        %v701 = vpack.c.b16 %v637, %v633
        %v702 = vpack.c.b16 %v638, %v634
        %v703 = vpack.c.b16 %v639, %v635
        %v704 = vpack.c.b16 %v640, %v636
        %769 = vmatprep.subr.bf16.mxu0 %v670
        %770 = vmatpush1.bf16.msra.mxu0 %v669
        %771 = vmatprep.subr.bf16.mxu0 %v666
        %772 = vmatpush1.bf16.msra.mxu0 %v665
        %773 = vmatprep.subr.bf16.mxu0 %v662
        %774 = vmatpush1.bf16.msra.mxu0 %v661
        %775 = vmatprep.subr.bf16.mxu0 %v658
        %776 = vmatpush1.bf16.msra.mxu0 %v657
        %777 = vmatprep.subr.bf16.mxu0 %v654
        %778 = vmatpush1.bf16.msra.mxu0 %v653
        %779 = vmatprep.subr.bf16.mxu0 %v650
        %780 = vmatpush1.bf16.msra.mxu0 %v649
        %781 = vmatprep.subr.bf16.mxu0 %v646
        %782 = vmatpush1.bf16.msra.mxu0 %v645
        %783 = vmatprep.subr.bf16.mxu0 %v642
        %784 = vmatpush1.bf16.msra.mxu0 %v641
        %785 = vmatprep.subr.bf16.mxu0 %v702
        %786 = vmatpush2.bf16.msra.mxu0 %v701
        %787 = vmatprep.subr.bf16.mxu0 %v698
        %788 = vmatpush2.bf16.msra.mxu0 %v697
        %789 = vmatprep.subr.bf16.mxu0 %v694
        %790 = vmatpush2.bf16.msra.mxu0 %v693
        %791 = vmatprep.subr.bf16.mxu0 %v690
        %792 = vmatpush2.bf16.msra.mxu0 %v689
        %793 = vmatprep.subr.bf16.mxu0 %v686
        %794 = vmatpush2.bf16.msra.mxu0 %v685
        %795 = vmatprep.subr.bf16.mxu0 %v682
        %796 = vmatpush2.bf16.msra.mxu0 %v681
        %797 = vmatprep.subr.bf16.mxu0 %v678
        %798 = vmatpush2.bf16.msra.mxu0 %v677
        %799 = vmatprep.subr.bf16.mxu0 %v674
        %800 = vmatpush2.bf16.msra.mxu0 %v673
        %801 = vmatprep.mubr.bf16.mxu0 %v446
        %802 = vmatmul.mubr.bf16.gmra.mxu0 %v445
        %v803 = vpop.f32.mrf.mxu0
        %v804 = vadd.f32 0.0, %v803
        %v805 = vpop.f32.mrf.mxu0
        %v806 = vadd.f32 0.0, %v805
        %v807 = vpop.f32.mrf.mxu0
        %v808 = vadd.f32 0.0, %v807
        %v809 = vpop.f32.mrf.mxu0
        %v810 = vadd.f32 0.0, %v809
        %811 = vdwg.mxu0
        %812 = vmatprep.subr.bf16.mxu0 %v672
        %813 = vmatpush1.bf16.msra.mxu0 %v671
        %814 = vmatprep.subr.bf16.mxu0 %v668
        %815 = vmatpush1.bf16.msra.mxu0 %v667
        %816 = vmatprep.subr.bf16.mxu0 %v664
        %817 = vmatpush1.bf16.msra.mxu0 %v663
        %818 = vmatprep.subr.bf16.mxu0 %v660
        %819 = vmatpush1.bf16.msra.mxu0 %v659
        %820 = vmatprep.subr.bf16.mxu0 %v656
        %821 = vmatpush1.bf16.msra.mxu0 %v655
        %822 = vmatprep.subr.bf16.mxu0 %v652
        %823 = vmatpush1.bf16.msra.mxu0 %v651
        %824 = vmatprep.subr.bf16.mxu0 %v648
        %825 = vmatpush1.bf16.msra.mxu0 %v647
        %826 = vmatprep.subr.bf16.mxu0 %v644
        %827 = vmatpush1.bf16.msra.mxu0 %v643
        %828 = vmatprep.subr.bf16.mxu0 %v704
        %829 = vmatpush2.bf16.msra.mxu0 %v703
        %830 = vmatprep.subr.bf16.mxu0 %v700
        %831 = vmatpush2.bf16.msra.mxu0 %v699
        %832 = vmatprep.subr.bf16.mxu0 %v696
        %833 = vmatpush2.bf16.msra.mxu0 %v695
        %834 = vmatprep.subr.bf16.mxu0 %v692
        %835 = vmatpush2.bf16.msra.mxu0 %v691
        %836 = vmatprep.subr.bf16.mxu0 %v688
        %837 = vmatpush2.bf16.msra.mxu0 %v687
        %838 = vmatprep.subr.bf16.mxu0 %v684
        %839 = vmatpush2.bf16.msra.mxu0 %v683
        %840 = vmatprep.subr.bf16.mxu0 %v680
        %841 = vmatpush2.bf16.msra.mxu0 %v679
        %842 = vmatprep.subr.bf16.mxu0 %v676
        %843 = vmatpush2.bf16.msra.mxu0 %v675
        %844 = vmatprep.mubr.bf16.mxu0 %v446
        %845 = vmatmul.mubr.bf16.gmra.mxu0 %v445
        %v846 = vpop.f32.mrf.mxu0
        %v847 = vadd.f32 0.0, %v846
        %v848 = vpop.f32.mrf.mxu0
        %v849 = vadd.f32 0.0, %v848
        %v850 = vpop.f32.mrf.mxu0
        %v851 = vadd.f32 0.0, %v850
        %v852 = vpop.f32.mrf.mxu0
        %v853 = vadd.f32 0.0, %v852
        %854 = vdwg.mxu0
        %v855 = vadd.f32 %v365, %v804
        %v856 = vadd.f32 %v366, %v806
        %v857 = vadd.f32 %v367, %v847
        %v858 = vadd.f32 %v368, %v849
        %v859 = vadd.f32 %v369, %v808
        %v860 = vadd.f32 %v370, %v810
        %v861 = vadd.f32 %v371, %v851
        %v862 = vadd.f32 %v372, %v853
        %863 = vst [vmem:[#allocation2] sm:$0xff] %v855
        %864 = vst [vmem:[#allocation2 + $0x8] sm:$0xff] %v856
        %865 = vst [vmem:[#allocation2 + $0x10] sm:$0xff] %v857
        %866 = vst [vmem:[#allocation2 + $0x18] sm:$0xff] %v858
        %867 = vst [vmem:[#allocation2 + $0x20] sm:$0xff] %v859
        %868 = vst [vmem:[#allocation2 + $0x28] sm:$0xff] %v860
        %869 = vst [vmem:[#allocation2 + $0x30] sm:$0xff] %v861
        %870 = vst [vmem:[#allocation2 + $0x38] sm:$0xff] %v862
        // Predicated region
        $region60: #{net_forward.11} parent=50 // pred_check
          %p871 = pneg %p353
        $region61: #{net_forward.11} parent=50 // pred_check_branch
          %873 = sbr.rel (%p871) target = $region63
        $region62: #{net_forward.11} parent=50 // pred_region
          %v874 = vld [vmem:[#allocation2] sm:$0xff]
          %v875 = vld [vmem:[#allocation2 + $0x8] sm:$0xff]
          %v876 = vld [vmem:[#allocation2 + $0x10] sm:$0xff]
          %v877 = vld [vmem:[#allocation2 + $0x18] sm:$0xff]
          %v878 = vld [vmem:[#allocation2 + $0x20] sm:$0xff]
          %v879 = vld [vmem:[#allocation2 + $0x28] sm:$0xff]
          %v880 = vld [vmem:[#allocation2 + $0x30] sm:$0xff]
          %v881 = vld [vmem:[#allocation2 + $0x38] sm:$0xff]
          %v882 = vld [vmem:[%s2] sm:$0xff]
          %v883 = vld [vmem:[%s2 + $0x8] sm:$0xff]
          %885 = vset.pattern.permute.xlu0 0
          %886 = vperm.xlu0 %885, %v882
          %v887 = vpop.permute.xlu0 %886
          %890 = vset.pattern.permute.xlu0 0
          %891 = vperm.xlu0 %890, %v883
          %v892 = vpop.permute.xlu0 %891
          %v894 = vadd.f32 %v874, %v887
          %v895 = vadd.f32 %v875, %v887
          %v896 = vadd.f32 %v876, %v887
          %v897 = vadd.f32 %v877, %v887
          %v898 = vadd.f32 %v878, %v892
          %v899 = vadd.f32 %v879, %v892
          %v900 = vadd.f32 %v880, %v892
          %v901 = vadd.f32 %v881, %v892
          %v902 = vxor.u32 %v894, 2147483648
          %v903 = vxor.u32 %v895, 2147483648
          %v904 = vxor.u32 %v896, 2147483648
          %v905 = vxor.u32 %v897, 2147483648
          %v906 = vxor.u32 %v898, 2147483648
          %v907 = vxor.u32 %v899, 2147483648
          %v908 = vxor.u32 %v900, 2147483648
          %v909 = vxor.u32 %v901, 2147483648
          %v910 = vmul.f32 %v902, 1.442695
          %v911 = vpow.pop %v910
          %v912 = vmul.f32 %v903, 1.442695
          %v913 = vpow.pop %v912
          %v914 = vmul.f32 %v904, 1.442695
          %v915 = vpow.pop %v914
          %v916 = vmul.f32 %v905, 1.442695
          %v917 = vpow.pop %v916
          %v918 = vmul.f32 %v906, 1.442695
          %v919 = vpow.pop %v918
          %v920 = vmul.f32 %v907, 1.442695
          %v921 = vpow.pop %v920
          %v922 = vmul.f32 %v908, 1.442695
          %v923 = vpow.pop %v922
          %v924 = vmul.f32 %v909, 1.442695
          %v925 = vpow.pop %v924
          %v926 = vadd.f32 %v911, 1.0
          %v927 = vadd.f32 %v913, 1.0
          %v928 = vadd.f32 %v915, 1.0
          %v929 = vadd.f32 %v917, 1.0
          %v930 = vadd.f32 %v919, 1.0
          %v931 = vadd.f32 %v921, 1.0
          %v932 = vadd.f32 %v923, 1.0
          %v933 = vadd.f32 %v925, 1.0
          %v934 = vrcp.pop %v926
          %v935 = vmul.f32 1.0, %v934
          %v936 = vrcp.pop %v927
          %v937 = vmul.f32 1.0, %v936
          %v938 = vrcp.pop %v928
          %v939 = vmul.f32 1.0, %v938
          %v940 = vrcp.pop %v929
          %v941 = vmul.f32 1.0, %v940
          %v942 = vrcp.pop %v930
          %v943 = vmul.f32 1.0, %v942
          %v944 = vrcp.pop %v931
          %v945 = vmul.f32 1.0, %v944
          %v946 = vrcp.pop %v932
          %v947 = vmul.f32 1.0, %v946
          %v948 = vrcp.pop %v933
          %v949 = vmul.f32 1.0, %v948
          %950 = vst [vmem:[%s343] sm:$0xff] %v935
          %951 = vst [vmem:[%s343 + $0x8] sm:$0xff] %v937
          %952 = vst [vmem:[%s343 + $0x10] sm:$0xff] %v939
          %953 = vst [vmem:[%s343 + $0x18] sm:$0xff] %v941
          %954 = vst [vmem:[%s343 + $0x20] sm:$0xff] %v943
          %955 = vst [vmem:[%s343 + $0x28] sm:$0xff] %v945
          %956 = vst [vmem:[%s343 + $0x30] sm:$0xff] %v947
          %957 = vst [vmem:[%s343 + $0x38] sm:$0xff] %v949
        $region63: #{net_forward.11} parent=50 // pred_fallthru
          _
        %s958 = sand.u32 %s109, 1
        %s959 = sand.u32 %s109, 1
        %s960 = smul.addr %s959, 64
        %s961 = scalar_lea.vmem [#allocation4], %s960
        // Predicated region
        $region64: #{net_forward.11} parent=50 // pred_check
          %p962 = pneg %p119
        $region65: #{net_forward.11} parent=50 // pred_check_branch
          %964 = sbr.rel (%p962) target = $region67
        $region66: #{net_forward.11} parent=50 // pred_region
          %s965 = smul.u32 4, %s18
          %s966 = smul.addr %s965, 8
          %s967 = scalar_lea.vmem %s3, %s966
          // Predicated region
          $region68: #{net_forward.11} parent=66 // pred_check
            _
          $region69: #{net_forward.11} parent=66 // pred_check_branch
            %969 = sbr.rel (0) target = $region71
          $region70: #{net_forward.11} parent=66 // pred_region
            // Predicated region
            $region72: #{net_forward.11} parent=70 // pred_check
              _
            $region73: #{net_forward.11} parent=70 // pred_check_branch
              %971 = sbr.rel (0) target = $region75
            $region74: #{net_forward.11} parent=70 // pred_region
              loop: start=0, step=1, limit=1
              $region76: #{net_forward.11} parent=74 // loop_pre_header
                _
              $region77: #{net_forward.11} parent=74 // loop_header
                %s973 = sphi 0, %s977
                %p974 = scmp.ge.s32.totalorder %s973, 1
                %s978 = sphi %s961, %s961
                %s979 = sphi %s967, %s967
              $region78: #{net_forward.11} parent=74 // loop_header_branch
                %976 = sbr.rel (%p974) target = $region82
              $region79: #{net_forward.11} parent=74 // loop_body
                %v980 = vld [vmem:[%s978] sm:$0xff]
                %981 = vst [vmem:[%s979] sm:$0xff] %v980
                %v982 = vld [vmem:[%s978 + $0x8] sm:$0xff]
                %983 = vst [vmem:[%s979 + $0x8] sm:$0xff] %v982
                %v984 = vld [vmem:[%s978 + $0x10] sm:$0xff]
                %985 = vst [vmem:[%s979 + $0x10] sm:$0xff] %v984
                %v986 = vld [vmem:[%s978 + $0x18] sm:$0xff]
                %987 = vst [vmem:[%s979 + $0x18] sm:$0xff] %v986
                %v988 = vld [vmem:[%s978 + $0x20] sm:$0xff]
                %989 = vst [vmem:[%s979 + $0x40] sm:$0xff] %v988
                %v990 = vld [vmem:[%s978 + $0x28] sm:$0xff]
                %991 = vst [vmem:[%s979 + $0x48] sm:$0xff] %v990
                %v992 = vld [vmem:[%s978 + $0x30] sm:$0xff]
                %993 = vst [vmem:[%s979 + $0x50] sm:$0xff] %v992
                %v994 = vld [vmem:[%s978 + $0x38] sm:$0xff]
                %995 = vst [vmem:[%s979 + $0x58] sm:$0xff] %v994
              $region80: #{net_forward.11} parent=74 // loop_footer
                %s977 = sadd.s32 1, %s973
              $region81: #{net_forward.11} parent=74 // loop_footer_branch
                %972 = sbr.rel target = $region77
              $region82: #{net_forward.11} parent=74 // loop_exit
                _
            $region75: #{net_forward.11} parent=70 // pred_fallthru
              _
            // Predicated region
            $region83: #{net_forward.11} parent=70 // pred_check
              _
            $region84: #{net_forward.11} parent=70 // pred_check_branch
              %997 = sbr.rel target = $region86
            $region85: #{net_forward.11} parent=70 // pred_region
              _
            $region86: #{net_forward.11} parent=70 // pred_fallthru
              _
          $region71: #{net_forward.11} parent=66 // pred_fallthru
            _
          %998 = vnop
        $region67: #{net_forward.11} parent=50 // pred_fallthru
          _
      $region51: #{net_forward.11} parent=5 // pred_fallthru
        _
      %p999 = scmp.le.s32.totalorder 2, %s9
      // Predicated region
      $region87: #{net_forward.11} parent=5 // pred_check
        %p1000 = pneg %p999
      $region88: #{net_forward.11} parent=5 // pred_check_branch
        %1002 = sbr.rel (%p1000) target = $region90
      $region89: #{net_forward.11} parent=5 // pred_region
        %s1003 = ssub.s32 %s9, 2
        // Predicated region
        $region91: #{net_forward.11} parent=89 // pred_check
          %p1004 = pneg %p125
        $region92: #{net_forward.11} parent=89 // pred_check_branch
          %1006 = sbr.rel (%p1004) target = $region94
        $region93: #{net_forward.11} parent=89 // pred_region
          %s1007 = sand.u32 %s110, 1
          %s1008 = sand.u32 %s110, 1
          %s1009 = smul.addr %s1008, 64
          %s1010 = scalar_lea.vmem [#allocation4], %s1009
        $region94: #{net_forward.11} parent=89 // pred_fallthru
          _
      $region90: #{net_forward.11} parent=5 // pred_fallthru
        _
    $region6: #{net_forward.11} parent=1 // loop_footer
      %s13 = sadd.s32 1, %s9
    $region7: #{net_forward.11} parent=1 // loop_footer_branch
      %8 = sbr.rel target = $region3
    $region8: #{net_forward.11} parent=1 // loop_exit
      _

</llo_original>
